<compile_context>
chip_gen: v5e
topology: v5e:2x2
jax: 0.10.0
libtpu: 0.0.40
codegen_flags: <defaults>
</compile_context>

<pallas_src>
import jax
import jax.numpy as jnp
from jax.experimental import pallas as pl
from jax.experimental.pallas import tpu as pltpu

NEG_SLOPE = 0.01   # nn.LeakyReLU() default negative_slope
BN_EPS = 1e-5      # nn.BatchNorm2d default eps
LANE = 128


def _round_up(x, m):
    return ((x + m - 1) // m) * m


def _vmem_limit_bytes():
    # ~3/4 of physical VMEM (v5e/v6e: 128 MiB -> 96 MiB, v7x: 64 MiB -> 48 MiB).
    try:
        cap = int(pltpu.get_tpu_info().vmem_capacity_bytes)
    except Exception:
        cap = 128 * 1024 * 1024
    return int(min(cap * 3 // 4, 100 * 1024 * 1024))


def _pick_h_tile(h, w, cout_p, row_cap=512, acc_cap=2 * 1024 * 1024):
    """Largest divisor of H such that th*W <= ~512 rows and the f32 accumulator
    stays modest (feeds the 256-wide MXU, amortizes per-grid-step overhead)."""
    best = 1
    for t in range(1, h + 1):
        if h % t == 0 and t * w <= row_cap and t * w * cout_p * 4 <= acc_cap:
            best = t
    return best


def _pick_m_tile(m, cap=4096):
    t = min(m, cap)
    while t > 1:
        if m % t == 0 and (t % 8 == 0 or t == m):
            return t
        t -= 1
    return m


def _pad_vec(v, cp):
    v = v.astype(jnp.float32)
    return jnp.pad(v, (0, cp - v.shape[0]))


def _pad_channels(x, cp):
    c = x.shape[-1]
    if cp == c:
        return x
    return jnp.pad(x, ((0, 0), (0, 0), (0, 0), (0, cp - c)))


def _prep_weight_taps(wt, cin_p, cout_p):
    # torch (Cout, Cin, 3, 3) -> (9, Cin_p, Cout_p) bf16, k = ky*3 + kx.
    cout, cin, _, _ = wt.shape
    w = jnp.transpose(wt, (2, 3, 1, 0))
    w = jnp.pad(w, ((0, 0), (0, 0), (0, cin_p - cin), (0, cout_p - cout)))
    return w.reshape(9, cin_p, cout_p).astype(jnp.bfloat16)


def _prep_weight_packed(wt, kp, cout_p):
    # torch (Cout, Cin, 3, 3) -> (Kp, Cout_p) bf16 with K index (ky*3+kx)*Cin+c.
    cout, cin, _, _ = wt.shape
    w = jnp.transpose(wt, (2, 3, 1, 0)).reshape(9 * cin, cout)
    w = jnp.pad(w, ((0, kp - 9 * cin), (0, cout_p - cout)))
    return w.astype(jnp.bfloat16)


def _conv_packed_stage(xcol, wk, bias, n, h, w, kp, cout_p):
    """Stage-1 path for narrow Cin: the 3x3 taps live in the contraction dim,
    so the whole conv+bias+LeakyReLU is one MXU matmul per tile, plus per-tile
    partial BatchNorm stats."""
    th = _pick_h_tile(h, w, cout_p)
    ht = h // th
    m = th * w

    def kernel(x_ref, w_ref, b_ref, y_ref, st_ref):
        xb = x_ref[...].reshape(m, kp)                         # (M, Kp) bf16
        acc = jnp.dot(xb, w_ref[...], preferred_element_type=jnp.float32)
        y = acc + b_ref[...]
        y = jnp.where(y > 0, y, NEG_SLOPE * y)                 # LeakyReLU (f32)
        s = jnp.sum(y, axis=0, keepdims=True)                  # (1, Cout_p)
        sq = jnp.sum(y * y, axis=0, keepdims=True)             # (1, Cout_p)
        st_ref[...] = jnp.concatenate([s, sq], axis=0)[None, None]
        y_ref[...] = y.reshape(1, th, w, cout_p).astype(y_ref.dtype)

    return pl.pallas_call(
        kernel,
        out_shape=(
            jax.ShapeDtypeStruct((n, h, w, cout_p), jnp.bfloat16),
            jax.ShapeDtypeStruct((n, ht, 2, cout_p), jnp.float32),
        ),
        grid=(n, ht),
        in_specs=[
            pl.BlockSpec((1, th, w, kp), lambda i, j: (i, j, 0, 0)),
            pl.BlockSpec((kp, cout_p), lambda i, j: (0, 0)),
            pl.BlockSpec((1, cout_p), lambda i, j: (0, 0)),
        ],
        out_specs=(
            pl.BlockSpec((1, th, w, cout_p), lambda i, j: (i, j, 0, 0)),
            pl.BlockSpec((1, 1, 2, cout_p), lambda i, j: (i, j, 0, 0)),
        ),
        compiler_params=pltpu.CompilerParams(
            dimension_semantics=("parallel", "parallel"),
            vmem_limit_bytes=_vmem_limit_bytes(),
        ),
    )(xcol, wk, bias)


def _conv_general_stage(x, wk, bias, in_scale, in_shift, n, h, w, cin_p, cout_p):
    """Fused (prev-BN affine) -> in-kernel reflect pad -> 3x3 conv (9 shifted
    MXU matmuls over 3 hoisted kx slabs) -> bias -> LeakyReLU, plus per-tile
    partial BatchNorm statistics."""
    th = _pick_h_tile(h, w, cout_p)
    ht = h // th
    m = th * w

    def kernel(x_ref, w_ref, b_ref, sc_ref, sh_ref, y_ref, st_ref):
        row0 = pl.program_id(1) * th
        if th % 8 == 0:
            row0 = pl.multiple_of(row0, 8)

        # Row halo with reflect boundaries (pad=1 reflect: row -1 -> 1, row H -> H-2).
        top = jnp.where(row0 == 0, 1, row0 - 1)
        bot = jnp.where(row0 + th >= h, h - 2, row0 + th)
        xt = jnp.concatenate(
            [x_ref[0, pl.ds(top, 1), :, :],
             x_ref[0, pl.ds(row0, th), :, :],
             x_ref[0, pl.ds(bot, 1), :, :]], axis=0)           # (th+2, W, Cin_p) bf16

        # Previous stage's BatchNorm as a per-channel affine, applied in bf16
        # (identity for a first stage); reflect padding commutes with it.
        sc = sc_ref[...].astype(jnp.bfloat16)
        sh = sh_ref[...].astype(jnp.bfloat16)
        xb = xt * sc + sh                                      # bf16

        # Column halo (reflect) + hoisted kx shifts: 3 lane-dense slabs, so the
        # 9-tap loop only does aligned, contiguous row slices (no per-tap relayout).
        x0 = jnp.concatenate([xb[:, 1:2, :], xb[:, :w - 1, :]], axis=1)   # cols -1..W-2
        x2 = jnp.concatenate([xb[:, 1:, :], xb[:, w - 2:w - 1, :]], axis=1)  # cols 1..W
        xk = [a.reshape((th + 2) * w, cin_p) for a in (x0, xb, x2)]

        # 3x3 conv as 9 accumulated MXU matmuls (f32 accumulation).
        acc = jnp.zeros((m, cout_p), jnp.float32)
        for k in range(9):
            ky, kx = divmod(k, 3)
            patch = xk[kx][ky * w:ky * w + m, :]               # static aligned slice
            acc = acc + jnp.dot(patch, w_ref[k],
                                preferred_element_type=jnp.float32)

        y = acc + b_ref[...]
        y = jnp.where(y > 0, y, NEG_SLOPE * y)                 # LeakyReLU (f32)

        s = jnp.sum(y, axis=0, keepdims=True)                  # (1, Cout_p)
        sq = jnp.sum(y * y, axis=0, keepdims=True)             # (1, Cout_p)
        st_ref[...] = jnp.concatenate([s, sq], axis=0)[None, None]
        y_ref[...] = y.reshape(1, th, w, cout_p).astype(y_ref.dtype)

    return pl.pallas_call(
        kernel,
        out_shape=(
            jax.ShapeDtypeStruct((n, h, w, cout_p), jnp.bfloat16),
            jax.ShapeDtypeStruct((n, ht, 2, cout_p), jnp.float32),
        ),
        grid=(n, ht),
        in_specs=[
            # Full (unpadded) image per batch element, resident across row tiles.
            # TODO(synk): for very large H*W*C, switch to halo'd row-tile fetches
            # (pl.ANY + make_async_copy double-buffering) and tile Cout_p as a
            # third "parallel" grid axis when Cout >= 256.
            pl.BlockSpec((1, h, w, cin_p), lambda i, j: (i, 0, 0, 0)),
            pl.BlockSpec((9, cin_p, cout_p), lambda i, j: (0, 0, 0)),
            pl.BlockSpec((1, cout_p), lambda i, j: (0, 0)),
            pl.BlockSpec((1, cin_p), lambda i, j: (0, 0)),
            pl.BlockSpec((1, cin_p), lambda i, j: (0, 0)),
        ],
        out_specs=(
            pl.BlockSpec((1, th, w, cout_p), lambda i, j: (i, j, 0, 0)),
            pl.BlockSpec((1, 1, 2, cout_p), lambda i, j: (i, j, 0, 0)),
        ),
        compiler_params=pltpu.CompilerParams(
            dimension_semantics=("parallel", "parallel"),
            vmem_limit_bytes=_vmem_limit_bytes(),
        ),
    )(x, wk, bias, in_scale, in_shift)


def _bn_stage(y2d, scale, shift, cout):
    """Final BatchNorm normalize+affine sweep; the channel un-padding is fused
    into the out_spec so only (M, Cout) f32 is written to HBM."""
    m, cp = y2d.shape
    tm = _pick_m_tile(m)

    def kernel(y_ref, sc_ref, sh_ref, o_ref):
        y = y_ref[...].astype(jnp.float32) * sc_ref[...] + sh_ref[...]
        o_ref[...] = y[:, :cout]

    return pl.pallas_call(
        kernel,
        out_shape=jax.ShapeDtypeStruct((m, cout), jnp.float32),
        grid=(m // tm,),
        in_specs=[
            pl.BlockSpec((tm, cp), lambda i: (i, 0)),
            pl.BlockSpec((1, cp), lambda i: (0, 0)),
            pl.BlockSpec((1, cp), lambda i: (0, 0)),
        ],
        out_specs=pl.BlockSpec((tm, cout), lambda i: (i, 0)),
        compiler_params=pltpu.CompilerParams(
            dimension_semantics=("parallel",),
            vmem_limit_bytes=_vmem_limit_bytes(),
        ),
    )(y2d, scale, shift)


def block_forward(x_nchw, params):
    n, cin, h, w = x_nchw.shape
    x_nhwc = jnp.transpose(x_nchw, (0, 2, 3, 1)).astype(jnp.float32)   # NCHW -> NHWC

    in_scale = None      # previous-stage BN affine (fused into the next conv)
    in_shift = None
    x_cur = None         # bf16 NHWC channel-padded activation for the general path
    cp = None
    cout = cin

    for idx, (wt, b, gamma, beta) in enumerate(params):
        cout = wt.shape[0]
        cout_p = _round_up(cout, LANE)
        b_p = _pad_vec(b, cout_p).reshape(1, cout_p)

        if idx == 0 and 9 * cin <= LANE:
            # Tap-packed stage 1: fold the 3x3 taps into the contraction dim.
            # The im2col'd bf16 input is the same HBM bytes as a 128-channel-
            # padded input, but the kernel does 1 matmul per tile instead of 9.
            kp = _round_up(9 * cin, LANE)
            xr = jnp.pad(x_nhwc, ((0, 0), (1, 1), (1, 1), (0, 0)), mode="reflect")
            xcol = jnp.concatenate(
                [xr[:, ky:ky + h, kx:kx + w, :]
                 for ky in range(3) for kx in range(3)], axis=-1)      # (N,H,W,9*Cin)
            xcol = jnp.pad(
                xcol, ((0, 0), (0, 0), (0, 0), (0, kp - 9 * cin))).astype(jnp.bfloat16)
            wk = _prep_weight_packed(wt, kp, cout_p)
            y_raw, pstats = _conv_packed_stage(xcol, wk, b_p, n, h, w, kp, cout_p)
        else:
            if x_cur is None:                                   # wide-Cin first stage
                cp = _round_up(cin, LANE)
                x_cur = _pad_channels(x_nhwc, cp).astype(jnp.bfloat16)
            if in_scale is None:                                # identity prev-BN
                in_scale = jnp.ones((1, cp), jnp.float32)
                in_shift = jnp.zeros((1, cp), jnp.float32)
            wk = _prep_weight_taps(wt, cp, cout_p)
            y_raw, pstats = _conv_general_stage(
                x_cur, wk, b_p, in_scale, in_shift, n, h, w, cp, cout_p)

        # Combine per-tile partial stats (O(C) work in plain JAX) into BN
        # scale/shift, fused into the next conv or the final normalize pass.
        count = float(n * h * w)
        s = jnp.sum(pstats[:, :, 0, :], axis=(0, 1))
        sq = jnp.sum(pstats[:, :, 1, :], axis=(0, 1))
        mean = s / count
        var = jnp.maximum(sq / count - mean * mean, 0.0)        # biased, f32
        inv = jax.lax.rsqrt(var + BN_EPS)
        g = _pad_vec(gamma, cout_p)
        be = _pad_vec(beta, cout_p)
        in_scale = (g * inv).reshape(1, cout_p)
        in_shift = (be - mean * g * inv).reshape(1, cout_p)

        x_cur = y_raw                                           # raw (pre-BN) bf16
        cp = cout_p
        cin = cout

    out2d = _bn_stage(x_cur.reshape(n * h * w, cp), in_scale, in_shift, cout)
    out = out2d.reshape(n, h, w, cout)
    return jnp.transpose(out, (0, 3, 1, 2))                     # NHWC -> NCHW


def init_block_params(key, in_channel, out_channel):
    def xavier_uniform(k, cout, cin):
        fan_in, fan_out = cin * 9, cout * 9
        limit = (6.0 / (fan_in + fan_out)) ** 0.5
        return jax.random.uniform(k, (cout, cin, 3, 3), jnp.float32, -limit, limit)

    def bias_init(k, cout, cin):
        bound = 1.0 / (cin * 9) ** 0.5
        return jax.random.uniform(k, (cout,), jnp.float32, -bound, bound)

    k1, k2, k3, k4 = jax.random.split(key, 4)
    w1 = xavier_uniform(k1, out_channel, in_channel)
    b1 = bias_init(k2, out_channel, in_channel)
    w2 = xavier_uniform(k3, out_channel, out_channel)
    b2 = bias_init(k4, out_channel, out_channel)
    ones = jnp.ones((out_channel,), jnp.float32)
    zeros = jnp.zeros((out_channel,), jnp.float32)
    # TODO(synk): BatchNorm running-mean/var buffer updates are stateful side
    # effects that do not affect the training-mode forward output; omitted.
    return [(w1, b1, ones, zeros), (w2, b2, ones, zeros)]


if __name__ == "__main__":
    key = jax.random.PRNGKey(0)
    k_x, k_p = jax.random.split(key)
    N, CIN, COUT, H, W = 2, 4, 8, 16, 16
    x = jax.random.normal(k_x, (N, CIN, H, W), dtype=jnp.float32)
    params = init_block_params(k_p, CIN, COUT)

    out = jax.jit(block_forward)(x, params)
    out = jax.block_until_ready(out)

    assert out.shape == (N, COUT, H, W), out.shape
    assert out.dtype == jnp.float32
    assert bool(jnp.all(jnp.isfinite(out)))
    print("KERNEL_OK")
</pallas_src>

<mosaic_0001>
module attributes {stable_mosaic.version = 11 : i64} {
  func.func @kernel(%arg0: i32, %arg1: i32, %arg2: memref<1x16x16x128xbf16, #tpu.memory_space<vmem>>, %arg3: memref<128x128xbf16, #tpu.memory_space<vmem>>, %arg4: memref<1x128xf32, #tpu.memory_space<vmem>>, %arg5: memref<1x16x16x128xbf16, #tpu.memory_space<vmem>>, %arg6: memref<1x1x2x128xf32, #tpu.memory_space<vmem>>) attributes {dimension_semantics = [#tpu.dimension_semantics<parallel>, #tpu.dimension_semantics<parallel>], iteration_bounds = array<i64: 2, 1>, scalar_prefetch = 0 : i64, scratch_operands = 0 : i64, tpu.core_type = #tpu.core_type<tc>, window_params = [{transform_indices = @transform_0, window_bounds = array<i64: 1, 16, 16, 128>}, {pipeline_mode = #tpu.pipeline_mode<synchronous>, transform_indices = @transform_1, window_bounds = array<i64: 128, 128>}, {pipeline_mode = #tpu.pipeline_mode<synchronous>, transform_indices = @transform_2, window_bounds = array<i64: 1, 128>}, {transform_indices = @transform_3, window_bounds = array<i64: 1, 16, 16, 128>}, {transform_indices = @transform_4, window_bounds = array<i64: 1, 1, 2, 128>}]} {
    %c0 = arith.constant 0 : index
    %c0_0 = arith.constant 0 : index
    %c0_1 = arith.constant 0 : index
    %c0_2 = arith.constant 0 : index
    %0 = vector.load %arg2[%c0, %c0_0, %c0_1, %c0_2] : memref<1x16x16x128xbf16, #tpu.memory_space<vmem>>, vector<1x16x16x128xbf16>
    %1 = vector.shape_cast %0 : vector<1x16x16x128xbf16> to vector<256x128xbf16>
    %c0_3 = arith.constant 0 : index
    %c0_4 = arith.constant 0 : index
    %2 = vector.load %arg3[%c0_3, %c0_4] : memref<128x128xbf16, #tpu.memory_space<vmem>>, vector<128x128xbf16>
    %cst = arith.constant dense<0.000000e+00> : vector<256x128xf32>
    %3 = tpu.matmul %1, %2, %cst {dimension_numbers = #tpu.dot_dimension_numbers<[1], [0], [0], [1], [0, 0, 1, 1], [], []>} : vector<256x128xbf16>, vector<128x128xbf16>, vector<256x128xf32> -> vector<256x128xf32>
    %c0_5 = arith.constant 0 : index
    %c0_6 = arith.constant 0 : index
    %4 = vector.load %arg4[%c0_5, %c0_6] : memref<1x128xf32, #tpu.memory_space<vmem>>, vector<1x128xf32>
    %5 = vector.broadcast %4 : vector<1x128xf32> to vector<256x128xf32>
    %6 = arith.addf %3, %5 : vector<256x128xf32>
    %cst_7 = arith.constant 0.000000e+00 : f32
    %7 = vector.broadcast %cst_7 : f32 to vector<256x128xf32>
    %8 = arith.cmpf ogt, %6, %7 : vector<256x128xf32>
    %cst_8 = arith.constant 0.00999999977 : f32
    %9 = vector.broadcast %cst_8 : f32 to vector<256x128xf32>
    %10 = arith.mulf %9, %6 : vector<256x128xf32>
    %11 = arith.select %8, %6, %10 : vector<256x128xi1>, vector<256x128xf32>
    %cst_9 = arith.constant dense<0.000000e+00> : vector<128xf32>
    %12 = vector.multi_reduction <add>, %11, %cst_9 [0] : vector<256x128xf32> to vector<128xf32>
    %13 = vector.shape_cast %12 : vector<128xf32> to vector<1x128xf32>
    %14 = arith.mulf %11, %11 : vector<256x128xf32>
    %cst_10 = arith.constant dense<0.000000e+00> : vector<128xf32>
    %15 = vector.multi_reduction <add>, %14, %cst_10 [0] : vector<256x128xf32> to vector<128xf32>
    %16 = vector.shape_cast %15 : vector<128xf32> to vector<1x128xf32>
    %17 = tpu.concatenate %13, %16 in 0 : vector<1x128xf32>, vector<1x128xf32> -> vector<2x128xf32>
    %18 = vector.shape_cast %17 : vector<2x128xf32> to vector<1x1x2x128xf32>
    %c0_11 = arith.constant 0 : index
    %c0_12 = arith.constant 0 : index
    %c0_13 = arith.constant 0 : index
    %c0_14 = arith.constant 0 : index
    %19 = vector.load %arg6[%c0_11, %c0_12, %c0_13, %c0_14] : memref<1x1x2x128xf32, #tpu.memory_space<vmem>>, vector<1x1x2x128xf32>
    tpu.vector_store %arg6[%c0_11, %c0_12, %c0_13, %c0_14], %18 {strides = array<i32>} : memref<1x1x2x128xf32, #tpu.memory_space<vmem>>, vector<1x1x2x128xf32>,
    %20 = vector.shape_cast %11 : vector<256x128xf32> to vector<1x16x16x128xf32>
    %21 = arith.truncf %20 : vector<1x16x16x128xf32> to vector<1x16x16x128xbf16>
    %c0_15 = arith.constant 0 : index
    %c0_16 = arith.constant 0 : index
    %c0_17 = arith.constant 0 : index
    %c0_18 = arith.constant 0 : index
    %22 = vector.load %arg5[%c0_15, %c0_16, %c0_17, %c0_18] : memref<1x16x16x128xbf16, #tpu.memory_space<vmem>>, vector<1x16x16x128xbf16>
    tpu.vector_store %arg5[%c0_15, %c0_16, %c0_17, %c0_18], %21 {strides = array<i32>} : memref<1x16x16x128xbf16, #tpu.memory_space<vmem>>, vector<1x16x16x128xbf16>,
    return
  }
  func.func @transform_0(%arg0: i32, %arg1: i32) -> (i32, i32, i32, i32) {
    %c0_i32 = arith.constant 0 : i32
    %c0_i32_0 = arith.constant 0 : i32
    %c0_i32_1 = arith.constant 0 : i32
    return %arg0, %arg1, %c0_i32, %c0_i32_0 : i32, i32, i32, i32
  }
  func.func @transform_1(%arg0: i32, %arg1: i32) -> (i32, i32) {
    %c0_i32 = arith.constant 0 : i32
    %c0_i32_0 = arith.constant 0 : i32
    %c0_i32_1 = arith.constant 0 : i32
    return %c0_i32, %c0_i32_0 : i32, i32
  }
  func.func @transform_2(%arg0: i32, %arg1: i32) -> (i32, i32) {
    %c0_i32 = arith.constant 0 : i32
    %c0_i32_0 = arith.constant 0 : i32
    %c0_i32_1 = arith.constant 0 : i32
    return %c0_i32, %c0_i32_0 : i32, i32
  }
  func.func @transform_3(%arg0: i32, %arg1: i32) -> (i32, i32, i32, i32) {
    %c0_i32 = arith.constant 0 : i32
    %c0_i32_0 = arith.constant 0 : i32
    %c0_i32_1 = arith.constant 0 : i32
    return %arg0, %arg1, %c0_i32, %c0_i32_0 : i32, i32, i32, i32
  }
  func.func @transform_4(%arg0: i32, %arg1: i32) -> (i32, i32, i32, i32) {
    %c0_i32 = arith.constant 0 : i32
    %c0_i32_0 = arith.constant 0 : i32
    %c0_i32_1 = arith.constant 0 : i32
    return %arg0, %arg1, %c0_i32, %c0_i32_0 : i32, i32, i32, i32
  }
}

module attributes {stable_mosaic.version = 11 : i64} {
  func.func @kernel(%arg0: i32, %arg1: memref<512x128xbf16, #tpu.memory_space<vmem>>, %arg2: memref<1x128xf32, #tpu.memory_space<vmem>>, %arg3: memref<1x128xf32, #tpu.memory_space<vmem>>, %arg4: memref<512x8xf32, #tpu.memory_space<vmem>>) attributes {dimension_semantics = [#tpu.dimension_semantics<parallel>], iteration_bounds = array<i64: 1>, scalar_prefetch = 0 : i64, scratch_operands = 0 : i64, tpu.core_type = #tpu.core_type<tc>, window_params = [{transform_indices = @transform_0, window_bounds = array<i64: 512, 128>}, {pipeline_mode = #tpu.pipeline_mode<synchronous>, transform_indices = @transform_1, window_bounds = array<i64: 1, 128>}, {pipeline_mode = #tpu.pipeline_mode<synchronous>, transform_indices = @transform_2, window_bounds = array<i64: 1, 128>}, {transform_indices = @transform_3, window_bounds = array<i64: 512, 8>}]} {
    %c0 = arith.constant 0 : index
    %c0_0 = arith.constant 0 : index
    %0 = vector.load %arg1[%c0, %c0_0] : memref<512x128xbf16, #tpu.memory_space<vmem>>, vector<512x128xbf16>
    %1 = arith.extf %0 : vector<512x128xbf16> to vector<512x128xf32>
    %c0_1 = arith.constant 0 : index
    %c0_2 = arith.constant 0 : index
    %2 = vector.load %arg2[%c0_1, %c0_2] : memref<1x128xf32, #tpu.memory_space<vmem>>, vector<1x128xf32>
    %3 = vector.broadcast %2 : vector<1x128xf32> to vector<512x128xf32>
    %4 = arith.mulf %1, %3 : vector<512x128xf32>
    %c0_3 = arith.constant 0 : index
    %c0_4 = arith.constant 0 : index
    %5 = vector.load %arg3[%c0_3, %c0_4] : memref<1x128xf32, #tpu.memory_space<vmem>>, vector<1x128xf32>
    %6 = vector.broadcast %5 : vector<1x128xf32> to vector<512x128xf32>
    %7 = arith.addf %4, %6 : vector<512x128xf32>
    %8 = vector.extract_strided_slice %7 {offsets = [0, 0], sizes = [512, 8], strides = [1, 1]} : vector<512x128xf32> to vector<512x8xf32>
    %c0_5 = arith.constant 0 : index
    %c0_6 = arith.constant 0 : index
    %9 = vector.load %arg4[%c0_5, %c0_6] : memref<512x8xf32, #tpu.memory_space<vmem>>, vector<512x8xf32>
    tpu.vector_store %arg4[%c0_5, %c0_6], %8 {strides = array<i32>} : memref<512x8xf32, #tpu.memory_space<vmem>>, vector<512x8xf32>,
    return
  }
  func.func @transform_0(%arg0: i32) -> (i32, i32) {
    %c0_i32 = arith.constant 0 : i32
    %c0_i32_0 = arith.constant 0 : i32
    return %arg0, %c0_i32 : i32, i32
  }
  func.func @transform_1(%arg0: i32) -> (i32, i32) {
    %c0_i32 = arith.constant 0 : i32
    %c0_i32_0 = arith.constant 0 : i32
    %c0_i32_1 = arith.constant 0 : i32
    return %c0_i32, %c0_i32_0 : i32, i32
  }
  func.func @transform_2(%arg0: i32) -> (i32, i32) {
    %c0_i32 = arith.constant 0 : i32
    %c0_i32_0 = arith.constant 0 : i32
    %c0_i32_1 = arith.constant 0 : i32
    return %c0_i32, %c0_i32_0 : i32, i32
  }
  func.func @transform_3(%arg0: i32) -> (i32, i32) {
    %c0_i32 = arith.constant 0 : i32
    %c0_i32_0 = arith.constant 0 : i32
    return %arg0, %c0_i32 : i32, i32
  }
}

module attributes {stable_mosaic.version = 11 : i64} {
  func.func @kernel(%arg0: i32, %arg1: i32, %arg2: memref<1x16x16x128xbf16, #tpu.memory_space<vmem>>, %arg3: memref<9x128x128xbf16, #tpu.memory_space<vmem>>, %arg4: memref<1x128xf32, #tpu.memory_space<vmem>>, %arg5: memref<1x128xf32, #tpu.memory_space<vmem>>, %arg6: memref<1x128xf32, #tpu.memory_space<vmem>>, %arg7: memref<1x16x16x128xbf16, #tpu.memory_space<vmem>>, %arg8: memref<1x1x2x128xf32, #tpu.memory_space<vmem>>) attributes {dimension_semantics = [#tpu.dimension_semantics<parallel>, #tpu.dimension_semantics<parallel>], iteration_bounds = array<i64: 2, 1>, scalar_prefetch = 0 : i64, scratch_operands = 0 : i64, tpu.core_type = #tpu.core_type<tc>, window_params = [{transform_indices = @transform_0, window_bounds = array<i64: 1, 16, 16, 128>}, {pipeline_mode = #tpu.pipeline_mode<synchronous>, transform_indices = @transform_1, window_bounds = array<i64: 9, 128, 128>}, {pipeline_mode = #tpu.pipeline_mode<synchronous>, transform_indices = @transform_2, window_bounds = array<i64: 1, 128>}, {pipeline_mode = #tpu.pipeline_mode<synchronous>, transform_indices = @transform_3, window_bounds = array<i64: 1, 128>}, {pipeline_mode = #tpu.pipeline_mode<synchronous>, transform_indices = @transform_4, window_bounds = array<i64: 1, 128>}, {transform_indices = @transform_5, window_bounds = array<i64: 1, 16, 16, 128>}, {transform_indices = @transform_6, window_bounds = array<i64: 1, 1, 2, 128>}]} {
    %c16_i32 = arith.constant 16 : i32
    %0 = arith.muli %arg1, %c16_i32 : i32
    %1 = tpu.assume_multiple %0, 8 : i32
    %c0_i32 = arith.constant 0 : i32
    %2 = arith.cmpi eq, %1, %c0_i32 : i32
    %c1_i32 = arith.constant 1 : i32
    %3 = arith.subi %1, %c1_i32 : i32
    %c1_i32_0 = arith.constant 1 : i32
    %4 = arith.select %2, %c1_i32_0, %3 : i32
    %c16_i32_1 = arith.constant 16 : i32
    %5 = arith.addi %1, %c16_i32_1 : i32
    %c16_i32_2 = arith.constant 16 : i32
    %6 = arith.cmpi sge, %5, %c16_i32_2 : i32
    %c16_i32_3 = arith.constant 16 : i32
    %7 = arith.addi %1, %c16_i32_3 : i32
    %c14_i32 = arith.constant 14 : i32
    %8 = arith.select %6, %c14_i32, %7 : i32
    %c0 = arith.constant 0 : index
    %9 = arith.index_cast %4 : i32 to index
    %c0_4 = arith.constant 0 : index
    %c0_5 = arith.constant 0 : index
    %10 = vector.load %arg2[%c0, %9, %c0_4, %c0_5] : memref<1x16x16x128xbf16, #tpu.memory_space<vmem>>, vector<1x1x16x128xbf16>
    %11 = vector.shape_cast %10 : vector<1x1x16x128xbf16> to vector<1x16x128xbf16>
    %c0_6 = arith.constant 0 : index
    %12 = arith.index_cast %1 : i32 to index
    %c0_7 = arith.constant 0 : index
    %c0_8 = arith.constant 0 : index
    %13 = vector.load %arg2[%c0_6, %12, %c0_7, %c0_8] : memref<1x16x16x128xbf16, #tpu.memory_space<vmem>>, vector<1x16x16x128xbf16>
    %14 = vector.shape_cast %13 : vector<1x16x16x128xbf16> to vector<16x16x128xbf16>
    %c0_9 = arith.constant 0 : index
    %15 = arith.index_cast %8 : i32 to index
    %c0_10 = arith.constant 0 : index
    %c0_11 = arith.constant 0 : index
    %16 = vector.load %arg2[%c0_9, %15, %c0_10, %c0_11] : memref<1x16x16x128xbf16, #tpu.memory_space<vmem>>, vector<1x1x16x128xbf16>
    %17 = vector.shape_cast %16 : vector<1x1x16x128xbf16> to vector<1x16x128xbf16>
    %18 = tpu.concatenate %11, %14, %17 in 0 : vector<1x16x128xbf16>, vector<16x16x128xbf16>, vector<1x16x128xbf16> -> vector<18x16x128xbf16>
    %c0_12 = arith.constant 0 : index
    %c0_13 = arith.constant 0 : index
    %19 = vector.load %arg5[%c0_12, %c0_13] : memref<1x128xf32, #tpu.memory_space<vmem>>, vector<1x128xf32>
    %20 = arith.truncf %19 : vector<1x128xf32> to vector<1x128xbf16>
    %c0_14 = arith.constant 0 : index
    %c0_15 = arith.constant 0 : index
    %21 = vector.load %arg6[%c0_14, %c0_15] : memref<1x128xf32, #tpu.memory_space<vmem>>, vector<1x128xf32>
    %22 = arith.truncf %21 : vector<1x128xf32> to vector<1x128xbf16>
    %23 = vector.shape_cast %20 : vector<1x128xbf16> to vector<1x1x128xbf16>
    %24 = vector.broadcast %23 : vector<1x1x128xbf16> to vector<18x16x128xbf16>
    %25 = arith.mulf %18, %24 : vector<18x16x128xbf16>
    %26 = vector.shape_cast %22 : vector<1x128xbf16> to vector<1x1x128xbf16>
    %27 = vector.broadcast %26 : vector<1x1x128xbf16> to vector<18x16x128xbf16>
    %28 = arith.addf %25, %27 : vector<18x16x128xbf16>
    %29 = vector.extract_strided_slice %28 {offsets = [0, 1, 0], sizes = [18, 1, 128], strides = [1, 1, 1]} : vector<18x16x128xbf16> to vector<18x1x128xbf16>
    %30 = vector.extract_strided_slice %28 {offsets = [0, 0, 0], sizes = [18, 15, 128], strides = [1, 1, 1]} : vector<18x16x128xbf16> to vector<18x15x128xbf16>
    %31 = tpu.concatenate %29, %30 in 1 : vector<18x1x128xbf16>, vector<18x15x128xbf16> -> vector<18x16x128xbf16>
    %32 = vector.extract_strided_slice %28 {offsets = [0, 1, 0], sizes = [18, 15, 128], strides = [1, 1, 1]} : vector<18x16x128xbf16> to vector<18x15x128xbf16>
    %33 = vector.extract_strided_slice %28 {offsets = [0, 14, 0], sizes = [18, 1, 128], strides = [1, 1, 1]} : vector<18x16x128xbf16> to vector<18x1x128xbf16>
    %34 = tpu.concatenate %32, %33 in 1 : vector<18x15x128xbf16>, vector<18x1x128xbf16> -> vector<18x16x128xbf16>
    %35 = vector.shape_cast %31 : vector<18x16x128xbf16> to vector<288x128xbf16>
    %36 = vector.shape_cast %28 : vector<18x16x128xbf16> to vector<288x128xbf16>
    %37 = vector.shape_cast %34 : vector<18x16x128xbf16> to vector<288x128xbf16>
    %cst = arith.constant 0.000000e+00 : f32
    %38 = vector.broadcast %cst : f32 to vector<256x128xf32>
    %39 = vector.extract_strided_slice %35 {offsets = [0, 0], sizes = [256, 128], strides = [1, 1]} : vector<288x128xbf16> to vector<256x128xbf16>
    %c0_16 = arith.constant 0 : index
    %c0_17 = arith.constant 0 : index
    %c0_18 = arith.constant 0 : index
    %40 = vector.load %arg3[%c0_16, %c0_17, %c0_18] : memref<9x128x128xbf16, #tpu.memory_space<vmem>>, vector<1x128x128xbf16>
    %41 = vector.shape_cast %40 : vector<1x128x128xbf16> to vector<128x128xbf16>
    %cst_19 = arith.constant dense<0.000000e+00> : vector<256x128xf32>
    %42 = tpu.matmul %39, %41, %cst_19 {dimension_numbers = #tpu.dot_dimension_numbers<[1], [0], [0], [1], [0, 0, 1, 1], [], []>} : vector<256x128xbf16>, vector<128x128xbf16>, vector<256x128xf32> -> vector<256x128xf32>
    %43 = arith.addf %38, %42 : vector<256x128xf32>
    %44 = vector.extract_strided_slice %36 {offsets = [0, 0], sizes = [256, 128], strides = [1, 1]} : vector<288x128xbf16> to vector<256x128xbf16>
    %c1 = arith.constant 1 : index
    %c0_20 = arith.constant 0 : index
    %c0_21 = arith.constant 0 : index
    %45 = vector.load %arg3[%c1, %c0_20, %c0_21] : memref<9x128x128xbf16, #tpu.memory_space<vmem>>, vector<1x128x128xbf16>
    %46 = vector.shape_cast %45 : vector<1x128x128xbf16> to vector<128x128xbf16>
    %cst_22 = arith.constant dense<0.000000e+00> : vector<256x128xf32>
    %47 = tpu.matmul %44, %46, %cst_22 {dimension_numbers = #tpu.dot_dimension_numbers<[1], [0], [0], [1], [0, 0, 1, 1], [], []>} : vector<256x128xbf16>, vector<128x128xbf16>, vector<256x128xf32> -> vector<256x128xf32>
    %48 = arith.addf %43, %47 : vector<256x128xf32>
    %49 = vector.extract_strided_slice %37 {offsets = [0, 0], sizes = [256, 128], strides = [1, 1]} : vector<288x128xbf16> to vector<256x128xbf16>
    %c2 = arith.constant 2 : index
    %c0_23 = arith.constant 0 : index
    %c0_24 = arith.constant 0 : index
    %50 = vector.load %arg3[%c2, %c0_23, %c0_24] : memref<9x128x128xbf16, #tpu.memory_space<vmem>>, vector<1x128x128xbf16>
    %51 = vector.shape_cast %50 : vector<1x128x128xbf16> to vector<128x128xbf16>
    %cst_25 = arith.constant dense<0.000000e+00> : vector<256x128xf32>
    %52 = tpu.matmul %49, %51, %cst_25 {dimension_numbers = #tpu.dot_dimension_numbers<[1], [0], [0], [1], [0, 0, 1, 1], [], []>} : vector<256x128xbf16>, vector<128x128xbf16>, vector<256x128xf32> -> vector<256x128xf32>
    %53 = arith.addf %48, %52 : vector<256x128xf32>
    %54 = vector.extract_strided_slice %35 {offsets = [16, 0], sizes = [256, 128], strides = [1, 1]} : vector<288x128xbf16> to vector<256x128xbf16>
    %c3 = arith.constant 3 : index
    %c0_26 = arith.constant 0 : index
    %c0_27 = arith.constant 0 : index
    %55 = vector.load %arg3[%c3, %c0_26, %c0_27] : memref<9x128x128xbf16, #tpu.memory_space<vmem>>, vector<1x128x128xbf16>
    %56 = vector.shape_cast %55 : vector<1x128x128xbf16> to vector<128x128xbf16>
    %cst_28 = arith.constant dense<0.000000e+00> : vector<256x128xf32>
    %57 = tpu.matmul %54, %56, %cst_28 {dimension_numbers = #tpu.dot_dimension_numbers<[1], [0], [0], [1], [0, 0, 1, 1], [], []>} : vector<256x128xbf16>, vector<128x128xbf16>, vector<256x128xf32> -> vector<256x128xf32>
    %58 = arith.addf %53, %57 : vector<256x128xf32>
    %59 = vector.extract_strided_slice %36 {offsets = [16, 0], sizes = [256, 128], strides = [1, 1]} : vector<288x128xbf16> to vector<256x128xbf16>
    %c4 = arith.constant 4 : index
    %c0_29 = arith.constant 0 : index
    %c0_30 = arith.constant 0 : index
    %60 = vector.load %arg3[%c4, %c0_29, %c0_30] : memref<9x128x128xbf16, #tpu.memory_space<vmem>>, vector<1x128x128xbf16>
    %61 = vector.shape_cast %60 : vector<1x128x128xbf16> to vector<128x128xbf16>
    %cst_31 = arith.constant dense<0.000000e+00> : vector<256x128xf32>
    %62 = tpu.matmul %59, %61, %cst_31 {dimension_numbers = #tpu.dot_dimension_numbers<[1], [0], [0], [1], [0, 0, 1, 1], [], []>} : vector<256x128xbf16>, vector<128x128xbf16>, vector<256x128xf32> -> vector<256x128xf32>
    %63 = arith.addf %58, %62 : vector<256x128xf32>
    %64 = vector.extract_strided_slice %37 {offsets = [16, 0], sizes = [256, 128], strides = [1, 1]} : vector<288x128xbf16> to vector<256x128xbf16>
    %c5 = arith.constant 5 : index
    %c0_32 = arith.constant 0 : index
    %c0_33 = arith.constant 0 : index
    %65 = vector.load %arg3[%c5, %c0_32, %c0_33] : memref<9x128x128xbf16, #tpu.memory_space<vmem>>, vector<1x128x128xbf16>
    %66 = vector.shape_cast %65 : vector<1x128x128xbf16> to vector<128x128xbf16>
    %cst_34 = arith.constant dense<0.000000e+00> : vector<256x128xf32>
    %67 = tpu.matmul %64, %66, %cst_34 {dimension_numbers = #tpu.dot_dimension_numbers<[1], [0], [0], [1], [0, 0, 1, 1], [], []>} : vector<256x128xbf16>, vector<128x128xbf16>, vector<256x128xf32> -> vector<256x128xf32>
    %68 = arith.addf %63, %67 : vector<256x128xf32>
    %69 = vector.extract_strided_slice %35 {offsets = [32, 0], sizes = [256, 128], strides = [1, 1]} : vector<288x128xbf16> to vector<256x128xbf16>
    %c6 = arith.constant 6 : index
    %c0_35 = arith.constant 0 : index
    %c0_36 = arith.constant 0 : index
    %70 = vector.load %arg3[%c6, %c0_35, %c0_36] : memref<9x128x128xbf16, #tpu.memory_space<vmem>>, vector<1x128x128xbf16>
    %71 = vector.shape_cast %70 : vector<1x128x128xbf16> to vector<128x128xbf16>
    %cst_37 = arith.constant dense<0.000000e+00> : vector<256x128xf32>
    %72 = tpu.matmul %69, %71, %cst_37 {dimension_numbers = #tpu.dot_dimension_numbers<[1], [0], [0], [1], [0, 0, 1, 1], [], []>} : vector<256x128xbf16>, vector<128x128xbf16>, vector<256x128xf32> -> vector<256x128xf32>
    %73 = arith.addf %68, %72 : vector<256x128xf32>
    %74 = vector.extract_strided_slice %36 {offsets = [32, 0], sizes = [256, 128], strides = [1, 1]} : vector<288x128xbf16> to vector<256x128xbf16>
    %c7 = arith.constant 7 : index
    %c0_38 = arith.constant 0 : index
    %c0_39 = arith.constant 0 : index
    %75 = vector.load %arg3[%c7, %c0_38, %c0_39] : memref<9x128x128xbf16, #tpu.memory_space<vmem>>, vector<1x128x128xbf16>
    %76 = vector.shape_cast %75 : vector<1x128x128xbf16> to vector<128x128xbf16>
    %cst_40 = arith.constant dense<0.000000e+00> : vector<256x128xf32>
    %77 = tpu.matmul %74, %76, %cst_40 {dimension_numbers = #tpu.dot_dimension_numbers<[1], [0], [0], [1], [0, 0, 1, 1], [], []>} : vector<256x128xbf16>, vector<128x128xbf16>, vector<256x128xf32> -> vector<256x128xf32>
    %78 = arith.addf %73, %77 : vector<256x128xf32>
    %79 = vector.extract_strided_slice %37 {offsets = [32, 0], sizes = [256, 128], strides = [1, 1]} : vector<288x128xbf16> to vector<256x128xbf16>
    %c8 = arith.constant 8 : index
    %c0_41 = arith.constant 0 : index
    %c0_42 = arith.constant 0 : index
    %80 = vector.load %arg3[%c8, %c0_41, %c0_42] : memref<9x128x128xbf16, #tpu.memory_space<vmem>>, vector<1x128x128xbf16>
    %81 = vector.shape_cast %80 : vector<1x128x128xbf16> to vector<128x128xbf16>
    %cst_43 = arith.constant dense<0.000000e+00> : vector<256x128xf32>
    %82 = tpu.matmul %79, %81, %cst_43 {dimension_numbers = #tpu.dot_dimension_numbers<[1], [0], [0], [1], [0, 0, 1, 1], [], []>} : vector<256x128xbf16>, vector<128x128xbf16>, vector<256x128xf32> -> vector<256x128xf32>
    %83 = arith.addf %78, %82 : vector<256x128xf32>
    %c0_44 = arith.constant 0 : index
    %c0_45 = arith.constant 0 : index
    %84 = vector.load %arg4[%c0_44, %c0_45] : memref<1x128xf32, #tpu.memory_space<vmem>>, vector<1x128xf32>
    %85 = vector.broadcast %84 : vector<1x128xf32> to vector<256x128xf32>
    %86 = arith.addf %83, %85 : vector<256x128xf32>
    %cst_46 = arith.constant 0.000000e+00 : f32
    %87 = vector.broadcast %cst_46 : f32 to vector<256x128xf32>
    %88 = arith.cmpf ogt, %86, %87 : vector<256x128xf32>
    %cst_47 = arith.constant 0.00999999977 : f32
    %89 = vector.broadcast %cst_47 : f32 to vector<256x128xf32>
    %90 = arith.mulf %89, %86 : vector<256x128xf32>
    %91 = arith.select %88, %86, %90 : vector<256x128xi1>, vector<256x128xf32>
    %cst_48 = arith.constant dense<0.000000e+00> : vector<128xf32>
    %92 = vector.multi_reduction <add>, %91, %cst_48 [0] : vector<256x128xf32> to vector<128xf32>
    %93 = vector.shape_cast %92 : vector<128xf32> to vector<1x128xf32>
    %94 = arith.mulf %91, %91 : vector<256x128xf32>
    %cst_49 = arith.constant dense<0.000000e+00> : vector<128xf32>
    %95 = vector.multi_reduction <add>, %94, %cst_49 [0] : vector<256x128xf32> to vector<128xf32>
    %96 = vector.shape_cast %95 : vector<128xf32> to vector<1x128xf32>
    %97 = tpu.concatenate %93, %96 in 0 : vector<1x128xf32>, vector<1x128xf32> -> vector<2x128xf32>
    %98 = vector.shape_cast %97 : vector<2x128xf32> to vector<1x1x2x128xf32>
    %c0_50 = arith.constant 0 : index
    %c0_51 = arith.constant 0 : index
    %c0_52 = arith.constant 0 : index
    %c0_53 = arith.constant 0 : index
    %99 = vector.load %arg8[%c0_50, %c0_51, %c0_52, %c0_53] : memref<1x1x2x128xf32, #tpu.memory_space<vmem>>, vector<1x1x2x128xf32>
    tpu.vector_store %arg8[%c0_50, %c0_51, %c0_52, %c0_53], %98 {strides = array<i32>} : memref<1x1x2x128xf32, #tpu.memory_space<vmem>>, vector<1x1x2x128xf32>,
    %100 = vector.shape_cast %91 : vector<256x128xf32> to vector<1x16x16x128xf32>
    %101 = arith.truncf %100 : vector<1x16x16x128xf32> to vector<1x16x16x128xbf16>
    %c0_54 = arith.constant 0 : index
    %c0_55 = arith.constant 0 : index
    %c0_56 = arith.constant 0 : index
    %c0_57 = arith.constant 0 : index
    %102 = vector.load %arg7[%c0_54, %c0_55, %c0_56, %c0_57] : memref<1x16x16x128xbf16, #tpu.memory_space<vmem>>, vector<1x16x16x128xbf16>
    tpu.vector_store %arg7[%c0_54, %c0_55, %c0_56, %c0_57], %101 {strides = array<i32>} : memref<1x16x16x128xbf16, #tpu.memory_space<vmem>>, vector<1x16x16x128xbf16>,
    return
  }
  func.func @transform_0(%arg0: i32, %arg1: i32) -> (i32, i32, i32, i32) {
    %c0_i32 = arith.constant 0 : i32
    %c0_i32_0 = arith.constant 0 : i32
    %c0_i32_1 = arith.constant 0 : i32
    %c0_i32_2 = arith.constant 0 : i32
    return %arg0, %c0_i32, %c0_i32_0, %c0_i32_1 : i32, i32, i32, i32
  }
  func.func @transform_1(%arg0: i32, %arg1: i32) -> (i32, i32, i32) {
    %c0_i32 = arith.constant 0 : i32
    %c0_i32_0 = arith.constant 0 : i32
    %c0_i32_1 = arith.constant 0 : i32
    %c0_i32_2 = arith.constant 0 : i32
    return %c0_i32, %c0_i32_0, %c0_i32_1 : i32, i32, i32
  }
  func.func @transform_2(%arg0: i32, %arg1: i32) -> (i32, i32) {
    %c0_i32 = arith.constant 0 : i32
    %c0_i32_0 = arith.constant 0 : i32
    %c0_i32_1 = arith.constant 0 : i32
    return %c0_i32, %c0_i32_0 : i32, i32
  }
  func.func @transform_3(%arg0: i32, %arg1: i32) -> (i32, i32) {
    %c0_i32 = arith.constant 0 : i32
    %c0_i32_0 = arith.constant 0 : i32
    %c0_i32_1 = arith.constant 0 : i32
    return %c0_i32, %c0_i32_0 : i32, i32
  }
  func.func @transform_4(%arg0: i32, %arg1: i32) -> (i32, i32) {
    %c0_i32 = arith.constant 0 : i32
    %c0_i32_0 = arith.constant 0 : i32
    %c0_i32_1 = arith.constant 0 : i32
    return %c0_i32, %c0_i32_0 : i32, i32
  }
  func.func @transform_5(%arg0: i32, %arg1: i32) -> (i32, i32, i32, i32) {
    %c0_i32 = arith.constant 0 : i32
    %c0_i32_0 = arith.constant 0 : i32
    %c0_i32_1 = arith.constant 0 : i32
    return %arg0, %arg1, %c0_i32, %c0_i32_0 : i32, i32, i32, i32
  }
  func.func @transform_6(%arg0: i32, %arg1: i32) -> (i32, i32, i32, i32) {
    %c0_i32 = arith.constant 0 : i32
    %c0_i32_0 = arith.constant 0 : i32
    %c0_i32_1 = arith.constant 0 : i32
    return %arg0, %arg1, %c0_i32, %c0_i32_0 : i32, i32, i32, i32
  }
}

</mosaic_0001>

<llo_original>
// kernel: block_forward.3
$region0: #{block_forward.3}
  #allocation0 [shape = 'u32[]', space=smem, size = 0x4, offset = 0x4, fixed_abs, tag = 'smem constant byte address 0x4 - core index']
  #allocation1 [shape = 'u32[72,128]{1,0:T(1,128)}', space=vmem, size = 0x9000, scoped, tag = 'internal scratch']
  %s0 = inlined_call_operand.vmem [shape: bf16[2,16,16,128], index: 0, kind: input, shape index: {}]
  %s1 = inlined_call_operand.vmem [shape: bf16[128,128], index: 1, kind: input, shape index: {}]
  %s2 = inlined_call_operand.vmem [shape: f32[1,128], index: 2, kind: input, shape index: {}]
  %s3 = inlined_call_operand.vmem [shape: bf16[2,16,16,128], index: 3, kind: output, shape index: {0}]
  %s4 = inlined_call_operand.vmem [shape: f32[2,1,2,128], index: 4, kind: output, shape index: {1}]
  %5 = xla_tuple %s3, %s4
  %s6 = sld [smem:[#allocation0]]
  $region53: #{block_forward.3} parent=0
    _
  %s8 = ssub.s32 1, %s6
  %s9 = scalar_select 0, %s8, %s6
  loop: start=0, step=1, limit=4
  $region2: #{block_forward.3} parent=0 // loop_pre_header
    _
  $region3: #{block_forward.3} parent=0 // loop_header
    %s11 = sphi 0, %s15
    %p12 = scmp.ge.s32.totalorder %s11, 4
    %s18 = sphi 0, %s30
    %s19 = sphi 0, %s26
    %s20 = sphi 0, %s18
    %s21 = sphi 0, %s19
    %s22 = sphi 0, %s20
    %s23 = sphi 0, %s21
    %s35 = sphi 0, %s37
    %s38 = sphi 0, %s35
    %s39 = sphi 0, %s38
    %s55 = sphi 0, %s39
    %s59 = sphi 0, %s59
    %s61 = sphi 0, %s59
    %s62 = sphi 0, %s61
    %s76 = sphi 0, %s62
    %s80 = sphi 0, %s80
    %s82 = sphi 0, %s80
    %s83 = sphi 0, %s82
    %s97 = sphi 0, %s83
    %s105 = sphi 0, %s107
    %s108 = sphi 0, %s105
    %s109 = sphi 0, %s108
    %s125 = sphi 0, %s109
    %s133 = sphi 0, %s135
    %s136 = sphi 0, %s133
    %s137 = sphi 0, %s136
    %s153 = sphi 0, %s137
  $region4: #{block_forward.3} parent=0 // loop_header_branch
    %14 = sbr.rel (%p12) target = $region8
  $region5: #{block_forward.3} parent=0 // loop_body
    %s16 = ssub.s32 %s11, 1
    %s17 = ssub.s32 %s11, 2
    %s24 = sadd.s32 1, %s19
    %p25 = scmp.ge.s32.totalorder %s24, 1
    %s26 = scalar_select %p25, 0, %s24
    %s27 = sadd.s32 1, %s18
    %s28 = scalar_select %p25, %s27, %s18
    %p29 = scmp.ge.s32.totalorder %s28, 2
    %s30 = scalar_select %p29, 0, %s28
    %s31 = ssub.s32 %s18, %s30
    %s32 = ssub.s32 %s19, %s26
    %s33 = sor.u32 %s31, %s32
    %p34 = scmp.eq.s32.totalorder %s33, 0
    %s36 = sadd.s32 %s35, 1
    %s37 = scalar_select %p34, %s35, %s36
    %p40 = pneg %p34
    %p41 = scmp.eq.s32.totalorder %s11, 1
    %p42 = por %p40, %p41
    %p43 = scmp.ne.s32.totalorder %s35, %s38
    %p44 = scmp.eq.s32.totalorder %s11, 0
    %p45 = por %p43, %p44
    %p46 = scmp.ne.s32.totalorder %s35, %s38
    %p47 = scmp.eq.s32.totalorder %s16, 1
    %p48 = por %p46, %p47
    %p49 = scmp.ne.s32.totalorder %s38, %s39
    %p50 = scmp.eq.s32.totalorder %s16, 0
    %p51 = por %p49, %p50
    %p52 = scmp.ne.s32.totalorder %s38, %s39
    %p53 = scmp.eq.s32.totalorder %s17, 1
    %p54 = por %p52, %p53
    %p56 = scmp.ne.s32.totalorder %s39, %s55
    %p57 = scmp.eq.s32.totalorder %s17, 0
    %p58 = por %p56, %p57
    %s60 = sadd.s32 %s59, 1
    %p63 = scmp.eq.s32.totalorder %s11, 1
    %p64 = scmp.ne.s32.totalorder %s59, %s61
    %p65 = scmp.eq.s32.totalorder %s11, 0
    %p66 = por %p64, %p65
    %p67 = scmp.ne.s32.totalorder %s59, %s61
    %p68 = scmp.eq.s32.totalorder %s16, 1
    %p69 = por %p67, %p68
    %p70 = scmp.ne.s32.totalorder %s61, %s62
    %p71 = scmp.eq.s32.totalorder %s16, 0
    %p72 = por %p70, %p71
    %p73 = scmp.ne.s32.totalorder %s61, %s62
    %p74 = scmp.eq.s32.totalorder %s17, 1
    %p75 = por %p73, %p74
    %p77 = scmp.ne.s32.totalorder %s62, %s76
    %p78 = scmp.eq.s32.totalorder %s17, 0
    %p79 = por %p77, %p78
    %s81 = sadd.s32 %s80, 1
    %p84 = scmp.eq.s32.totalorder %s11, 1
    %p85 = scmp.ne.s32.totalorder %s80, %s82
    %p86 = scmp.eq.s32.totalorder %s11, 0
    %p87 = por %p85, %p86
    %p88 = scmp.ne.s32.totalorder %s80, %s82
    %p89 = scmp.eq.s32.totalorder %s16, 1
    %p90 = por %p88, %p89
    %p91 = scmp.ne.s32.totalorder %s82, %s83
    %p92 = scmp.eq.s32.totalorder %s16, 0
    %p93 = por %p91, %p92
    %p94 = scmp.ne.s32.totalorder %s82, %s83
    %p95 = scmp.eq.s32.totalorder %s17, 1
    %p96 = por %p94, %p95
    %p98 = scmp.ne.s32.totalorder %s83, %s97
    %p99 = scmp.eq.s32.totalorder %s17, 0
    %p100 = por %p98, %p99
    %s101 = ssub.s32 %s18, %s30
    %s102 = ssub.s32 %s19, %s26
    %s103 = sor.u32 %s101, %s102
    %p104 = scmp.eq.s32.totalorder %s103, 0
    %s106 = sadd.s32 %s105, 1
    %s107 = scalar_select %p104, %s105, %s106
    %p110 = pneg %p104
    %p111 = scmp.eq.s32.totalorder %s11, 1
    %p112 = por %p110, %p111
    %p113 = scmp.ne.s32.totalorder %s105, %s108
    %p114 = scmp.eq.s32.totalorder %s11, 0
    %p115 = por %p113, %p114
    %p116 = scmp.ne.s32.totalorder %s105, %s108
    %p117 = scmp.eq.s32.totalorder %s16, 1
    %p118 = por %p116, %p117
    %p119 = scmp.ne.s32.totalorder %s108, %s109
    %p120 = scmp.eq.s32.totalorder %s16, 0
    %p121 = por %p119, %p120
    %p122 = scmp.ne.s32.totalorder %s108, %s109
    %p123 = scmp.eq.s32.totalorder %s17, 1
    %p124 = por %p122, %p123
    %p126 = scmp.ne.s32.totalorder %s109, %s125
    %p127 = scmp.eq.s32.totalorder %s17, 0
    %p128 = por %p126, %p127
    %s129 = ssub.s32 %s18, %s30
    %s130 = ssub.s32 %s19, %s26
    %s131 = sor.u32 %s129, %s130
    %p132 = scmp.eq.s32.totalorder %s131, 0
    %s134 = sadd.s32 %s133, 1
    %s135 = scalar_select %p132, %s133, %s134
    %p138 = pneg %p132
    %p139 = scmp.eq.s32.totalorder %s11, 1
    %p140 = por %p138, %p139
    %p141 = scmp.ne.s32.totalorder %s133, %s136
    %p142 = scmp.eq.s32.totalorder %s11, 0
    %p143 = por %p141, %p142
    %p144 = scmp.ne.s32.totalorder %s133, %s136
    %p145 = scmp.eq.s32.totalorder %s16, 1
    %p146 = por %p144, %p145
    %p147 = scmp.ne.s32.totalorder %s136, %s137
    %p148 = scmp.eq.s32.totalorder %s16, 0
    %p149 = por %p147, %p148
    %p150 = scmp.ne.s32.totalorder %s136, %s137
    %p151 = scmp.eq.s32.totalorder %s17, 1
    %p152 = por %p150, %p151
    %p154 = scmp.ne.s32.totalorder %s137, %s153
    %p155 = scmp.eq.s32.totalorder %s17, 0
    %p156 = por %p154, %p155
    %p157 = scmp.le.s32.totalorder 1, %s11
    %p158 = scmp.lt.s32.totalorder %s11, 3
    %p159 = pnand %p157, %p158
    %p160 = pneg %p159
    // Predicated region
    $region9: #{block_forward.3} parent=5 // pred_check
      _
    $region10: #{block_forward.3} parent=5 // pred_check_branch
      %162 = sbr.rel (%p159) target = $region12
    $region11: #{block_forward.3} parent=5 // pred_region
      %s163 = ssub.s32 %s11, 1
      // Predicated region
      $region13: #{block_forward.3} parent=11 // pred_check
        %p164 = pneg %p72
      $region14: #{block_forward.3} parent=11 // pred_check_branch
        %166 = sbr.rel (%p164) target = $region16
      $region15: #{block_forward.3} parent=11 // pred_region
        _
      $region16: #{block_forward.3} parent=11 // pred_fallthru
        _
      // Predicated region
      $region17: #{block_forward.3} parent=11 // pred_check
        %p167 = pneg %p93
      $region18: #{block_forward.3} parent=11 // pred_check_branch
        %169 = sbr.rel (%p167) target = $region20
      $region19: #{block_forward.3} parent=11 // pred_region
        _
      $region20: #{block_forward.3} parent=11 // pred_fallthru
        _
    $region12: #{block_forward.3} parent=5 // pred_fallthru
      _
    %p170 = scmp.lt.s32.totalorder %s11, 2
    // Predicated region
    $region21: #{block_forward.3} parent=5 // pred_check
      %p171 = pneg %p170
    $region22: #{block_forward.3} parent=5 // pred_check_branch
      %173 = sbr.rel (%p171) target = $region24
    $region23: #{block_forward.3} parent=5 // pred_region
      // Predicated region
      $region25: #{block_forward.3} parent=23 // pred_check
        %p174 = pneg %p45
      $region26: #{block_forward.3} parent=23 // pred_check_branch
        %176 = sbr.rel (%p174) target = $region28
      $region27: #{block_forward.3} parent=23 // pred_region
        %s177 = smul.u32 16, %s19
        %p178 = scmp.lt.s32.totalorder %s18, 1
        %s179 = scalar_select %p178, %s18, 1
        %p180 = scmp.lt.s32.totalorder %s177, 15
        %s181 = scalar_select %p180, %s177, 15
        %s182 = smul.addr %s181, 2
        %s183 = smul.addr %s179, 32
        %s184 = sadd.s32 %s182, %s183
        %s185 = smul.addr %s184, 4
        %s186 = scalar_lea.vmem %s0, %s185
        %s187 = smul.u32 16, %s19
      $region28: #{block_forward.3} parent=23 // pred_fallthru
        _
    $region24: #{block_forward.3} parent=5 // pred_fallthru
      _
    %p188 = scmp.le.s32.totalorder 1, %s11
    %p189 = scmp.lt.s32.totalorder %s11, 3
    %p190 = pnand %p188, %p189
    %p191 = pneg %p190
    // Predicated region
    $region29: #{block_forward.3} parent=5 // pred_check
      _
    $region30: #{block_forward.3} parent=5 // pred_check_branch
      %193 = sbr.rel (%p190) target = $region32
    $region31: #{block_forward.3} parent=5 // pred_region
      %s194 = ssub.s32 %s11, 1
      %s195 = smul.u32 16, %s21
      %p196 = scmp.lt.s32.totalorder %s20, 1
      %s197 = scalar_select %p196, %s20, 1
      %p198 = scmp.lt.s32.totalorder %s195, 15
      %s199 = scalar_select %p198, %s195, 15
      %s200 = smul.addr %s199, 2
      %s201 = smul.addr %s197, 32
      %s202 = sadd.s32 %s200, %s201
      %s203 = smul.addr %s202, 4
      %s204 = scalar_lea.vmem %s0, %s203
      %p205 = pneg %p51
      %p206 = pneg %p48
      %p207 = pneg %p72
      %p208 = pneg %p69
      %p209 = pneg %p93
      %p210 = pneg %p90
      %p211 = pneg %p121
      %p212 = pneg %p118
      %s213 = smul.u32 16, %s21
      %p214 = scmp.lt.s32.totalorder %s20, 1
      %s215 = scalar_select %p214, %s20, 1
      %p216 = scmp.lt.s32.totalorder %s213, 15
      %s217 = scalar_select %p216, %s213, 15
      %s218 = smul.addr %s217, 2
      %s219 = smul.addr %s215, 32
      %s220 = sadd.s32 %s218, %s219
      %s221 = smul.addr %s220, 4
      %s222 = scalar_lea.vmem %s3, %s221
      %p223 = pneg %p149
      %p224 = pneg %p146
      %p225 = scmp.lt.s32.totalorder %s20, 1
      %s226 = scalar_select %p225, %s20, 1
      %p227 = scmp.lt.s32.totalorder %s21, 0
      %s228 = scalar_select %p227, %s21, 0
      %s229 = sadd.s32 %s228, %s226
      %s230 = smul.addr %s229, 2
      %s231 = scalar_lea.vmem %s4, %s230
      %s232 = smul.u32 16, %s21
      %p233 = scmp.lt.s32.totalorder %s20, 1
      %s234 = scalar_select %p233, %s20, 1
      %p235 = scmp.lt.s32.totalorder %s232, 15
      %s236 = scalar_select %p235, %s232, 15
      %s237 = smul.addr %s236, 2
      %s238 = smul.addr %s234, 32
      %s239 = sadd.s32 %s237, %s238
      %s240 = smul.addr %s239, 4
      %s241 = scalar_lea.vmem %s0, %s240
      %s242 = smul.u32 16, %s21
      %s243 = smul.u32 16, %s21
      %p244 = scmp.lt.s32.totalorder %s20, 1
      %s245 = scalar_select %p244, %s20, 1
      %p246 = scmp.lt.s32.totalorder %s243, 15
      %s247 = scalar_select %p246, %s243, 15
      %s248 = smul.addr %s247, 2
      %s249 = smul.addr %s245, 32
      %s250 = sadd.s32 %s248, %s249
      %s251 = smul.addr %s250, 4
      %s252 = scalar_lea.vmem %s3, %s251
      %s253 = smul.u32 16, %s21
      %p254 = scmp.lt.s32.totalorder %s20, 1
      %s255 = scalar_select %p254, %s20, 1
      %p256 = scmp.lt.s32.totalorder %s21, 0
      %s257 = scalar_select %p256, %s21, 0
      %s258 = sadd.s32 %s257, %s255
      %s259 = smul.addr %s258, 2
      %s260 = scalar_lea.vmem %s4, %s259
      %v261 = vld [vmem:[%s241] sm:$0xf]
      %v262 = vld [vmem:[%s241 + $0x4] sm:$0xf]
      %v263 = vld [vmem:[%s241 + $0x8] sm:$0xf]
      %v264 = vld [vmem:[%s241 + $0xc] sm:$0xf]
      %v265 = vld [vmem:[%s241 + $0x10] sm:$0xf]
      %v266 = vld [vmem:[%s241 + $0x14] sm:$0xf]
      %v267 = vld [vmem:[%s241 + $0x18] sm:$0xf]
      %v268 = vld [vmem:[%s241 + $0x1c] sm:$0xf]
      %v269 = vld [vmem:[%s241 + $0x20] sm:$0xf]
      %v270 = vld [vmem:[%s241 + $0x24] sm:$0xf]
      %v271 = vld [vmem:[%s241 + $0x28] sm:$0xf]
      %v272 = vld [vmem:[%s241 + $0x2c] sm:$0xf]
      %v273 = vld [vmem:[%s241 + $0x30] sm:$0xf]
      %v274 = vld [vmem:[%s241 + $0x34] sm:$0xf]
      %v275 = vld [vmem:[%s241 + $0x38] sm:$0xf]
      %v276 = vld [vmem:[%s241 + $0x3c] sm:$0xf]
      %v277 = vld [vmem:[%s241 + $0x40] sm:$0xf]
      %v278 = vld [vmem:[%s241 + $0x44] sm:$0xf]
      %v279 = vld [vmem:[%s241 + $0x48] sm:$0xf]
      %v280 = vld [vmem:[%s241 + $0x4c] sm:$0xf]
      %v281 = vld [vmem:[%s241 + $0x50] sm:$0xf]
      %v282 = vld [vmem:[%s241 + $0x54] sm:$0xf]
      %v283 = vld [vmem:[%s241 + $0x58] sm:$0xf]
      %v284 = vld [vmem:[%s241 + $0x5c] sm:$0xf]
      %v285 = vld [vmem:[%s241 + $0x60] sm:$0xf]
      %v286 = vld [vmem:[%s241 + $0x64] sm:$0xf]
      %v287 = vld [vmem:[%s241 + $0x68] sm:$0xf]
      %v288 = vld [vmem:[%s241 + $0x6c] sm:$0xf]
      %v289 = vld [vmem:[%s241 + $0x70] sm:$0xf]
      %v290 = vld [vmem:[%s241 + $0x74] sm:$0xf]
      %v291 = vld [vmem:[%s241 + $0x78] sm:$0xf]
      %v292 = vld [vmem:[%s241 + $0x7c] sm:$0xf]
      %v293 = vld [vmem:[%s1] sm:$0xf]
      %v294 = vld [vmem:[%s1 + $0x4] sm:$0xf]
      %v295 = vld [vmem:[%s1 + $0x8] sm:$0xf]
      %v296 = vld [vmem:[%s1 + $0xc] sm:$0xf]
      %v297 = vld [vmem:[%s1 + $0x10] sm:$0xf]
      %v298 = vld [vmem:[%s1 + $0x14] sm:$0xf]
      %v299 = vld [vmem:[%s1 + $0x18] sm:$0xf]
      %v300 = vld [vmem:[%s1 + $0x1c] sm:$0xf]
      %v301 = vld [vmem:[%s1 + $0x20] sm:$0xf]
      %v302 = vld [vmem:[%s1 + $0x24] sm:$0xf]
      %v303 = vld [vmem:[%s1 + $0x28] sm:$0xf]
      %v304 = vld [vmem:[%s1 + $0x2c] sm:$0xf]
      %v305 = vld [vmem:[%s1 + $0x30] sm:$0xf]
      %v306 = vld [vmem:[%s1 + $0x34] sm:$0xf]
      %v307 = vld [vmem:[%s1 + $0x38] sm:$0xf]
      %v308 = vld [vmem:[%s1 + $0x3c] sm:$0xf]
      %v309 = vld [vmem:[%s2] sm:$0x1]
      %v311 = vperm.slane %v309, 0
      %v345 = vunpack.c.l.b16 %v261
      %v346 = vunpack.c.l.b16 %v262
      %v347 = vunpack.c.l.b16 %v263
      %v348 = vunpack.c.l.b16 %v264
      %v349 = vunpack.c.l.b16 %v265
      %v350 = vunpack.c.l.b16 %v266
      %v351 = vunpack.c.l.b16 %v267
      %v352 = vunpack.c.l.b16 %v268
      %v353 = vunpack.c.l.b16 %v269
      %v354 = vunpack.c.l.b16 %v270
      %v355 = vunpack.c.l.b16 %v271
      %v356 = vunpack.c.l.b16 %v272
      %v357 = vunpack.c.l.b16 %v273
      %v358 = vunpack.c.l.b16 %v274
      %v359 = vunpack.c.l.b16 %v275
      %v360 = vunpack.c.l.b16 %v276
      %v361 = vunpack.c.l.b16 %v277
      %v362 = vunpack.c.l.b16 %v278
      %v363 = vunpack.c.l.b16 %v279
      %v364 = vunpack.c.l.b16 %v280
      %v365 = vunpack.c.l.b16 %v281
      %v366 = vunpack.c.l.b16 %v282
      %v367 = vunpack.c.l.b16 %v283
      %v368 = vunpack.c.l.b16 %v284
      %v369 = vunpack.c.l.b16 %v285
      %v370 = vunpack.c.l.b16 %v286
      %v371 = vunpack.c.l.b16 %v287
      %v372 = vunpack.c.l.b16 %v288
      %v373 = vunpack.c.l.b16 %v289
      %v374 = vunpack.c.l.b16 %v290
      %v375 = vunpack.c.l.b16 %v291
      %v376 = vunpack.c.l.b16 %v292
      %v377 = vpack.c.b16 %v346, %v345
      %v378 = vpack.c.b16 %v348, %v347
      %v379 = vpack.c.b16 %v350, %v349
      %v380 = vpack.c.b16 %v352, %v351
      %v381 = vpack.c.b16 %v354, %v353
      %v382 = vpack.c.b16 %v356, %v355
      %v383 = vpack.c.b16 %v358, %v357
      %v384 = vpack.c.b16 %v360, %v359
      %v385 = vpack.c.b16 %v362, %v361
      %v386 = vpack.c.b16 %v364, %v363
      %v387 = vpack.c.b16 %v366, %v365
      %v388 = vpack.c.b16 %v368, %v367
      %v389 = vpack.c.b16 %v370, %v369
      %v390 = vpack.c.b16 %v372, %v371
      %v391 = vpack.c.b16 %v374, %v373
      %v392 = vpack.c.b16 %v376, %v375
      %v425 = vunpack.c.l.b16 %v293
      %v426 = vunpack.c.l.b16 %v294
      %v427 = vunpack.c.l.b16 %v295
      %v428 = vunpack.c.l.b16 %v296
      %v429 = vunpack.c.l.b16 %v297
      %v430 = vunpack.c.l.b16 %v298
      %v431 = vunpack.c.l.b16 %v299
      %v432 = vunpack.c.l.b16 %v300
      %v433 = vunpack.c.l.b16 %v301
      %v434 = vunpack.c.l.b16 %v302
      %v435 = vunpack.c.l.b16 %v303
      %v436 = vunpack.c.l.b16 %v304
      %v437 = vunpack.c.l.b16 %v305
      %v438 = vunpack.c.l.b16 %v306
      %v439 = vunpack.c.l.b16 %v307
      %v440 = vunpack.c.l.b16 %v308
      %v441 = vpack.c.b16 %v426, %v425
      %v442 = vpack.c.b16 %v428, %v427
      %v443 = vpack.c.b16 %v430, %v429
      %v444 = vpack.c.b16 %v432, %v431
      %v445 = vpack.c.b16 %v434, %v433
      %v446 = vpack.c.b16 %v436, %v435
      %v447 = vpack.c.b16 %v438, %v437
      %v448 = vpack.c.b16 %v440, %v439
      %457 = vmatpush.bf16.msra.mxu0 %v448
      %458 = vmatpush.bf16.msra.mxu0 %v447
      %459 = vmatpush.bf16.msra.mxu0 %v446
      %460 = vmatpush.bf16.msra.mxu0 %v445
      %461 = vmatpush.bf16.msra.mxu0 %v444
      %462 = vmatpush.bf16.msra.mxu0 %v443
      %463 = vmatpush.bf16.msra.mxu0 %v442
      %464 = vmatpush.bf16.msra.mxu0 %v441
      %465 = vmatmul.bf16.gmra.mxu0 %v377
      %v466 = vpop.f32.mrf.mxu0
      %v467 = vadd.f32 %v311, %v466
      %v468 = vpop.f32.mrf.mxu0
      %v469 = vadd.f32 %v311, %v468
      %470 = vmatmul.bf16.gmra.mxu0 %v378
      %v471 = vpop.f32.mrf.mxu0
      %v472 = vadd.f32 %v311, %v471
      %v473 = vpop.f32.mrf.mxu0
      %v474 = vadd.f32 %v311, %v473
      %475 = vmatmul.bf16.gmra.mxu0 %v379
      %v476 = vpop.f32.mrf.mxu0
      %v477 = vadd.f32 %v311, %v476
      %v478 = vpop.f32.mrf.mxu0
      %v479 = vadd.f32 %v311, %v478
      %480 = vmatmul.bf16.gmra.mxu0 %v380
      %v481 = vpop.f32.mrf.mxu0
      %v482 = vadd.f32 %v311, %v481
      %v483 = vpop.f32.mrf.mxu0
      %v484 = vadd.f32 %v311, %v483
      %485 = vmatmul.bf16.gmra.mxu0 %v381
      %v486 = vpop.f32.mrf.mxu0
      %v487 = vadd.f32 %v311, %v486
      %v488 = vpop.f32.mrf.mxu0
      %v489 = vadd.f32 %v311, %v488
      %490 = vmatmul.bf16.gmra.mxu0 %v382
      %v491 = vpop.f32.mrf.mxu0
      %v492 = vadd.f32 %v311, %v491
      %v493 = vpop.f32.mrf.mxu0
      %v494 = vadd.f32 %v311, %v493
      %495 = vmatmul.bf16.gmra.mxu0 %v383
      %v496 = vpop.f32.mrf.mxu0
      %v497 = vadd.f32 %v311, %v496
      %v498 = vpop.f32.mrf.mxu0
      %v499 = vadd.f32 %v311, %v498
      %500 = vmatmul.bf16.gmra.mxu0 %v384
      %v501 = vpop.f32.mrf.mxu0
      %v502 = vadd.f32 %v311, %v501
      %v503 = vpop.f32.mrf.mxu0
      %v504 = vadd.f32 %v311, %v503
      %505 = vmatmul.bf16.gmra.mxu0 %v385
      %v506 = vpop.f32.mrf.mxu0
      %v507 = vadd.f32 %v311, %v506
      %v508 = vpop.f32.mrf.mxu0
      %v509 = vadd.f32 %v311, %v508
      %510 = vmatmul.bf16.gmra.mxu0 %v386
      %v511 = vpop.f32.mrf.mxu0
      %v512 = vadd.f32 %v311, %v511
      %v513 = vpop.f32.mrf.mxu0
      %v514 = vadd.f32 %v311, %v513
      %515 = vmatmul.bf16.gmra.mxu0 %v387
      %v516 = vpop.f32.mrf.mxu0
      %v517 = vadd.f32 %v311, %v516
      %v518 = vpop.f32.mrf.mxu0
      %v519 = vadd.f32 %v311, %v518
      %520 = vmatmul.bf16.gmra.mxu0 %v388
      %v521 = vpop.f32.mrf.mxu0
      %v522 = vadd.f32 %v311, %v521
      %v523 = vpop.f32.mrf.mxu0
      %v524 = vadd.f32 %v311, %v523
      %525 = vmatmul.bf16.gmra.mxu0 %v389
      %v526 = vpop.f32.mrf.mxu0
      %v527 = vadd.f32 %v311, %v526
      %v528 = vpop.f32.mrf.mxu0
      %v529 = vadd.f32 %v311, %v528
      %530 = vmatmul.bf16.gmra.mxu0 %v390
      %v531 = vpop.f32.mrf.mxu0
      %v532 = vadd.f32 %v311, %v531
      %v533 = vpop.f32.mrf.mxu0
      %v534 = vadd.f32 %v311, %v533
      %535 = vmatmul.bf16.gmra.mxu0 %v391
      %v536 = vpop.f32.mrf.mxu0
      %v537 = vadd.f32 %v311, %v536
      %v538 = vpop.f32.mrf.mxu0
      %v539 = vadd.f32 %v311, %v538
      %540 = vmatmul.bf16.gmra.mxu0 %v392
      %v541 = vpop.f32.mrf.mxu0
      %v542 = vadd.f32 %v311, %v541
      %v543 = vpop.f32.mrf.mxu0
      %v544 = vadd.f32 %v311, %v543
      %545 = vdwg.mxu0
      %vm546 = vcmp.gt.f32.partialorder %v467, 0.0
      %vm547 = vcmp.gt.f32.partialorder %v469, 0.0
      %vm548 = vcmp.gt.f32.partialorder %v472, 0.0
      %vm549 = vcmp.gt.f32.partialorder %v474, 0.0
      %vm550 = vcmp.gt.f32.partialorder %v477, 0.0
      %vm551 = vcmp.gt.f32.partialorder %v479, 0.0
      %vm552 = vcmp.gt.f32.partialorder %v482, 0.0
      %vm553 = vcmp.gt.f32.partialorder %v484, 0.0
      %vm554 = vcmp.gt.f32.partialorder %v487, 0.0
      %vm555 = vcmp.gt.f32.partialorder %v489, 0.0
      %vm556 = vcmp.gt.f32.partialorder %v492, 0.0
      %vm557 = vcmp.gt.f32.partialorder %v494, 0.0
      %vm558 = vcmp.gt.f32.partialorder %v497, 0.0
      %vm559 = vcmp.gt.f32.partialorder %v499, 0.0
      %vm560 = vcmp.gt.f32.partialorder %v502, 0.0
      %vm561 = vcmp.gt.f32.partialorder %v504, 0.0
      %vm562 = vcmp.gt.f32.partialorder %v507, 0.0
      %vm563 = vcmp.gt.f32.partialorder %v509, 0.0
      %vm564 = vcmp.gt.f32.partialorder %v512, 0.0
      %vm565 = vcmp.gt.f32.partialorder %v514, 0.0
      %vm566 = vcmp.gt.f32.partialorder %v517, 0.0
      %vm567 = vcmp.gt.f32.partialorder %v519, 0.0
      %vm568 = vcmp.gt.f32.partialorder %v522, 0.0
      %vm569 = vcmp.gt.f32.partialorder %v524, 0.0
      %vm570 = vcmp.gt.f32.partialorder %v527, 0.0
      %vm571 = vcmp.gt.f32.partialorder %v529, 0.0
      %vm572 = vcmp.gt.f32.partialorder %v532, 0.0
      %vm573 = vcmp.gt.f32.partialorder %v534, 0.0
      %vm574 = vcmp.gt.f32.partialorder %v537, 0.0
      %vm575 = vcmp.gt.f32.partialorder %v539, 0.0
      %vm576 = vcmp.gt.f32.partialorder %v542, 0.0
      %vm577 = vcmp.gt.f32.partialorder %v544, 0.0
      %v578 = vmul.f32 %v467, 0.01
      %v579 = vmul.f32 %v469, 0.01
      %v580 = vmul.f32 %v472, 0.01
      %v581 = vmul.f32 %v474, 0.01
      %v582 = vmul.f32 %v477, 0.01
      %v583 = vmul.f32 %v479, 0.01
      %v584 = vmul.f32 %v482, 0.01
      %v585 = vmul.f32 %v484, 0.01
      %v586 = vmul.f32 %v487, 0.01
      %v587 = vmul.f32 %v489, 0.01
      %v588 = vmul.f32 %v492, 0.01
      %v589 = vmul.f32 %v494, 0.01
      %v590 = vmul.f32 %v497, 0.01
      %v591 = vmul.f32 %v499, 0.01
      %v592 = vmul.f32 %v502, 0.01
      %v593 = vmul.f32 %v504, 0.01
      %v594 = vmul.f32 %v507, 0.01
      %v595 = vmul.f32 %v509, 0.01
      %v596 = vmul.f32 %v512, 0.01
      %v597 = vmul.f32 %v514, 0.01
      %v598 = vmul.f32 %v517, 0.01
      %v599 = vmul.f32 %v519, 0.01
      %v600 = vmul.f32 %v522, 0.01
      %v601 = vmul.f32 %v524, 0.01
      %v602 = vmul.f32 %v527, 0.01
      %v603 = vmul.f32 %v529, 0.01
      %v604 = vmul.f32 %v532, 0.01
      %v605 = vmul.f32 %v534, 0.01
      %v606 = vmul.f32 %v537, 0.01
      %v607 = vmul.f32 %v539, 0.01
      %v608 = vmul.f32 %v542, 0.01
      %v609 = vmul.f32 %v544, 0.01
      %v610 = vsel %vm546, %v467, %v578
      %v611 = vsel %vm547, %v469, %v579
      %v612 = vsel %vm548, %v472, %v580
      %v613 = vsel %vm549, %v474, %v581
      %v614 = vsel %vm550, %v477, %v582
      %v615 = vsel %vm551, %v479, %v583
      %v616 = vsel %vm552, %v482, %v584
      %v617 = vsel %vm553, %v484, %v585
      %v618 = vsel %vm554, %v487, %v586
      %v619 = vsel %vm555, %v489, %v587
      %v620 = vsel %vm556, %v492, %v588
      %v621 = vsel %vm557, %v494, %v589
      %v622 = vsel %vm558, %v497, %v590
      %v623 = vsel %vm559, %v499, %v591
      %v624 = vsel %vm560, %v502, %v592
      %v625 = vsel %vm561, %v504, %v593
      %v626 = vsel %vm562, %v507, %v594
      %v627 = vsel %vm563, %v509, %v595
      %v628 = vsel %vm564, %v512, %v596
      %v629 = vsel %vm565, %v514, %v597
      %v630 = vsel %vm566, %v517, %v598
      %v631 = vsel %vm567, %v519, %v599
      %v632 = vsel %vm568, %v522, %v600
      %v633 = vsel %vm569, %v524, %v601
      %v634 = vsel %vm570, %v527, %v602
      %v635 = vsel %vm571, %v529, %v603
      %v636 = vsel %vm572, %v532, %v604
      %v637 = vsel %vm573, %v534, %v605
      %v638 = vsel %vm574, %v537, %v606
      %v639 = vsel %vm575, %v539, %v607
      %v640 = vsel %vm576, %v542, %v608
      %v641 = vsel %vm577, %v544, %v609
      %v642 = vadd.f32 %v610, %v611
      %v643 = vadd.f32 %v642, %v612
      %v644 = vadd.f32 %v643, %v613
      %v645 = vadd.f32 %v644, %v614
      %v646 = vadd.f32 %v645, %v615
      %v647 = vadd.f32 %v646, %v616
      %v648 = vadd.f32 %v647, %v617
      %v649 = vadd.f32 %v648, %v618
      %v650 = vadd.f32 %v649, %v619
      %v651 = vadd.f32 %v650, %v620
      %v652 = vadd.f32 %v651, %v621
      %v653 = vadd.f32 %v652, %v622
      %v654 = vadd.f32 %v653, %v623
      %v655 = vadd.f32 %v654, %v624
      %v656 = vadd.f32 %v655, %v625
      %v657 = vadd.f32 %v656, %v626
      %v658 = vadd.f32 %v657, %v627
      %v659 = vadd.f32 %v658, %v628
      %v660 = vadd.f32 %v659, %v629
      %v661 = vadd.f32 %v660, %v630
      %v662 = vadd.f32 %v661, %v631
      %v663 = vadd.f32 %v662, %v632
      %v664 = vadd.f32 %v663, %v633
      %v665 = vadd.f32 %v664, %v634
      %v666 = vadd.f32 %v665, %v635
      %v667 = vadd.f32 %v666, %v636
      %v668 = vadd.f32 %v667, %v637
      %v669 = vadd.f32 %v668, %v638
      %v670 = vadd.f32 %v669, %v639
      %v671 = vadd.f32 %v670, %v640
      %v672 = vadd.f32 %v671, %v641
      %v673 = vrot.slane %v672, 4
      %v674 = vadd.f32 %v672, %v673
      %v675 = vrot.slane %v674, 2
      %v676 = vadd.f32 %v674, %v675
      %v677 = vrot.slane %v676, 1
      %v678 = vadd.f32 %v676, %v677
      %v679 = vmul.f32 %v610, %v610
      %v680 = vmul.f32 %v611, %v611
      %v681 = vmul.f32 %v612, %v612
      %v682 = vmul.f32 %v613, %v613
      %v683 = vmul.f32 %v614, %v614
      %v684 = vmul.f32 %v615, %v615
      %v685 = vmul.f32 %v616, %v616
      %v686 = vmul.f32 %v617, %v617
      %v687 = vmul.f32 %v618, %v618
      %v688 = vmul.f32 %v619, %v619
      %v689 = vmul.f32 %v620, %v620
      %v690 = vmul.f32 %v621, %v621
      %v691 = vmul.f32 %v622, %v622
      %v692 = vmul.f32 %v623, %v623
      %v693 = vmul.f32 %v624, %v624
      %v694 = vmul.f32 %v625, %v625
      %v695 = vmul.f32 %v626, %v626
      %v696 = vmul.f32 %v627, %v627
      %v697 = vmul.f32 %v628, %v628
      %v698 = vmul.f32 %v629, %v629
      %v699 = vmul.f32 %v630, %v630
      %v700 = vmul.f32 %v631, %v631
      %v701 = vmul.f32 %v632, %v632
      %v702 = vmul.f32 %v633, %v633
      %v703 = vmul.f32 %v634, %v634
      %v704 = vmul.f32 %v635, %v635
      %v705 = vmul.f32 %v636, %v636
      %v706 = vmul.f32 %v637, %v637
      %v707 = vmul.f32 %v638, %v638
      %v708 = vmul.f32 %v639, %v639
      %v709 = vmul.f32 %v640, %v640
      %v710 = vmul.f32 %v641, %v641
      %v711 = vadd.f32 %v679, %v680
      %v712 = vadd.f32 %v711, %v681
      %v713 = vadd.f32 %v712, %v682
      %v714 = vadd.f32 %v713, %v683
      %v715 = vadd.f32 %v714, %v684
      %v716 = vadd.f32 %v715, %v685
      %v717 = vadd.f32 %v716, %v686
      %v718 = vadd.f32 %v717, %v687
      %v719 = vadd.f32 %v718, %v688
      %v720 = vadd.f32 %v719, %v689
      %v721 = vadd.f32 %v720, %v690
      %v722 = vadd.f32 %v721, %v691
      %v723 = vadd.f32 %v722, %v692
      %v724 = vadd.f32 %v723, %v693
      %v725 = vadd.f32 %v724, %v694
      %v726 = vadd.f32 %v725, %v695
      %v727 = vadd.f32 %v726, %v696
      %v728 = vadd.f32 %v727, %v697
      %v729 = vadd.f32 %v728, %v698
      %v730 = vadd.f32 %v729, %v699
      %v731 = vadd.f32 %v730, %v700
      %v732 = vadd.f32 %v731, %v701
      %v733 = vadd.f32 %v732, %v702
      %v734 = vadd.f32 %v733, %v703
      %v735 = vadd.f32 %v734, %v704
      %v736 = vadd.f32 %v735, %v705
      %v737 = vadd.f32 %v736, %v706
      %v738 = vadd.f32 %v737, %v707
      %v739 = vadd.f32 %v738, %v708
      %v740 = vadd.f32 %v739, %v709
      %v741 = vadd.f32 %v740, %v710
      %v742 = vrot.slane %v741, 4
      %v743 = vadd.f32 %v741, %v742
      %v744 = vrot.slane %v743, 2
      %v745 = vadd.f32 %v743, %v744
      %v746 = vrot.slane %v745, 1
      %v747 = vadd.f32 %v745, %v746
      %vm748 = vcmask 1040384
      %v749 = vsel %vm748, %v678, %v747
      %750 = vst [vmem:[%s260] sm:$0x3] %v749
      %v751 = vpack.c.bf16 %v610, %v610
      %v752 = vpack.c.bf16 %v611, %v611
      %v753 = vpack.c.bf16 %v612, %v612
      %v754 = vpack.c.bf16 %v613, %v613
      %v755 = vpack.c.bf16 %v614, %v614
      %v756 = vpack.c.bf16 %v615, %v615
      %v757 = vpack.c.bf16 %v616, %v616
      %v758 = vpack.c.bf16 %v617, %v617
      %v759 = vpack.c.bf16 %v618, %v618
      %v760 = vpack.c.bf16 %v619, %v619
      %v761 = vpack.c.bf16 %v620, %v620
      %v762 = vpack.c.bf16 %v621, %v621
      %v763 = vpack.c.bf16 %v622, %v622
      %v764 = vpack.c.bf16 %v623, %v623
      %v765 = vpack.c.bf16 %v624, %v624
      %v766 = vpack.c.bf16 %v625, %v625
      %v767 = vpack.c.bf16 %v626, %v626
      %v768 = vpack.c.bf16 %v627, %v627
      %v769 = vpack.c.bf16 %v628, %v628
      %v770 = vpack.c.bf16 %v629, %v629
      %v771 = vpack.c.bf16 %v630, %v630
      %v772 = vpack.c.bf16 %v631, %v631
      %v773 = vpack.c.bf16 %v632, %v632
      %v774 = vpack.c.bf16 %v633, %v633
      %v775 = vpack.c.bf16 %v634, %v634
      %v776 = vpack.c.bf16 %v635, %v635
      %v777 = vpack.c.bf16 %v636, %v636
      %v778 = vpack.c.bf16 %v637, %v637
      %v779 = vpack.c.bf16 %v638, %v638
      %v780 = vpack.c.bf16 %v639, %v639
      %v781 = vpack.c.bf16 %v640, %v640
      %v782 = vpack.c.bf16 %v641, %v641
      %783 = vst [vmem:[%s252] sm:$0xf] %v751
      %784 = vst [vmem:[%s252 + $0x4] sm:$0xf] %v752
      %785 = vst [vmem:[%s252 + $0x8] sm:$0xf] %v753
      %786 = vst [vmem:[%s252 + $0xc] sm:$0xf] %v754
      %787 = vst [vmem:[%s252 + $0x10] sm:$0xf] %v755
      %788 = vst [vmem:[%s252 + $0x14] sm:$0xf] %v756
      %789 = vst [vmem:[%s252 + $0x18] sm:$0xf] %v757
      %790 = vst [vmem:[%s252 + $0x1c] sm:$0xf] %v758
      %791 = vst [vmem:[%s252 + $0x20] sm:$0xf] %v759
      %792 = vst [vmem:[%s252 + $0x24] sm:$0xf] %v760
      %793 = vst [vmem:[%s252 + $0x28] sm:$0xf] %v761
      %794 = vst [vmem:[%s252 + $0x2c] sm:$0xf] %v762
      %795 = vst [vmem:[%s252 + $0x30] sm:$0xf] %v763
      %796 = vst [vmem:[%s252 + $0x34] sm:$0xf] %v764
      %797 = vst [vmem:[%s252 + $0x38] sm:$0xf] %v765
      %798 = vst [vmem:[%s252 + $0x3c] sm:$0xf] %v766
      %799 = vst [vmem:[%s252 + $0x40] sm:$0xf] %v767
      %800 = vst [vmem:[%s252 + $0x44] sm:$0xf] %v768
      %801 = vst [vmem:[%s252 + $0x48] sm:$0xf] %v769
      %802 = vst [vmem:[%s252 + $0x4c] sm:$0xf] %v770
      %803 = vst [vmem:[%s252 + $0x50] sm:$0xf] %v771
      %804 = vst [vmem:[%s252 + $0x54] sm:$0xf] %v772
      %805 = vst [vmem:[%s252 + $0x58] sm:$0xf] %v773
      %806 = vst [vmem:[%s252 + $0x5c] sm:$0xf] %v774
      %807 = vst [vmem:[%s252 + $0x60] sm:$0xf] %v775
      %808 = vst [vmem:[%s252 + $0x64] sm:$0xf] %v776
      %809 = vst [vmem:[%s252 + $0x68] sm:$0xf] %v777
      %810 = vst [vmem:[%s252 + $0x6c] sm:$0xf] %v778
      %811 = vst [vmem:[%s252 + $0x70] sm:$0xf] %v779
      %812 = vst [vmem:[%s252 + $0x74] sm:$0xf] %v780
      %813 = vst [vmem:[%s252 + $0x78] sm:$0xf] %v781
      %814 = vst [vmem:[%s252 + $0x7c] sm:$0xf] %v782
      %s815 = smul.u32 16, %s21
      %p816 = scmp.lt.s32.totalorder %s20, 1
      %s817 = scalar_select %p816, %s20, 1
      %p818 = scmp.lt.s32.totalorder %s815, 15
      %s819 = scalar_select %p818, %s815, 15
      %s820 = smul.addr %s819, 2
      %s821 = smul.addr %s817, 32
      %s822 = sadd.s32 %s820, %s821
      %s823 = smul.addr %s822, 4
      %s824 = scalar_lea.vmem %s3, %s823
      %p825 = scmp.lt.s32.totalorder %s20, 1
      %s826 = scalar_select %p825, %s20, 1
      %p827 = scmp.lt.s32.totalorder %s21, 0
      %s828 = scalar_select %p827, %s21, 0
      %s829 = sadd.s32 %s828, %s826
      %s830 = smul.addr %s829, 2
      %s831 = scalar_lea.vmem %s4, %s830
      // Predicated region
      $region33: #{block_forward.3} parent=31 // pred_check
        %p832 = pneg %p118
      $region34: #{block_forward.3} parent=31 // pred_check_branch
        %834 = sbr.rel (%p832) target = $region36
      $region35: #{block_forward.3} parent=31 // pred_region
        %s835 = smul.u32 16, %s21
      $region36: #{block_forward.3} parent=31 // pred_fallthru
        _
      // Predicated region
      $region37: #{block_forward.3} parent=31 // pred_check
        %p836 = pneg %p146
      $region38: #{block_forward.3} parent=31 // pred_check_branch
        %838 = sbr.rel (%p836) target = $region40
      $region39: #{block_forward.3} parent=31 // pred_region
        _
      $region40: #{block_forward.3} parent=31 // pred_fallthru
        _
    $region32: #{block_forward.3} parent=5 // pred_fallthru
      _
    %p839 = scmp.le.s32.totalorder 2, %s11
    // Predicated region
    $region41: #{block_forward.3} parent=5 // pred_check
      %p840 = pneg %p839
    $region42: #{block_forward.3} parent=5 // pred_check_branch
      %842 = sbr.rel (%p840) target = $region44
    $region43: #{block_forward.3} parent=5 // pred_region
      %s843 = ssub.s32 %s11, 2
      // Predicated region
      $region45: #{block_forward.3} parent=43 // pred_check
        %p844 = pneg %p124
      $region46: #{block_forward.3} parent=43 // pred_check_branch
        %846 = sbr.rel (%p844) target = $region48
      $region47: #{block_forward.3} parent=43 // pred_region
        %s847 = smul.u32 16, %s23
        %p848 = scmp.lt.s32.totalorder %s22, 1
        %s849 = scalar_select %p848, %s22, 1
        %p850 = scmp.lt.s32.totalorder %s847, 15
        %s851 = scalar_select %p850, %s847, 15
        %s852 = smul.addr %s851, 2
        %s853 = smul.addr %s849, 32
        %s854 = sadd.s32 %s852, %s853
        %s855 = smul.addr %s854, 4
        %s856 = scalar_lea.vmem %s3, %s855
      $region48: #{block_forward.3} parent=43 // pred_fallthru
        _
      // Predicated region
      $region49: #{block_forward.3} parent=43 // pred_check
        %p857 = pneg %p152
      $region50: #{block_forward.3} parent=43 // pred_check_branch
        %859 = sbr.rel (%p857) target = $region52
      $region51: #{block_forward.3} parent=43 // pred_region
        %p860 = scmp.lt.s32.totalorder %s22, 1
        %s861 = scalar_select %p860, %s22, 1
        %p862 = scmp.lt.s32.totalorder %s23, 0
        %s863 = scalar_select %p862, %s23, 0
        %s864 = sadd.s32 %s863, %s861
        %s865 = smul.addr %s864, 2
        %s866 = scalar_lea.vmem %s4, %s865
      $region52: #{block_forward.3} parent=43 // pred_fallthru
        _
    $region44: #{block_forward.3} parent=5 // pred_fallthru
      _
  $region6: #{block_forward.3} parent=0 // loop_footer
    %s15 = sadd.s32 1, %s11
  $region7: #{block_forward.3} parent=0 // loop_footer_branch
    %10 = sbr.rel target = $region3
  $region8: #{block_forward.3} parent=0 // loop_exit
    _

// kernel: block_forward.5
$region0: #{block_forward.5}
  #allocation0 [shape = 'u32[]', space=smem, size = 0x4, offset = 0x4, fixed_abs, tag = 'smem constant byte address 0x4 - core index']
  #allocation1 [shape = 'u32[72,128]{1,0:T(1,128)}', space=vmem, size = 0x9000, scoped, tag = 'internal scratch']
  %s0 = inlined_call_operand.vmem [shape: bf16[512,128], index: 0, kind: input, shape index: {}]
  %s1 = inlined_call_operand.vmem [shape: f32[1,128], index: 1, kind: input, shape index: {}]
  %s2 = inlined_call_operand.vmem [shape: f32[1,128], index: 2, kind: input, shape index: {}]
  %s3 = inlined_call_operand.vmem [shape: f32[512,8], index: 3, kind: output, shape index: {}]
  %s4 = sld [smem:[#allocation0]]
  $region22: #{block_forward.5} parent=0
    _
  %s6 = ssub.s32 1, %s4
  %s7 = scalar_select 0, %s6, %s4
  // Predicated region
  $region2: #{block_forward.5} parent=0 // pred_check
    _
  $region3: #{block_forward.5} parent=0 // pred_check_branch
    %9 = sbr.rel (0) target = $region5
  $region4: #{block_forward.5} parent=0 // pred_region
    _
  $region5: #{block_forward.5} parent=0 // pred_fallthru
    _
  // Predicated region
  $region6: #{block_forward.5} parent=0 // pred_check
    _
  $region7: #{block_forward.5} parent=0 // pred_check_branch
    %11 = sbr.rel (0) target = $region9
  $region8: #{block_forward.5} parent=0 // pred_region
    _
  $region9: #{block_forward.5} parent=0 // pred_fallthru
    _
  // Predicated region
  $region10: #{block_forward.5} parent=0 // pred_check
    _
  $region11: #{block_forward.5} parent=0 // pred_check_branch
    %13 = sbr.rel (0) target = $region13
  $region12: #{block_forward.5} parent=0 // pred_region
    _
  $region13: #{block_forward.5} parent=0 // pred_fallthru
    _
  %v14 = vld [vmem:[%s0] sm:$0xf]
  %v15 = vld [vmem:[%s0 + $0x4] sm:$0xf]
  %v16 = vld [vmem:[%s0 + $0x8] sm:$0xf]
  %v17 = vld [vmem:[%s0 + $0xc] sm:$0xf]
  %v18 = vld [vmem:[%s0 + $0x10] sm:$0xf]
  %v19 = vld [vmem:[%s0 + $0x14] sm:$0xf]
  %v20 = vld [vmem:[%s0 + $0x18] sm:$0xf]
  %v21 = vld [vmem:[%s0 + $0x1c] sm:$0xf]
  %v22 = vld [vmem:[%s0 + $0x20] sm:$0xf]
  %v23 = vld [vmem:[%s0 + $0x24] sm:$0xf]
  %v24 = vld [vmem:[%s0 + $0x28] sm:$0xf]
  %v25 = vld [vmem:[%s0 + $0x2c] sm:$0xf]
  %v26 = vld [vmem:[%s0 + $0x30] sm:$0xf]
  %v27 = vld [vmem:[%s0 + $0x34] sm:$0xf]
  %v28 = vld [vmem:[%s0 + $0x38] sm:$0xf]
  %v29 = vld [vmem:[%s0 + $0x3c] sm:$0xf]
  %v30 = vld [vmem:[%s0 + $0x40] sm:$0xf]
  %v31 = vld [vmem:[%s0 + $0x44] sm:$0xf]
  %v32 = vld [vmem:[%s0 + $0x48] sm:$0xf]
  %v33 = vld [vmem:[%s0 + $0x4c] sm:$0xf]
  %v34 = vld [vmem:[%s0 + $0x50] sm:$0xf]
  %v35 = vld [vmem:[%s0 + $0x54] sm:$0xf]
  %v36 = vld [vmem:[%s0 + $0x58] sm:$0xf]
  %v37 = vld [vmem:[%s0 + $0x5c] sm:$0xf]
  %v38 = vld [vmem:[%s0 + $0x60] sm:$0xf]
  %v39 = vld [vmem:[%s0 + $0x64] sm:$0xf]
  %v40 = vld [vmem:[%s0 + $0x68] sm:$0xf]
  %v41 = vld [vmem:[%s0 + $0x6c] sm:$0xf]
  %v42 = vld [vmem:[%s0 + $0x70] sm:$0xf]
  %v43 = vld [vmem:[%s0 + $0x74] sm:$0xf]
  %v44 = vld [vmem:[%s0 + $0x78] sm:$0xf]
  %v45 = vld [vmem:[%s0 + $0x7c] sm:$0xf]
  %v46 = vld [vmem:[%s0 + $0x80] sm:$0xf]
  %v47 = vld [vmem:[%s0 + $0x84] sm:$0xf]
  %v48 = vld [vmem:[%s0 + $0x88] sm:$0xf]
  %v49 = vld [vmem:[%s0 + $0x8c] sm:$0xf]
  %v50 = vld [vmem:[%s0 + $0x90] sm:$0xf]
  %v51 = vld [vmem:[%s0 + $0x94] sm:$0xf]
  %v52 = vld [vmem:[%s0 + $0x98] sm:$0xf]
  %v53 = vld [vmem:[%s0 + $0x9c] sm:$0xf]
  %v54 = vld [vmem:[%s0 + $0xa0] sm:$0xf]
  %v55 = vld [vmem:[%s0 + $0xa4] sm:$0xf]
  %v56 = vld [vmem:[%s0 + $0xa8] sm:$0xf]
  %v57 = vld [vmem:[%s0 + $0xac] sm:$0xf]
  %v58 = vld [vmem:[%s0 + $0xb0] sm:$0xf]
  %v59 = vld [vmem:[%s0 + $0xb4] sm:$0xf]
  %v60 = vld [vmem:[%s0 + $0xb8] sm:$0xf]
  %v61 = vld [vmem:[%s0 + $0xbc] sm:$0xf]
  %v62 = vld [vmem:[%s0 + $0xc0] sm:$0xf]
  %v63 = vld [vmem:[%s0 + $0xc4] sm:$0xf]
  %v64 = vld [vmem:[%s0 + $0xc8] sm:$0xf]
  %v65 = vld [vmem:[%s0 + $0xcc] sm:$0xf]
  %v66 = vld [vmem:[%s0 + $0xd0] sm:$0xf]
  %v67 = vld [vmem:[%s0 + $0xd4] sm:$0xf]
  %v68 = vld [vmem:[%s0 + $0xd8] sm:$0xf]
  %v69 = vld [vmem:[%s0 + $0xdc] sm:$0xf]
  %v70 = vld [vmem:[%s0 + $0xe0] sm:$0xf]
  %v71 = vld [vmem:[%s0 + $0xe4] sm:$0xf]
  %v72 = vld [vmem:[%s0 + $0xe8] sm:$0xf]
  %v73 = vld [vmem:[%s0 + $0xec] sm:$0xf]
  %v74 = vld [vmem:[%s0 + $0xf0] sm:$0xf]
  %v75 = vld [vmem:[%s0 + $0xf4] sm:$0xf]
  %v76 = vld [vmem:[%s0 + $0xf8] sm:$0xf]
  %v77 = vld [vmem:[%s0 + $0xfc] sm:$0xf]
  %v78 = vunpack.c.l.bf16 %v14
  %v79 = vunpack.c.l.bf16 %v15
  %v80 = vunpack.c.l.bf16 %v16
  %v81 = vunpack.c.l.bf16 %v17
  %v82 = vunpack.c.l.bf16 %v18
  %v83 = vunpack.c.l.bf16 %v19
  %v84 = vunpack.c.l.bf16 %v20
  %v85 = vunpack.c.l.bf16 %v21
  %v86 = vunpack.c.l.bf16 %v22
  %v87 = vunpack.c.l.bf16 %v23
  %v88 = vunpack.c.l.bf16 %v24
  %v89 = vunpack.c.l.bf16 %v25
  %v90 = vunpack.c.l.bf16 %v26
  %v91 = vunpack.c.l.bf16 %v27
  %v92 = vunpack.c.l.bf16 %v28
  %v93 = vunpack.c.l.bf16 %v29
  %v94 = vunpack.c.l.bf16 %v30
  %v95 = vunpack.c.l.bf16 %v31
  %v96 = vunpack.c.l.bf16 %v32
  %v97 = vunpack.c.l.bf16 %v33
  %v98 = vunpack.c.l.bf16 %v34
  %v99 = vunpack.c.l.bf16 %v35
  %v100 = vunpack.c.l.bf16 %v36
  %v101 = vunpack.c.l.bf16 %v37
  %v102 = vunpack.c.l.bf16 %v38
  %v103 = vunpack.c.l.bf16 %v39
  %v104 = vunpack.c.l.bf16 %v40
  %v105 = vunpack.c.l.bf16 %v41
  %v106 = vunpack.c.l.bf16 %v42
  %v107 = vunpack.c.l.bf16 %v43
  %v108 = vunpack.c.l.bf16 %v44
  %v109 = vunpack.c.l.bf16 %v45
  %v110 = vunpack.c.l.bf16 %v46
  %v111 = vunpack.c.l.bf16 %v47
  %v112 = vunpack.c.l.bf16 %v48
  %v113 = vunpack.c.l.bf16 %v49
  %v114 = vunpack.c.l.bf16 %v50
  %v115 = vunpack.c.l.bf16 %v51
  %v116 = vunpack.c.l.bf16 %v52
  %v117 = vunpack.c.l.bf16 %v53
  %v118 = vunpack.c.l.bf16 %v54
  %v119 = vunpack.c.l.bf16 %v55
  %v120 = vunpack.c.l.bf16 %v56
  %v121 = vunpack.c.l.bf16 %v57
  %v122 = vunpack.c.l.bf16 %v58
  %v123 = vunpack.c.l.bf16 %v59
  %v124 = vunpack.c.l.bf16 %v60
  %v125 = vunpack.c.l.bf16 %v61
  %v126 = vunpack.c.l.bf16 %v62
  %v127 = vunpack.c.l.bf16 %v63
  %v128 = vunpack.c.l.bf16 %v64
  %v129 = vunpack.c.l.bf16 %v65
  %v130 = vunpack.c.l.bf16 %v66
  %v131 = vunpack.c.l.bf16 %v67
  %v132 = vunpack.c.l.bf16 %v68
  %v133 = vunpack.c.l.bf16 %v69
  %v134 = vunpack.c.l.bf16 %v70
  %v135 = vunpack.c.l.bf16 %v71
  %v136 = vunpack.c.l.bf16 %v72
  %v137 = vunpack.c.l.bf16 %v73
  %v138 = vunpack.c.l.bf16 %v74
  %v139 = vunpack.c.l.bf16 %v75
  %v140 = vunpack.c.l.bf16 %v76
  %v141 = vunpack.c.l.bf16 %v77
  %v142 = vld [vmem:[%s1] sm:$0x1]
  %v144 = vperm.slane %v142, 0
  %v146 = vmul.f32 %v78, %v144
  %v147 = vmul.f32 %v79, %v144
  %v148 = vmul.f32 %v80, %v144
  %v149 = vmul.f32 %v81, %v144
  %v150 = vmul.f32 %v82, %v144
  %v151 = vmul.f32 %v83, %v144
  %v152 = vmul.f32 %v84, %v144
  %v153 = vmul.f32 %v85, %v144
  %v154 = vmul.f32 %v86, %v144
  %v155 = vmul.f32 %v87, %v144
  %v156 = vmul.f32 %v88, %v144
  %v157 = vmul.f32 %v89, %v144
  %v158 = vmul.f32 %v90, %v144
  %v159 = vmul.f32 %v91, %v144
  %v160 = vmul.f32 %v92, %v144
  %v161 = vmul.f32 %v93, %v144
  %v162 = vmul.f32 %v94, %v144
  %v163 = vmul.f32 %v95, %v144
  %v164 = vmul.f32 %v96, %v144
  %v165 = vmul.f32 %v97, %v144
  %v166 = vmul.f32 %v98, %v144
  %v167 = vmul.f32 %v99, %v144
  %v168 = vmul.f32 %v100, %v144
  %v169 = vmul.f32 %v101, %v144
  %v170 = vmul.f32 %v102, %v144
  %v171 = vmul.f32 %v103, %v144
  %v172 = vmul.f32 %v104, %v144
  %v173 = vmul.f32 %v105, %v144
  %v174 = vmul.f32 %v106, %v144
  %v175 = vmul.f32 %v107, %v144
  %v176 = vmul.f32 %v108, %v144
  %v177 = vmul.f32 %v109, %v144
  %v178 = vmul.f32 %v110, %v144
  %v179 = vmul.f32 %v111, %v144
  %v180 = vmul.f32 %v112, %v144
  %v181 = vmul.f32 %v113, %v144
  %v182 = vmul.f32 %v114, %v144
  %v183 = vmul.f32 %v115, %v144
  %v184 = vmul.f32 %v116, %v144
  %v185 = vmul.f32 %v117, %v144
  %v186 = vmul.f32 %v118, %v144
  %v187 = vmul.f32 %v119, %v144
  %v188 = vmul.f32 %v120, %v144
  %v189 = vmul.f32 %v121, %v144
  %v190 = vmul.f32 %v122, %v144
  %v191 = vmul.f32 %v123, %v144
  %v192 = vmul.f32 %v124, %v144
  %v193 = vmul.f32 %v125, %v144
  %v194 = vmul.f32 %v126, %v144
  %v195 = vmul.f32 %v127, %v144
  %v196 = vmul.f32 %v128, %v144
  %v197 = vmul.f32 %v129, %v144
  %v198 = vmul.f32 %v130, %v144
  %v199 = vmul.f32 %v131, %v144
  %v200 = vmul.f32 %v132, %v144
  %v201 = vmul.f32 %v133, %v144
  %v202 = vmul.f32 %v134, %v144
  %v203 = vmul.f32 %v135, %v144
  %v204 = vmul.f32 %v136, %v144
  %v205 = vmul.f32 %v137, %v144
  %v206 = vmul.f32 %v138, %v144
  %v207 = vmul.f32 %v139, %v144
  %v208 = vmul.f32 %v140, %v144
  %v209 = vmul.f32 %v141, %v144
  %v210 = vld [vmem:[%s2] sm:$0x1]
  %v212 = vperm.slane %v210, 0
  %v214 = vadd.f32 %v146, %v212
  %v215 = vadd.f32 %v147, %v212
  %v216 = vadd.f32 %v148, %v212
  %v217 = vadd.f32 %v149, %v212
  %v218 = vadd.f32 %v150, %v212
  %v219 = vadd.f32 %v151, %v212
  %v220 = vadd.f32 %v152, %v212
  %v221 = vadd.f32 %v153, %v212
  %v222 = vadd.f32 %v154, %v212
  %v223 = vadd.f32 %v155, %v212
  %v224 = vadd.f32 %v156, %v212
  %v225 = vadd.f32 %v157, %v212
  %v226 = vadd.f32 %v158, %v212
  %v227 = vadd.f32 %v159, %v212
  %v228 = vadd.f32 %v160, %v212
  %v229 = vadd.f32 %v161, %v212
  %v230 = vadd.f32 %v162, %v212
  %v231 = vadd.f32 %v163, %v212
  %v232 = vadd.f32 %v164, %v212
  %v233 = vadd.f32 %v165, %v212
  %v234 = vadd.f32 %v166, %v212
  %v235 = vadd.f32 %v167, %v212
  %v236 = vadd.f32 %v168, %v212
  %v237 = vadd.f32 %v169, %v212
  %v238 = vadd.f32 %v170, %v212
  %v239 = vadd.f32 %v171, %v212
  %v240 = vadd.f32 %v172, %v212
  %v241 = vadd.f32 %v173, %v212
  %v242 = vadd.f32 %v174, %v212
  %v243 = vadd.f32 %v175, %v212
  %v244 = vadd.f32 %v176, %v212
  %v245 = vadd.f32 %v177, %v212
  %v246 = vadd.f32 %v178, %v212
  %v247 = vadd.f32 %v179, %v212
  %v248 = vadd.f32 %v180, %v212
  %v249 = vadd.f32 %v181, %v212
  %v250 = vadd.f32 %v182, %v212
  %v251 = vadd.f32 %v183, %v212
  %v252 = vadd.f32 %v184, %v212
  %v253 = vadd.f32 %v185, %v212
  %v254 = vadd.f32 %v186, %v212
  %v255 = vadd.f32 %v187, %v212
  %v256 = vadd.f32 %v188, %v212
  %v257 = vadd.f32 %v189, %v212
  %v258 = vadd.f32 %v190, %v212
  %v259 = vadd.f32 %v191, %v212
  %v260 = vadd.f32 %v192, %v212
  %v261 = vadd.f32 %v193, %v212
  %v262 = vadd.f32 %v194, %v212
  %v263 = vadd.f32 %v195, %v212
  %v264 = vadd.f32 %v196, %v212
  %v265 = vadd.f32 %v197, %v212
  %v266 = vadd.f32 %v198, %v212
  %v267 = vadd.f32 %v199, %v212
  %v268 = vadd.f32 %v200, %v212
  %v269 = vadd.f32 %v201, %v212
  %v270 = vadd.f32 %v202, %v212
  %v271 = vadd.f32 %v203, %v212
  %v272 = vadd.f32 %v204, %v212
  %v273 = vadd.f32 %v205, %v212
  %v274 = vadd.f32 %v206, %v212
  %v275 = vadd.f32 %v207, %v212
  %v276 = vadd.f32 %v208, %v212
  %v277 = vadd.f32 %v209, %v212
  %vm278 = vcmask 64512
  %279 = vst.msk [vmem:[%s3] sm:$0xff] %vm278, %v214
  %280 = vst.msk [vmem:[%s3 + $0x8] sm:$0xff] %vm278, %v215
  %281 = vst.msk [vmem:[%s3 + $0x10] sm:$0xff] %vm278, %v216
  %282 = vst.msk [vmem:[%s3 + $0x18] sm:$0xff] %vm278, %v217
  %283 = vst.msk [vmem:[%s3 + $0x20] sm:$0xff] %vm278, %v218
  %284 = vst.msk [vmem:[%s3 + $0x28] sm:$0xff] %vm278, %v219
  %285 = vst.msk [vmem:[%s3 + $0x30] sm:$0xff] %vm278, %v220
  %286 = vst.msk [vmem:[%s3 + $0x38] sm:$0xff] %vm278, %v221
  %287 = vst.msk [vmem:[%s3 + $0x40] sm:$0xff] %vm278, %v222
  %288 = vst.msk [vmem:[%s3 + $0x48] sm:$0xff] %vm278, %v223
  %289 = vst.msk [vmem:[%s3 + $0x50] sm:$0xff] %vm278, %v224
  %290 = vst.msk [vmem:[%s3 + $0x58] sm:$0xff] %vm278, %v225
  %291 = vst.msk [vmem:[%s3 + $0x60] sm:$0xff] %vm278, %v226
  %292 = vst.msk [vmem:[%s3 + $0x68] sm:$0xff] %vm278, %v227
  %293 = vst.msk [vmem:[%s3 + $0x70] sm:$0xff] %vm278, %v228
  %294 = vst.msk [vmem:[%s3 + $0x78] sm:$0xff] %vm278, %v229
  %295 = vst.msk [vmem:[%s3 + $0x80] sm:$0xff] %vm278, %v230
  %296 = vst.msk [vmem:[%s3 + $0x88] sm:$0xff] %vm278, %v231
  %297 = vst.msk [vmem:[%s3 + $0x90] sm:$0xff] %vm278, %v232
  %298 = vst.msk [vmem:[%s3 + $0x98] sm:$0xff] %vm278, %v233
  %299 = vst.msk [vmem:[%s3 + $0xa0] sm:$0xff] %vm278, %v234
  %300 = vst.msk [vmem:[%s3 + $0xa8] sm:$0xff] %vm278, %v235
  %301 = vst.msk [vmem:[%s3 + $0xb0] sm:$0xff] %vm278, %v236
  %302 = vst.msk [vmem:[%s3 + $0xb8] sm:$0xff] %vm278, %v237
  %303 = vst.msk [vmem:[%s3 + $0xc0] sm:$0xff] %vm278, %v238
  %304 = vst.msk [vmem:[%s3 + $0xc8] sm:$0xff] %vm278, %v239
  %305 = vst.msk [vmem:[%s3 + $0xd0] sm:$0xff] %vm278, %v240
  %306 = vst.msk [vmem:[%s3 + $0xd8] sm:$0xff] %vm278, %v241
  %307 = vst.msk [vmem:[%s3 + $0xe0] sm:$0xff] %vm278, %v242
  %308 = vst.msk [vmem:[%s3 + $0xe8] sm:$0xff] %vm278, %v243
  %309 = vst.msk [vmem:[%s3 + $0xf0] sm:$0xff] %vm278, %v244
  %310 = vst.msk [vmem:[%s3 + $0xf8] sm:$0xff] %vm278, %v245
  %311 = vst.msk [vmem:[%s3 + $0x100] sm:$0xff] %vm278, %v246
  %312 = vst.msk [vmem:[%s3 + $0x108] sm:$0xff] %vm278, %v247
  %313 = vst.msk [vmem:[%s3 + $0x110] sm:$0xff] %vm278, %v248
  %314 = vst.msk [vmem:[%s3 + $0x118] sm:$0xff] %vm278, %v249
  %315 = vst.msk [vmem:[%s3 + $0x120] sm:$0xff] %vm278, %v250
  %316 = vst.msk [vmem:[%s3 + $0x128] sm:$0xff] %vm278, %v251
  %317 = vst.msk [vmem:[%s3 + $0x130] sm:$0xff] %vm278, %v252
  %318 = vst.msk [vmem:[%s3 + $0x138] sm:$0xff] %vm278, %v253
  %319 = vst.msk [vmem:[%s3 + $0x140] sm:$0xff] %vm278, %v254
  %320 = vst.msk [vmem:[%s3 + $0x148] sm:$0xff] %vm278, %v255
  %321 = vst.msk [vmem:[%s3 + $0x150] sm:$0xff] %vm278, %v256
  %322 = vst.msk [vmem:[%s3 + $0x158] sm:$0xff] %vm278, %v257
  %323 = vst.msk [vmem:[%s3 + $0x160] sm:$0xff] %vm278, %v258
  %324 = vst.msk [vmem:[%s3 + $0x168] sm:$0xff] %vm278, %v259
  %325 = vst.msk [vmem:[%s3 + $0x170] sm:$0xff] %vm278, %v260
  %326 = vst.msk [vmem:[%s3 + $0x178] sm:$0xff] %vm278, %v261
  %327 = vst.msk [vmem:[%s3 + $0x180] sm:$0xff] %vm278, %v262
  %328 = vst.msk [vmem:[%s3 + $0x188] sm:$0xff] %vm278, %v263
  %329 = vst.msk [vmem:[%s3 + $0x190] sm:$0xff] %vm278, %v264
  %330 = vst.msk [vmem:[%s3 + $0x198] sm:$0xff] %vm278, %v265
  %331 = vst.msk [vmem:[%s3 + $0x1a0] sm:$0xff] %vm278, %v266
  %332 = vst.msk [vmem:[%s3 + $0x1a8] sm:$0xff] %vm278, %v267
  %333 = vst.msk [vmem:[%s3 + $0x1b0] sm:$0xff] %vm278, %v268
  %334 = vst.msk [vmem:[%s3 + $0x1b8] sm:$0xff] %vm278, %v269
  %335 = vst.msk [vmem:[%s3 + $0x1c0] sm:$0xff] %vm278, %v270
  %336 = vst.msk [vmem:[%s3 + $0x1c8] sm:$0xff] %vm278, %v271
  %337 = vst.msk [vmem:[%s3 + $0x1d0] sm:$0xff] %vm278, %v272
  %338 = vst.msk [vmem:[%s3 + $0x1d8] sm:$0xff] %vm278, %v273
  %339 = vst.msk [vmem:[%s3 + $0x1e0] sm:$0xff] %vm278, %v274
  %340 = vst.msk [vmem:[%s3 + $0x1e8] sm:$0xff] %vm278, %v275
  %341 = vst.msk [vmem:[%s3 + $0x1f0] sm:$0xff] %vm278, %v276
  %342 = vst.msk [vmem:[%s3 + $0x1f8] sm:$0xff] %vm278, %v277
  // Predicated region
  $region14: #{block_forward.5} parent=0 // pred_check
    _
  $region15: #{block_forward.5} parent=0 // pred_check_branch
    %344 = sbr.rel (0) target = $region17
  $region16: #{block_forward.5} parent=0 // pred_region
    _
  $region17: #{block_forward.5} parent=0 // pred_fallthru
    _
  // Predicated region
  $region18: #{block_forward.5} parent=0 // pred_check
    _
  $region19: #{block_forward.5} parent=0 // pred_check_branch
    %346 = sbr.rel (0) target = $region21
  $region20: #{block_forward.5} parent=0 // pred_region
    _
  $region21: #{block_forward.5} parent=0 // pred_fallthru
    _

// kernel: block_forward.4
$region0: #{block_forward.4}
  #allocation0 [shape = 'u32[]', space=smem, size = 0x4, offset = 0x4, fixed_abs, tag = 'smem constant byte address 0x4 - core index']
  #allocation1 [shape = 'u32[72,128]{1,0:T(1,128)}', space=vmem, size = 0x9000, scoped, tag = 'internal scratch']
  %s0 = inlined_call_operand.vmem [shape: bf16[2,16,16,128], index: 0, kind: input, shape index: {}]
  %s1 = inlined_call_operand.vmem [shape: bf16[9,128,128], index: 1, kind: input, shape index: {}]
  %s2 = inlined_call_operand.vmem [shape: f32[1,128], index: 2, kind: input, shape index: {}]
  %s3 = inlined_call_operand.vmem [shape: f32[1,128], index: 3, kind: input, shape index: {}]
  %s4 = inlined_call_operand.vmem [shape: f32[1,128], index: 4, kind: input, shape index: {}]
  %s5 = inlined_call_operand.vmem [shape: bf16[2,16,16,128], index: 5, kind: output, shape index: {0}]
  %s6 = inlined_call_operand.vmem [shape: f32[2,1,2,128], index: 6, kind: output, shape index: {1}]
  %7 = xla_tuple %s5, %s6
  %s8 = sld [smem:[#allocation0]]
  $region61: #{block_forward.4} parent=0
    _
  %s10 = ssub.s32 1, %s8
  %s11 = scalar_select 0, %s10, %s8
  loop: start=0, step=1, limit=4
  $region2: #{block_forward.4} parent=0 // loop_pre_header
    _
  $region3: #{block_forward.4} parent=0 // loop_header
    %s13 = sphi 0, %s17
    %p14 = scmp.ge.s32.totalorder %s13, 4
    %s20 = sphi 0, %s32
    %s21 = sphi 0, %s28
    %s22 = sphi 0, %s20
    %s23 = sphi 0, %s21
    %s24 = sphi 0, %s22
    %s25 = sphi 0, %s23
    %s35 = sphi 0, %s37
    %s38 = sphi 0, %s35
    %s39 = sphi 0, %s38
    %s55 = sphi 0, %s39
    %s59 = sphi 0, %s59
    %s61 = sphi 0, %s59
    %s62 = sphi 0, %s61
    %s76 = sphi 0, %s62
    %s80 = sphi 0, %s80
    %s82 = sphi 0, %s80
    %s83 = sphi 0, %s82
    %s97 = sphi 0, %s83
    %s101 = sphi 0, %s101
    %s103 = sphi 0, %s101
    %s104 = sphi 0, %s103
    %s118 = sphi 0, %s104
    %s122 = sphi 0, %s122
    %s124 = sphi 0, %s122
    %s125 = sphi 0, %s124
    %s139 = sphi 0, %s125
    %s147 = sphi 0, %s149
    %s150 = sphi 0, %s147
    %s151 = sphi 0, %s150
    %s167 = sphi 0, %s151
    %s175 = sphi 0, %s177
    %s178 = sphi 0, %s175
    %s179 = sphi 0, %s178
    %s195 = sphi 0, %s179
  $region4: #{block_forward.4} parent=0 // loop_header_branch
    %16 = sbr.rel (%p14) target = $region8
  $region5: #{block_forward.4} parent=0 // loop_body
    %s18 = ssub.s32 %s13, 1
    %s19 = ssub.s32 %s13, 2
    %s26 = sadd.s32 1, %s21
    %p27 = scmp.ge.s32.totalorder %s26, 1
    %s28 = scalar_select %p27, 0, %s26
    %s29 = sadd.s32 1, %s20
    %s30 = scalar_select %p27, %s29, %s20
    %p31 = scmp.ge.s32.totalorder %s30, 2
    %s32 = scalar_select %p31, 0, %s30
    %s33 = ssub.s32 %s20, %s32
    %p34 = scmp.eq.s32.totalorder %s33, 0
    %s36 = sadd.s32 %s35, 1
    %s37 = scalar_select %p34, %s35, %s36
    %p40 = pneg %p34
    %p41 = scmp.eq.s32.totalorder %s13, 1
    %p42 = por %p40, %p41
    %p43 = scmp.ne.s32.totalorder %s35, %s38
    %p44 = scmp.eq.s32.totalorder %s13, 0
    %p45 = por %p43, %p44
    %p46 = scmp.ne.s32.totalorder %s35, %s38
    %p47 = scmp.eq.s32.totalorder %s18, 1
    %p48 = por %p46, %p47
    %p49 = scmp.ne.s32.totalorder %s38, %s39
    %p50 = scmp.eq.s32.totalorder %s18, 0
    %p51 = por %p49, %p50
    %p52 = scmp.ne.s32.totalorder %s38, %s39
    %p53 = scmp.eq.s32.totalorder %s19, 1
    %p54 = por %p52, %p53
    %p56 = scmp.ne.s32.totalorder %s39, %s55
    %p57 = scmp.eq.s32.totalorder %s19, 0
    %p58 = por %p56, %p57
    %s60 = sadd.s32 %s59, 1
    %p63 = scmp.eq.s32.totalorder %s13, 1
    %p64 = scmp.ne.s32.totalorder %s59, %s61
    %p65 = scmp.eq.s32.totalorder %s13, 0
    %p66 = por %p64, %p65
    %p67 = scmp.ne.s32.totalorder %s59, %s61
    %p68 = scmp.eq.s32.totalorder %s18, 1
    %p69 = por %p67, %p68
    %p70 = scmp.ne.s32.totalorder %s61, %s62
    %p71 = scmp.eq.s32.totalorder %s18, 0
    %p72 = por %p70, %p71
    %p73 = scmp.ne.s32.totalorder %s61, %s62
    %p74 = scmp.eq.s32.totalorder %s19, 1
    %p75 = por %p73, %p74
    %p77 = scmp.ne.s32.totalorder %s62, %s76
    %p78 = scmp.eq.s32.totalorder %s19, 0
    %p79 = por %p77, %p78
    %s81 = sadd.s32 %s80, 1
    %p84 = scmp.eq.s32.totalorder %s13, 1
    %p85 = scmp.ne.s32.totalorder %s80, %s82
    %p86 = scmp.eq.s32.totalorder %s13, 0
    %p87 = por %p85, %p86
    %p88 = scmp.ne.s32.totalorder %s80, %s82
    %p89 = scmp.eq.s32.totalorder %s18, 1
    %p90 = por %p88, %p89
    %p91 = scmp.ne.s32.totalorder %s82, %s83
    %p92 = scmp.eq.s32.totalorder %s18, 0
    %p93 = por %p91, %p92
    %p94 = scmp.ne.s32.totalorder %s82, %s83
    %p95 = scmp.eq.s32.totalorder %s19, 1
    %p96 = por %p94, %p95
    %p98 = scmp.ne.s32.totalorder %s83, %s97
    %p99 = scmp.eq.s32.totalorder %s19, 0
    %p100 = por %p98, %p99
    %s102 = sadd.s32 %s101, 1
    %p105 = scmp.eq.s32.totalorder %s13, 1
    %p106 = scmp.ne.s32.totalorder %s101, %s103
    %p107 = scmp.eq.s32.totalorder %s13, 0
    %p108 = por %p106, %p107
    %p109 = scmp.ne.s32.totalorder %s101, %s103
    %p110 = scmp.eq.s32.totalorder %s18, 1
    %p111 = por %p109, %p110
    %p112 = scmp.ne.s32.totalorder %s103, %s104
    %p113 = scmp.eq.s32.totalorder %s18, 0
    %p114 = por %p112, %p113
    %p115 = scmp.ne.s32.totalorder %s103, %s104
    %p116 = scmp.eq.s32.totalorder %s19, 1
    %p117 = por %p115, %p116
    %p119 = scmp.ne.s32.totalorder %s104, %s118
    %p120 = scmp.eq.s32.totalorder %s19, 0
    %p121 = por %p119, %p120
    %s123 = sadd.s32 %s122, 1
    %p126 = scmp.eq.s32.totalorder %s13, 1
    %p127 = scmp.ne.s32.totalorder %s122, %s124
    %p128 = scmp.eq.s32.totalorder %s13, 0
    %p129 = por %p127, %p128
    %p130 = scmp.ne.s32.totalorder %s122, %s124
    %p131 = scmp.eq.s32.totalorder %s18, 1
    %p132 = por %p130, %p131
    %p133 = scmp.ne.s32.totalorder %s124, %s125
    %p134 = scmp.eq.s32.totalorder %s18, 0
    %p135 = por %p133, %p134
    %p136 = scmp.ne.s32.totalorder %s124, %s125
    %p137 = scmp.eq.s32.totalorder %s19, 1
    %p138 = por %p136, %p137
    %p140 = scmp.ne.s32.totalorder %s125, %s139
    %p141 = scmp.eq.s32.totalorder %s19, 0
    %p142 = por %p140, %p141
    %s143 = ssub.s32 %s20, %s32
    %s144 = ssub.s32 %s21, %s28
    %s145 = sor.u32 %s143, %s144
    %p146 = scmp.eq.s32.totalorder %s145, 0
    %s148 = sadd.s32 %s147, 1
    %s149 = scalar_select %p146, %s147, %s148
    %p152 = pneg %p146
    %p153 = scmp.eq.s32.totalorder %s13, 1
    %p154 = por %p152, %p153
    %p155 = scmp.ne.s32.totalorder %s147, %s150
    %p156 = scmp.eq.s32.totalorder %s13, 0
    %p157 = por %p155, %p156
    %p158 = scmp.ne.s32.totalorder %s147, %s150
    %p159 = scmp.eq.s32.totalorder %s18, 1
    %p160 = por %p158, %p159
    %p161 = scmp.ne.s32.totalorder %s150, %s151
    %p162 = scmp.eq.s32.totalorder %s18, 0
    %p163 = por %p161, %p162
    %p164 = scmp.ne.s32.totalorder %s150, %s151
    %p165 = scmp.eq.s32.totalorder %s19, 1
    %p166 = por %p164, %p165
    %p168 = scmp.ne.s32.totalorder %s151, %s167
    %p169 = scmp.eq.s32.totalorder %s19, 0
    %p170 = por %p168, %p169
    %s171 = ssub.s32 %s20, %s32
    %s172 = ssub.s32 %s21, %s28
    %s173 = sor.u32 %s171, %s172
    %p174 = scmp.eq.s32.totalorder %s173, 0
    %s176 = sadd.s32 %s175, 1
    %s177 = scalar_select %p174, %s175, %s176
    %p180 = pneg %p174
    %p181 = scmp.eq.s32.totalorder %s13, 1
    %p182 = por %p180, %p181
    %p183 = scmp.ne.s32.totalorder %s175, %s178
    %p184 = scmp.eq.s32.totalorder %s13, 0
    %p185 = por %p183, %p184
    %p186 = scmp.ne.s32.totalorder %s175, %s178
    %p187 = scmp.eq.s32.totalorder %s18, 1
    %p188 = por %p186, %p187
    %p189 = scmp.ne.s32.totalorder %s178, %s179
    %p190 = scmp.eq.s32.totalorder %s18, 0
    %p191 = por %p189, %p190
    %p192 = scmp.ne.s32.totalorder %s178, %s179
    %p193 = scmp.eq.s32.totalorder %s19, 1
    %p194 = por %p192, %p193
    %p196 = scmp.ne.s32.totalorder %s179, %s195
    %p197 = scmp.eq.s32.totalorder %s19, 0
    %p198 = por %p196, %p197
    %p199 = scmp.le.s32.totalorder 1, %s13
    %p200 = scmp.lt.s32.totalorder %s13, 3
    %p201 = pnand %p199, %p200
    %p202 = pneg %p201
    // Predicated region
    $region9: #{block_forward.4} parent=5 // pred_check
      _
    $region10: #{block_forward.4} parent=5 // pred_check_branch
      %204 = sbr.rel (%p201) target = $region12
    $region11: #{block_forward.4} parent=5 // pred_region
      %s205 = ssub.s32 %s13, 1
      // Predicated region
      $region13: #{block_forward.4} parent=11 // pred_check
        %p206 = pneg %p72
      $region14: #{block_forward.4} parent=11 // pred_check_branch
        %208 = sbr.rel (%p206) target = $region16
      $region15: #{block_forward.4} parent=11 // pred_region
        _
      $region16: #{block_forward.4} parent=11 // pred_fallthru
        _
      // Predicated region
      $region17: #{block_forward.4} parent=11 // pred_check
        %p209 = pneg %p93
      $region18: #{block_forward.4} parent=11 // pred_check_branch
        %211 = sbr.rel (%p209) target = $region20
      $region19: #{block_forward.4} parent=11 // pred_region
        _
      $region20: #{block_forward.4} parent=11 // pred_fallthru
        _
      // Predicated region
      $region21: #{block_forward.4} parent=11 // pred_check
        %p212 = pneg %p114
      $region22: #{block_forward.4} parent=11 // pred_check_branch
        %214 = sbr.rel (%p212) target = $region24
      $region23: #{block_forward.4} parent=11 // pred_region
        _
      $region24: #{block_forward.4} parent=11 // pred_fallthru
        _
      // Predicated region
      $region25: #{block_forward.4} parent=11 // pred_check
        %p215 = pneg %p135
      $region26: #{block_forward.4} parent=11 // pred_check_branch
        %217 = sbr.rel (%p215) target = $region28
      $region27: #{block_forward.4} parent=11 // pred_region
        _
      $region28: #{block_forward.4} parent=11 // pred_fallthru
        _
    $region12: #{block_forward.4} parent=5 // pred_fallthru
      _
    %p218 = scmp.lt.s32.totalorder %s13, 2
    // Predicated region
    $region29: #{block_forward.4} parent=5 // pred_check
      %p219 = pneg %p218
    $region30: #{block_forward.4} parent=5 // pred_check_branch
      %221 = sbr.rel (%p219) target = $region32
    $region31: #{block_forward.4} parent=5 // pred_region
      // Predicated region
      $region33: #{block_forward.4} parent=31 // pred_check
        %p222 = pneg %p45
      $region34: #{block_forward.4} parent=31 // pred_check_branch
        %224 = sbr.rel (%p222) target = $region36
      $region35: #{block_forward.4} parent=31 // pred_region
        %p225 = scmp.lt.s32.totalorder %s20, 1
        %s226 = scalar_select %p225, %s20, 1
        %s227 = smul.addr %s226, 32
        %s228 = smul.addr %s227, 4
        %s229 = scalar_lea.vmem %s0, %s228
      $region36: #{block_forward.4} parent=31 // pred_fallthru
        _
    $region32: #{block_forward.4} parent=5 // pred_fallthru
      _
    %p230 = scmp.le.s32.totalorder 1, %s13
    %p231 = scmp.lt.s32.totalorder %s13, 3
    %p232 = pnand %p230, %p231
    %p233 = pneg %p232
    // Predicated region
    $region37: #{block_forward.4} parent=5 // pred_check
      _
    $region38: #{block_forward.4} parent=5 // pred_check_branch
      %235 = sbr.rel (%p232) target = $region40
    $region39: #{block_forward.4} parent=5 // pred_region
      %s236 = ssub.s32 %s13, 1
      %p237 = scmp.lt.s32.totalorder %s22, 1
      %s238 = scalar_select %p237, %s22, 1
      %s239 = smul.addr %s238, 32
      %s240 = smul.addr %s239, 4
      %s241 = scalar_lea.vmem %s0, %s240
      %p242 = pneg %p51
      %p243 = pneg %p48
      %p244 = pneg %p72
      %p245 = pneg %p69
      %p246 = pneg %p93
      %p247 = pneg %p90
      %p248 = pneg %p114
      %p249 = pneg %p111
      %p250 = pneg %p135
      %p251 = pneg %p132
      %p252 = pneg %p163
      %p253 = pneg %p160
      %s254 = smul.u32 16, %s23
      %p255 = scmp.lt.s32.totalorder %s22, 1
      %s256 = scalar_select %p255, %s22, 1
      %p257 = scmp.lt.s32.totalorder %s254, 15
      %s258 = scalar_select %p257, %s254, 15
      %s259 = smul.addr %s258, 2
      %s260 = smul.addr %s256, 32
      %s261 = sadd.s32 %s259, %s260
      %s262 = smul.addr %s261, 4
      %s263 = scalar_lea.vmem %s5, %s262
      %p264 = pneg %p191
      %p265 = pneg %p188
      %p266 = scmp.lt.s32.totalorder %s22, 1
      %s267 = scalar_select %p266, %s22, 1
      %p268 = scmp.lt.s32.totalorder %s23, 0
      %s269 = scalar_select %p268, %s23, 0
      %s270 = sadd.s32 %s269, %s267
      %s271 = smul.addr %s270, 2
      %s272 = scalar_lea.vmem %s6, %s271
      %p273 = scmp.lt.s32.totalorder %s22, 1
      %s274 = scalar_select %p273, %s22, 1
      %s275 = smul.addr %s274, 32
      %s276 = smul.addr %s275, 4
      %s277 = scalar_lea.vmem %s0, %s276
      %s278 = smul.u32 16, %s23
      %p279 = scmp.lt.s32.totalorder %s22, 1
      %s280 = scalar_select %p279, %s22, 1
      %p281 = scmp.lt.s32.totalorder %s278, 15
      %s282 = scalar_select %p281, %s278, 15
      %s283 = smul.addr %s282, 2
      %s284 = smul.addr %s280, 32
      %s285 = sadd.s32 %s283, %s284
      %s286 = smul.addr %s285, 4
      %s287 = scalar_lea.vmem %s5, %s286
      %s288 = smul.u32 16, %s23
      %p289 = scmp.lt.s32.totalorder %s22, 1
      %s290 = scalar_select %p289, %s22, 1
      %p291 = scmp.lt.s32.totalorder %s23, 0
      %s292 = scalar_select %p291, %s23, 0
      %s293 = sadd.s32 %s292, %s290
      %s294 = smul.addr %s293, 2
      %s295 = scalar_lea.vmem %s6, %s294
      %s296 = smul.u32 %s23, 16
      %p297 = scmp.eq.s32.totalorder %s296, 0
      %s298 = ssub.s32 %s296, 1
      %s299 = scalar_select %p297, 1, %s298
      %s300 = sadd.s32 %s296, 16
      %p301 = scmp.ge.s32.totalorder %s300, 16
      %s302 = scalar_select %p301, 14, %s300
      %s303 = smul.u32 %s299, 2
      %s304 = smul.addr %s303, 4
      %s305 = scalar_lea.vmem %s277, %s304
      %v306 = vld [vmem:[%s305] sm:$0xf]
      %v307 = vld [vmem:[%s305 + $0x4] sm:$0xf]
      %s308 = smul.u32 %s296, 2
      %s309 = smul.addr %s308, 4
      %s310 = scalar_lea.vmem %s277, %s309
      %v311 = vld [vmem:[%s310] sm:$0xf]
      %v312 = vld [vmem:[%s310 + $0x4] sm:$0xf]
      %v313 = vld [vmem:[%s310 + $0x8] sm:$0xf]
      %v314 = vld [vmem:[%s310 + $0xc] sm:$0xf]
      %v315 = vld [vmem:[%s310 + $0x10] sm:$0xf]
      %v316 = vld [vmem:[%s310 + $0x14] sm:$0xf]
      %v317 = vld [vmem:[%s310 + $0x18] sm:$0xf]
      %v318 = vld [vmem:[%s310 + $0x1c] sm:$0xf]
      %v319 = vld [vmem:[%s310 + $0x20] sm:$0xf]
      %v320 = vld [vmem:[%s310 + $0x24] sm:$0xf]
      %v321 = vld [vmem:[%s310 + $0x28] sm:$0xf]
      %v322 = vld [vmem:[%s310 + $0x2c] sm:$0xf]
      %v323 = vld [vmem:[%s310 + $0x30] sm:$0xf]
      %v324 = vld [vmem:[%s310 + $0x34] sm:$0xf]
      %v325 = vld [vmem:[%s310 + $0x38] sm:$0xf]
      %v326 = vld [vmem:[%s310 + $0x3c] sm:$0xf]
      %v327 = vld [vmem:[%s310 + $0x40] sm:$0xf]
      %v328 = vld [vmem:[%s310 + $0x44] sm:$0xf]
      %v329 = vld [vmem:[%s310 + $0x48] sm:$0xf]
      %v330 = vld [vmem:[%s310 + $0x4c] sm:$0xf]
      %v331 = vld [vmem:[%s310 + $0x50] sm:$0xf]
      %v332 = vld [vmem:[%s310 + $0x54] sm:$0xf]
      %v333 = vld [vmem:[%s310 + $0x58] sm:$0xf]
      %v334 = vld [vmem:[%s310 + $0x5c] sm:$0xf]
      %v335 = vld [vmem:[%s310 + $0x60] sm:$0xf]
      %v336 = vld [vmem:[%s310 + $0x64] sm:$0xf]
      %v337 = vld [vmem:[%s310 + $0x68] sm:$0xf]
      %v338 = vld [vmem:[%s310 + $0x6c] sm:$0xf]
      %v339 = vld [vmem:[%s310 + $0x70] sm:$0xf]
      %v340 = vld [vmem:[%s310 + $0x74] sm:$0xf]
      %v341 = vld [vmem:[%s310 + $0x78] sm:$0xf]
      %v342 = vld [vmem:[%s310 + $0x7c] sm:$0xf]
      %s343 = smul.u32 %s302, 2
      %s344 = smul.addr %s343, 4
      %s345 = scalar_lea.vmem %s277, %s344
      %v346 = vld [vmem:[%s345] sm:$0xf]
      %v347 = vld [vmem:[%s345 + $0x4] sm:$0xf]
      %v348 = vld [vmem:[%s3] sm:$0x1]
      %v349 = vpack.c.bf16 %v348, %v348
      %v350 = vld [vmem:[%s4] sm:$0x1]
      %v351 = vpack.c.bf16 %v350, %v350
      %v353 = vpack.i.b16 %v349, %v349
      %v355 = vperm.slane %v353, 0
      %v356 = vunpack.c.l.bf16 %v306
      %v357 = vunpack.c.l.bf16 %v307
      %v358 = vunpack.c.l.bf16 %v311
      %v359 = vunpack.c.l.bf16 %v312
      %v360 = vunpack.c.l.bf16 %v313
      %v361 = vunpack.c.l.bf16 %v314
      %v362 = vunpack.c.l.bf16 %v315
      %v363 = vunpack.c.l.bf16 %v316
      %v364 = vunpack.c.l.bf16 %v317
      %v365 = vunpack.c.l.bf16 %v318
      %v366 = vunpack.c.l.bf16 %v319
      %v367 = vunpack.c.l.bf16 %v320
      %v368 = vunpack.c.l.bf16 %v321
      %v369 = vunpack.c.l.bf16 %v322
      %v370 = vunpack.c.l.bf16 %v323
      %v371 = vunpack.c.l.bf16 %v324
      %v372 = vunpack.c.l.bf16 %v325
      %v373 = vunpack.c.l.bf16 %v326
      %v374 = vunpack.c.l.bf16 %v327
      %v375 = vunpack.c.l.bf16 %v328
      %v376 = vunpack.c.l.bf16 %v329
      %v377 = vunpack.c.l.bf16 %v330
      %v378 = vunpack.c.l.bf16 %v331
      %v379 = vunpack.c.l.bf16 %v332
      %v380 = vunpack.c.l.bf16 %v333
      %v381 = vunpack.c.l.bf16 %v334
      %v382 = vunpack.c.l.bf16 %v335
      %v383 = vunpack.c.l.bf16 %v336
      %v384 = vunpack.c.l.bf16 %v337
      %v385 = vunpack.c.l.bf16 %v338
      %v386 = vunpack.c.l.bf16 %v339
      %v387 = vunpack.c.l.bf16 %v340
      %v388 = vunpack.c.l.bf16 %v341
      %v389 = vunpack.c.l.bf16 %v342
      %v390 = vunpack.c.l.bf16 %v346
      %v391 = vunpack.c.l.bf16 %v347
      %v392 = vunpack.c.l.bf16 %v355
      %v393 = vmul.f32 %v356, %v392
      %v394 = vmul.f32 %v357, %v392
      %v395 = vmul.f32 %v358, %v392
      %v396 = vmul.f32 %v359, %v392
      %v397 = vmul.f32 %v360, %v392
      %v398 = vmul.f32 %v361, %v392
      %v399 = vmul.f32 %v362, %v392
      %v400 = vmul.f32 %v363, %v392
      %v401 = vmul.f32 %v364, %v392
      %v402 = vmul.f32 %v365, %v392
      %v403 = vmul.f32 %v366, %v392
      %v404 = vmul.f32 %v367, %v392
      %v405 = vmul.f32 %v368, %v392
      %v406 = vmul.f32 %v369, %v392
      %v407 = vmul.f32 %v370, %v392
      %v408 = vmul.f32 %v371, %v392
      %v409 = vmul.f32 %v372, %v392
      %v410 = vmul.f32 %v373, %v392
      %v411 = vmul.f32 %v374, %v392
      %v412 = vmul.f32 %v375, %v392
      %v413 = vmul.f32 %v376, %v392
      %v414 = vmul.f32 %v377, %v392
      %v415 = vmul.f32 %v378, %v392
      %v416 = vmul.f32 %v379, %v392
      %v417 = vmul.f32 %v380, %v392
      %v418 = vmul.f32 %v381, %v392
      %v419 = vmul.f32 %v382, %v392
      %v420 = vmul.f32 %v383, %v392
      %v421 = vmul.f32 %v384, %v392
      %v422 = vmul.f32 %v385, %v392
      %v423 = vmul.f32 %v386, %v392
      %v424 = vmul.f32 %v387, %v392
      %v425 = vmul.f32 %v388, %v392
      %v426 = vmul.f32 %v389, %v392
      %v427 = vmul.f32 %v390, %v392
      %v428 = vmul.f32 %v391, %v392
      %v429 = vpack.c.bf16 %v393, %v393
      %v430 = vpack.c.bf16 %v394, %v394
      %v431 = vpack.c.bf16 %v395, %v395
      %v432 = vpack.c.bf16 %v396, %v396
      %v433 = vpack.c.bf16 %v397, %v397
      %v434 = vpack.c.bf16 %v398, %v398
      %v435 = vpack.c.bf16 %v399, %v399
      %v436 = vpack.c.bf16 %v400, %v400
      %v437 = vpack.c.bf16 %v401, %v401
      %v438 = vpack.c.bf16 %v402, %v402
      %v439 = vpack.c.bf16 %v403, %v403
      %v440 = vpack.c.bf16 %v404, %v404
      %v441 = vpack.c.bf16 %v405, %v405
      %v442 = vpack.c.bf16 %v406, %v406
      %v443 = vpack.c.bf16 %v407, %v407
      %v444 = vpack.c.bf16 %v408, %v408
      %v445 = vpack.c.bf16 %v409, %v409
      %v446 = vpack.c.bf16 %v410, %v410
      %v447 = vpack.c.bf16 %v411, %v411
      %v448 = vpack.c.bf16 %v412, %v412
      %v449 = vpack.c.bf16 %v413, %v413
      %v450 = vpack.c.bf16 %v414, %v414
      %v451 = vpack.c.bf16 %v415, %v415
      %v452 = vpack.c.bf16 %v416, %v416
      %v453 = vpack.c.bf16 %v417, %v417
      %v454 = vpack.c.bf16 %v418, %v418
      %v455 = vpack.c.bf16 %v419, %v419
      %v456 = vpack.c.bf16 %v420, %v420
      %v457 = vpack.c.bf16 %v421, %v421
      %v458 = vpack.c.bf16 %v422, %v422
      %v459 = vpack.c.bf16 %v423, %v423
      %v460 = vpack.c.bf16 %v424, %v424
      %v461 = vpack.c.bf16 %v425, %v425
      %v462 = vpack.c.bf16 %v426, %v426
      %v463 = vpack.c.bf16 %v427, %v427
      %v464 = vpack.c.bf16 %v428, %v428
      %v466 = vpack.i.b16 %v351, %v351
      %v468 = vperm.slane %v466, 0
      %v469 = vunpack.c.l.bf16 %v429
      %v470 = vunpack.c.l.bf16 %v430
      %v471 = vunpack.c.l.bf16 %v431
      %v472 = vunpack.c.l.bf16 %v432
      %v473 = vunpack.c.l.bf16 %v433
      %v474 = vunpack.c.l.bf16 %v434
      %v475 = vunpack.c.l.bf16 %v435
      %v476 = vunpack.c.l.bf16 %v436
      %v477 = vunpack.c.l.bf16 %v437
      %v478 = vunpack.c.l.bf16 %v438
      %v479 = vunpack.c.l.bf16 %v439
      %v480 = vunpack.c.l.bf16 %v440
      %v481 = vunpack.c.l.bf16 %v441
      %v482 = vunpack.c.l.bf16 %v442
      %v483 = vunpack.c.l.bf16 %v443
      %v484 = vunpack.c.l.bf16 %v444
      %v485 = vunpack.c.l.bf16 %v445
      %v486 = vunpack.c.l.bf16 %v446
      %v487 = vunpack.c.l.bf16 %v447
      %v488 = vunpack.c.l.bf16 %v448
      %v489 = vunpack.c.l.bf16 %v449
      %v490 = vunpack.c.l.bf16 %v450
      %v491 = vunpack.c.l.bf16 %v451
      %v492 = vunpack.c.l.bf16 %v452
      %v493 = vunpack.c.l.bf16 %v453
      %v494 = vunpack.c.l.bf16 %v454
      %v495 = vunpack.c.l.bf16 %v455
      %v496 = vunpack.c.l.bf16 %v456
      %v497 = vunpack.c.l.bf16 %v457
      %v498 = vunpack.c.l.bf16 %v458
      %v499 = vunpack.c.l.bf16 %v459
      %v500 = vunpack.c.l.bf16 %v460
      %v501 = vunpack.c.l.bf16 %v461
      %v502 = vunpack.c.l.bf16 %v462
      %v503 = vunpack.c.l.bf16 %v463
      %v504 = vunpack.c.l.bf16 %v464
      %v505 = vunpack.c.l.bf16 %v468
      %v506 = vadd.f32 %v469, %v505
      %v507 = vadd.f32 %v470, %v505
      %v508 = vadd.f32 %v471, %v505
      %v509 = vadd.f32 %v472, %v505
      %v510 = vadd.f32 %v473, %v505
      %v511 = vadd.f32 %v474, %v505
      %v512 = vadd.f32 %v475, %v505
      %v513 = vadd.f32 %v476, %v505
      %v514 = vadd.f32 %v477, %v505
      %v515 = vadd.f32 %v478, %v505
      %v516 = vadd.f32 %v479, %v505
      %v517 = vadd.f32 %v480, %v505
      %v518 = vadd.f32 %v481, %v505
      %v519 = vadd.f32 %v482, %v505
      %v520 = vadd.f32 %v483, %v505
      %v521 = vadd.f32 %v484, %v505
      %v522 = vadd.f32 %v485, %v505
      %v523 = vadd.f32 %v486, %v505
      %v524 = vadd.f32 %v487, %v505
      %v525 = vadd.f32 %v488, %v505
      %v526 = vadd.f32 %v489, %v505
      %v527 = vadd.f32 %v490, %v505
      %v528 = vadd.f32 %v491, %v505
      %v529 = vadd.f32 %v492, %v505
      %v530 = vadd.f32 %v493, %v505
      %v531 = vadd.f32 %v494, %v505
      %v532 = vadd.f32 %v495, %v505
      %v533 = vadd.f32 %v496, %v505
      %v534 = vadd.f32 %v497, %v505
      %v535 = vadd.f32 %v498, %v505
      %v536 = vadd.f32 %v499, %v505
      %v537 = vadd.f32 %v500, %v505
      %v538 = vadd.f32 %v501, %v505
      %v539 = vadd.f32 %v502, %v505
      %v540 = vadd.f32 %v503, %v505
      %v541 = vadd.f32 %v504, %v505
      %v542 = vpack.c.bf16 %v506, %v506
      %v543 = vpack.c.bf16 %v507, %v507
      %v544 = vpack.c.bf16 %v508, %v508
      %v545 = vpack.c.bf16 %v509, %v509
      %v546 = vpack.c.bf16 %v510, %v510
      %v547 = vpack.c.bf16 %v511, %v511
      %v548 = vpack.c.bf16 %v512, %v512
      %v549 = vpack.c.bf16 %v513, %v513
      %v550 = vpack.c.bf16 %v514, %v514
      %v551 = vpack.c.bf16 %v515, %v515
      %v552 = vpack.c.bf16 %v516, %v516
      %v553 = vpack.c.bf16 %v517, %v517
      %v554 = vpack.c.bf16 %v518, %v518
      %v555 = vpack.c.bf16 %v519, %v519
      %v556 = vpack.c.bf16 %v520, %v520
      %v557 = vpack.c.bf16 %v521, %v521
      %v558 = vpack.c.bf16 %v522, %v522
      %v559 = vpack.c.bf16 %v523, %v523
      %v560 = vpack.c.bf16 %v524, %v524
      %v561 = vpack.c.bf16 %v525, %v525
      %v562 = vpack.c.bf16 %v526, %v526
      %v563 = vpack.c.bf16 %v527, %v527
      %v564 = vpack.c.bf16 %v528, %v528
      %v565 = vpack.c.bf16 %v529, %v529
      %v566 = vpack.c.bf16 %v530, %v530
      %v567 = vpack.c.bf16 %v531, %v531
      %v568 = vpack.c.bf16 %v532, %v532
      %v569 = vpack.c.bf16 %v533, %v533
      %v570 = vpack.c.bf16 %v534, %v534
      %v571 = vpack.c.bf16 %v535, %v535
      %v572 = vpack.c.bf16 %v536, %v536
      %v573 = vpack.c.bf16 %v537, %v537
      %v574 = vpack.c.bf16 %v538, %v538
      %v575 = vpack.c.bf16 %v539, %v539
      %v576 = vpack.c.bf16 %v540, %v540
      %v577 = vpack.c.bf16 %v541, %v541
      %v596 = vunpack.c.l.b16 %v542
      %v597 = vunpack.c.l.b16 %v544
      %v598 = vunpack.c.l.b16 %v546
      %v599 = vunpack.c.l.b16 %v548
      %v600 = vunpack.c.l.b16 %v550
      %v601 = vunpack.c.l.b16 %v552
      %v602 = vunpack.c.l.b16 %v554
      %v603 = vunpack.c.l.b16 %v556
      %v604 = vunpack.c.l.b16 %v558
      %v605 = vunpack.c.l.b16 %v560
      %v606 = vunpack.c.l.b16 %v562
      %v607 = vunpack.c.l.b16 %v564
      %v608 = vunpack.c.l.b16 %v566
      %v609 = vunpack.c.l.b16 %v568
      %v610 = vunpack.c.l.b16 %v570
      %v611 = vunpack.c.l.b16 %v572
      %v612 = vunpack.c.l.b16 %v574
      %v613 = vunpack.c.l.b16 %v576
      %v614 = vpack.c.b16 %v596, %v596
      %v615 = vpack.c.b16 %v597, %v597
      %v616 = vpack.c.b16 %v598, %v598
      %v617 = vpack.c.b16 %v599, %v599
      %v618 = vpack.c.b16 %v600, %v600
      %v619 = vpack.c.b16 %v601, %v601
      %v620 = vpack.c.b16 %v602, %v602
      %v621 = vpack.c.b16 %v603, %v603
      %v622 = vpack.c.b16 %v604, %v604
      %v623 = vpack.c.b16 %v605, %v605
      %v624 = vpack.c.b16 %v606, %v606
      %v625 = vpack.c.b16 %v607, %v607
      %v626 = vpack.c.b16 %v608, %v608
      %v627 = vpack.c.b16 %v609, %v609
      %v628 = vpack.c.b16 %v610, %v610
      %v629 = vpack.c.b16 %v611, %v611
      %v630 = vpack.c.b16 %v612, %v612
      %v631 = vpack.c.b16 %v613, %v613
      %v633 = vshrl.u32 %v614, 16
      %v636 = vshrl.u32 %v615, 16
      %v639 = vshrl.u32 %v616, 16
      %v642 = vshrl.u32 %v617, 16
      %v645 = vshrl.u32 %v618, 16
      %v648 = vshrl.u32 %v619, 16
      %v651 = vshrl.u32 %v620, 16
      %v654 = vshrl.u32 %v621, 16
      %v657 = vshrl.u32 %v622, 16
      %v660 = vshrl.u32 %v623, 16
      %v663 = vshrl.u32 %v624, 16
      %v666 = vshrl.u32 %v625, 16
      %v669 = vshrl.u32 %v626, 16
      %v672 = vshrl.u32 %v627, 16
      %v675 = vshrl.u32 %v628, 16
      %v678 = vshrl.u32 %v629, 16
      %v681 = vshrl.u32 %v630, 16
      %v684 = vshrl.u32 %v631, 16
      %v722 = vunpack.c.l.b16 %v543
      %v723 = vunpack.c.l.b16 %v545
      %v724 = vunpack.c.l.b16 %v547
      %v725 = vunpack.c.l.b16 %v549
      %v726 = vunpack.c.l.b16 %v551
      %v727 = vunpack.c.l.b16 %v553
      %v728 = vunpack.c.l.b16 %v555
      %v729 = vunpack.c.l.b16 %v557
      %v730 = vunpack.c.l.b16 %v559
      %v731 = vunpack.c.l.b16 %v561
      %v732 = vunpack.c.l.b16 %v563
      %v733 = vunpack.c.l.b16 %v565
      %v734 = vunpack.c.l.b16 %v567
      %v735 = vunpack.c.l.b16 %v569
      %v736 = vunpack.c.l.b16 %v571
      %v737 = vunpack.c.l.b16 %v573
      %v738 = vunpack.c.l.b16 %v575
      %v739 = vunpack.c.l.b16 %v577
      %v740 = vpack.c.b16 %v722, %v596
      %v741 = vpack.c.b16 %v723, %v597
      %v742 = vpack.c.b16 %v724, %v598
      %v743 = vpack.c.b16 %v725, %v599
      %v744 = vpack.c.b16 %v726, %v600
      %v745 = vpack.c.b16 %v727, %v601
      %v746 = vpack.c.b16 %v728, %v602
      %v747 = vpack.c.b16 %v729, %v603
      %v748 = vpack.c.b16 %v730, %v604
      %v749 = vpack.c.b16 %v731, %v605
      %v750 = vpack.c.b16 %v732, %v606
      %v751 = vpack.c.b16 %v733, %v607
      %v752 = vpack.c.b16 %v734, %v608
      %v753 = vpack.c.b16 %v735, %v609
      %v754 = vpack.c.b16 %v736, %v610
      %v755 = vpack.c.b16 %v737, %v611
      %v756 = vpack.c.b16 %v738, %v612
      %v757 = vpack.c.b16 %v739, %v613
      %v759 = vshrl.u32 %v740, 16
      %v761 = vrot.slane %v759, 7
      %v762 = vshll.u32 %v740, 16
      %v764 = vor.u32 %v761, %v762
      %v766 = vshrl.u32 %v741, 16
      %v768 = vrot.slane %v766, 7
      %v769 = vshll.u32 %v741, 16
      %v771 = vor.u32 %v768, %v769
      %v773 = vshrl.u32 %v742, 16
      %v775 = vrot.slane %v773, 7
      %v776 = vshll.u32 %v742, 16
      %v778 = vor.u32 %v775, %v776
      %v780 = vshrl.u32 %v743, 16
      %v782 = vrot.slane %v780, 7
      %v783 = vshll.u32 %v743, 16
      %v785 = vor.u32 %v782, %v783
      %v787 = vshrl.u32 %v744, 16
      %v789 = vrot.slane %v787, 7
      %v790 = vshll.u32 %v744, 16
      %v792 = vor.u32 %v789, %v790
      %v794 = vshrl.u32 %v745, 16
      %v796 = vrot.slane %v794, 7
      %v797 = vshll.u32 %v745, 16
      %v799 = vor.u32 %v796, %v797
      %v801 = vshrl.u32 %v746, 16
      %v803 = vrot.slane %v801, 7
      %v804 = vshll.u32 %v746, 16
      %v806 = vor.u32 %v803, %v804
      %v808 = vshrl.u32 %v747, 16
      %v810 = vrot.slane %v808, 7
      %v811 = vshll.u32 %v747, 16
      %v813 = vor.u32 %v810, %v811
      %v815 = vshrl.u32 %v748, 16
      %v817 = vrot.slane %v815, 7
      %v818 = vshll.u32 %v748, 16
      %v820 = vor.u32 %v817, %v818
      %v822 = vshrl.u32 %v749, 16
      %v824 = vrot.slane %v822, 7
      %v825 = vshll.u32 %v749, 16
      %v827 = vor.u32 %v824, %v825
      %v829 = vshrl.u32 %v750, 16
      %v831 = vrot.slane %v829, 7
      %v832 = vshll.u32 %v750, 16
      %v834 = vor.u32 %v831, %v832
      %v836 = vshrl.u32 %v751, 16
      %v838 = vrot.slane %v836, 7
      %v839 = vshll.u32 %v751, 16
      %v841 = vor.u32 %v838, %v839
      %v843 = vshrl.u32 %v752, 16
      %v845 = vrot.slane %v843, 7
      %v846 = vshll.u32 %v752, 16
      %v848 = vor.u32 %v845, %v846
      %v850 = vshrl.u32 %v753, 16
      %v852 = vrot.slane %v850, 7
      %v853 = vshll.u32 %v753, 16
      %v855 = vor.u32 %v852, %v853
      %v857 = vshrl.u32 %v754, 16
      %v859 = vrot.slane %v857, 7
      %v860 = vshll.u32 %v754, 16
      %v862 = vor.u32 %v859, %v860
      %v864 = vshrl.u32 %v755, 16
      %v866 = vrot.slane %v864, 7
      %v867 = vshll.u32 %v755, 16
      %v869 = vor.u32 %v866, %v867
      %v871 = vshrl.u32 %v756, 16
      %v873 = vrot.slane %v871, 7
      %v874 = vshll.u32 %v756, 16
      %v876 = vor.u32 %v873, %v874
      %v878 = vshrl.u32 %v757, 16
      %v880 = vrot.slane %v878, 7
      %v881 = vshll.u32 %v757, 16
      %v883 = vor.u32 %v880, %v881
      %vm902 = vcmask 1040384
      %vm903 = vsmask.f32 256
      %vm904 = vmand %vm902, %vm903
      %v905 = vsel %vm904, %v633, %v764
      %v906 = vsel %vm904, %v636, %v771
      %v907 = vsel %vm904, %v639, %v778
      %v908 = vsel %vm904, %v642, %v785
      %v909 = vsel %vm904, %v645, %v792
      %v910 = vsel %vm904, %v648, %v799
      %v911 = vsel %vm904, %v651, %v806
      %v912 = vsel %vm904, %v654, %v813
      %v913 = vsel %vm904, %v657, %v820
      %v914 = vsel %vm904, %v660, %v827
      %v915 = vsel %vm904, %v663, %v834
      %v916 = vsel %vm904, %v666, %v841
      %v917 = vsel %vm904, %v669, %v848
      %v918 = vsel %vm904, %v672, %v855
      %v919 = vsel %vm904, %v675, %v862
      %v920 = vsel %vm904, %v678, %v869
      %v921 = vsel %vm904, %v681, %v876
      %v922 = vsel %vm904, %v684, %v883
      %v923 = vrot.slane %v762, 1
      %v924 = vor.u32 %v759, %v923
      %v925 = vrot.slane %v769, 1
      %v926 = vor.u32 %v766, %v925
      %v927 = vrot.slane %v776, 1
      %v928 = vor.u32 %v773, %v927
      %v929 = vrot.slane %v783, 1
      %v930 = vor.u32 %v780, %v929
      %v931 = vrot.slane %v790, 1
      %v932 = vor.u32 %v787, %v931
      %v933 = vrot.slane %v797, 1
      %v934 = vor.u32 %v794, %v933
      %v935 = vrot.slane %v804, 1
      %v936 = vor.u32 %v801, %v935
      %v937 = vrot.slane %v811, 1
      %v938 = vor.u32 %v808, %v937
      %v939 = vrot.slane %v818, 1
      %v940 = vor.u32 %v815, %v939
      %v941 = vrot.slane %v825, 1
      %v942 = vor.u32 %v822, %v941
      %v943 = vrot.slane %v832, 1
      %v944 = vor.u32 %v829, %v943
      %v945 = vrot.slane %v839, 1
      %v946 = vor.u32 %v836, %v945
      %v947 = vrot.slane %v846, 1
      %v948 = vor.u32 %v843, %v947
      %v949 = vrot.slane %v853, 1
      %v950 = vor.u32 %v850, %v949
      %v951 = vrot.slane %v860, 1
      %v952 = vor.u32 %v857, %v951
      %v953 = vrot.slane %v867, 1
      %v954 = vor.u32 %v864, %v953
      %v955 = vrot.slane %v874, 1
      %v956 = vor.u32 %v871, %v955
      %v957 = vrot.slane %v881, 1
      %v958 = vor.u32 %v878, %v957
      %v977 = vpack.c.b16 %v722, %v722
      %v978 = vpack.c.b16 %v723, %v723
      %v979 = vpack.c.b16 %v724, %v724
      %v980 = vpack.c.b16 %v725, %v725
      %v981 = vpack.c.b16 %v726, %v726
      %v982 = vpack.c.b16 %v727, %v727
      %v983 = vpack.c.b16 %v728, %v728
      %v984 = vpack.c.b16 %v729, %v729
      %v985 = vpack.c.b16 %v730, %v730
      %v986 = vpack.c.b16 %v731, %v731
      %v987 = vpack.c.b16 %v732, %v732
      %v988 = vpack.c.b16 %v733, %v733
      %v989 = vpack.c.b16 %v734, %v734
      %v990 = vpack.c.b16 %v735, %v735
      %v991 = vpack.c.b16 %v736, %v736
      %v992 = vpack.c.b16 %v737, %v737
      %v993 = vpack.c.b16 %v738, %v738
      %v994 = vpack.c.b16 %v739, %v739
      %v996 = vshll.u32 %v977, 16
      %v998 = vrot.slane %v996, 4
      %v1000 = vshll.u32 %v978, 16
      %v1002 = vrot.slane %v1000, 4
      %v1004 = vshll.u32 %v979, 16
      %v1006 = vrot.slane %v1004, 4
      %v1008 = vshll.u32 %v980, 16
      %v1010 = vrot.slane %v1008, 4
      %v1012 = vshll.u32 %v981, 16
      %v1014 = vrot.slane %v1012, 4
      %v1016 = vshll.u32 %v982, 16
      %v1018 = vrot.slane %v1016, 4
      %v1020 = vshll.u32 %v983, 16
      %v1022 = vrot.slane %v1020, 4
      %v1024 = vshll.u32 %v984, 16
      %v1026 = vrot.slane %v1024, 4
      %v1028 = vshll.u32 %v985, 16
      %v1030 = vrot.slane %v1028, 4
      %v1032 = vshll.u32 %v986, 16
      %v1034 = vrot.slane %v1032, 4
      %v1036 = vshll.u32 %v987, 16
      %v1038 = vrot.slane %v1036, 4
      %v1040 = vshll.u32 %v988, 16
      %v1042 = vrot.slane %v1040, 4
      %v1044 = vshll.u32 %v989, 16
      %v1046 = vrot.slane %v1044, 4
      %v1048 = vshll.u32 %v990, 16
      %v1050 = vrot.slane %v1048, 4
      %v1052 = vshll.u32 %v991, 16
      %v1054 = vrot.slane %v1052, 4
      %v1056 = vshll.u32 %v992, 16
      %v1058 = vrot.slane %v1056, 4
      %v1060 = vshll.u32 %v993, 16
      %v1062 = vrot.slane %v1060, 4
      %v1064 = vshll.u32 %v994, 16
      %v1066 = vrot.slane %v1064, 4
      %vm1085 = vcmask 1047552
      %vm1086 = vsmask.f32 7424
      %vm1087 = vmand %vm1085, %vm1086
      %v1088 = vsel %vm1087, %v924, %v998
      %v1089 = vsel %vm1087, %v926, %v1002
      %v1090 = vsel %vm1087, %v928, %v1006
      %v1091 = vsel %vm1087, %v930, %v1010
      %v1092 = vsel %vm1087, %v932, %v1014
      %v1093 = vsel %vm1087, %v934, %v1018
      %v1094 = vsel %vm1087, %v936, %v1022
      %v1095 = vsel %vm1087, %v938, %v1026
      %v1096 = vsel %vm1087, %v940, %v1030
      %v1097 = vsel %vm1087, %v942, %v1034
      %v1098 = vsel %vm1087, %v944, %v1038
      %v1099 = vsel %vm1087, %v946, %v1042
      %v1100 = vsel %vm1087, %v948, %v1046
      %v1101 = vsel %vm1087, %v950, %v1050
      %v1102 = vsel %vm1087, %v952, %v1054
      %v1103 = vsel %vm1087, %v954, %v1058
      %v1104 = vsel %vm1087, %v956, %v1062
      %v1105 = vsel %vm1087, %v958, %v1066
      %v1106 = vld [vmem:[%s1] sm:$0xf]
      %v1107 = vld [vmem:[%s1 + $0x4] sm:$0xf]
      %v1108 = vld [vmem:[%s1 + $0x8] sm:$0xf]
      %v1109 = vld [vmem:[%s1 + $0xc] sm:$0xf]
      %v1110 = vld [vmem:[%s1 + $0x10] sm:$0xf]
      %v1111 = vld [vmem:[%s1 + $0x14] sm:$0xf]
      %v1112 = vld [vmem:[%s1 + $0x18] sm:$0xf]
      %v1113 = vld [vmem:[%s1 + $0x1c] sm:$0xf]
      %v1114 = vld [vmem:[%s1 + $0x20] sm:$0xf]
      %v1115 = vld [vmem:[%s1 + $0x24] sm:$0xf]
      %v1116 = vld [vmem:[%s1 + $0x28] sm:$0xf]
      %v1117 = vld [vmem:[%s1 + $0x2c] sm:$0xf]
      %v1118 = vld [vmem:[%s1 + $0x30] sm:$0xf]
      %v1119 = vld [vmem:[%s1 + $0x34] sm:$0xf]
      %v1120 = vld [vmem:[%s1 + $0x38] sm:$0xf]
      %v1121 = vld [vmem:[%s1 + $0x3c] sm:$0xf]
      %s1122 = scalar_lea.vmem %s1, 64
      %v1123 = vld [vmem:[%s1122] sm:$0xf]
      %v1124 = vld [vmem:[%s1122 + $0x4] sm:$0xf]
      %v1125 = vld [vmem:[%s1122 + $0x8] sm:$0xf]
      %v1126 = vld [vmem:[%s1122 + $0xc] sm:$0xf]
      %v1127 = vld [vmem:[%s1122 + $0x10] sm:$0xf]
      %v1128 = vld [vmem:[%s1122 + $0x14] sm:$0xf]
      %v1129 = vld [vmem:[%s1122 + $0x18] sm:$0xf]
      %v1130 = vld [vmem:[%s1122 + $0x1c] sm:$0xf]
      %v1131 = vld [vmem:[%s1122 + $0x20] sm:$0xf]
      %v1132 = vld [vmem:[%s1122 + $0x24] sm:$0xf]
      %v1133 = vld [vmem:[%s1122 + $0x28] sm:$0xf]
      %v1134 = vld [vmem:[%s1122 + $0x2c] sm:$0xf]
      %v1135 = vld [vmem:[%s1122 + $0x30] sm:$0xf]
      %v1136 = vld [vmem:[%s1122 + $0x34] sm:$0xf]
      %v1137 = vld [vmem:[%s1122 + $0x38] sm:$0xf]
      %v1138 = vld [vmem:[%s1122 + $0x3c] sm:$0xf]
      %v1171 = vunpack.c.l.b16 %v1123
      %v1172 = vunpack.c.l.b16 %v1124
      %v1173 = vunpack.c.l.b16 %v1125
      %v1174 = vunpack.c.l.b16 %v1126
      %v1175 = vunpack.c.l.b16 %v1127
      %v1176 = vunpack.c.l.b16 %v1128
      %v1177 = vunpack.c.l.b16 %v1129
      %v1178 = vunpack.c.l.b16 %v1130
      %v1179 = vunpack.c.l.b16 %v1131
      %v1180 = vunpack.c.l.b16 %v1132
      %v1181 = vunpack.c.l.b16 %v1133
      %v1182 = vunpack.c.l.b16 %v1134
      %v1183 = vunpack.c.l.b16 %v1135
      %v1184 = vunpack.c.l.b16 %v1136
      %v1185 = vunpack.c.l.b16 %v1137
      %v1186 = vunpack.c.l.b16 %v1138
      %v1187 = vpack.c.b16 %v1172, %v1171
      %v1188 = vpack.c.b16 %v1174, %v1173
      %v1189 = vpack.c.b16 %v1176, %v1175
      %v1190 = vpack.c.b16 %v1178, %v1177
      %v1191 = vpack.c.b16 %v1180, %v1179
      %v1192 = vpack.c.b16 %v1182, %v1181
      %v1193 = vpack.c.b16 %v1184, %v1183
      %v1194 = vpack.c.b16 %v1186, %v1185
      %1203 = vmatpush.bf16.msra.mxu0 %v1194
      %1204 = vmatpush.bf16.msra.mxu0 %v1193
      %1205 = vmatpush.bf16.msra.mxu0 %v1192
      %1206 = vmatpush.bf16.msra.mxu0 %v1191
      %1207 = vmatpush.bf16.msra.mxu0 %v1190
      %1208 = vmatpush.bf16.msra.mxu0 %v1189
      %1209 = vmatpush.bf16.msra.mxu0 %v1188
      %1210 = vmatpush.bf16.msra.mxu0 %v1187
      %1211 = vmatmul.bf16.gmra.mxu0 %v740
      %v1212 = vpop.f32.mrf.mxu0
      %v1213 = vadd.f32 0.0, %v1212
      %v1214 = vpop.f32.mrf.mxu0
      %v1215 = vadd.f32 0.0, %v1214
      %1216 = vmatmul.bf16.gmra.mxu0 %v741
      %v1217 = vpop.f32.mrf.mxu0
      %v1218 = vadd.f32 0.0, %v1217
      %v1219 = vpop.f32.mrf.mxu0
      %v1220 = vadd.f32 0.0, %v1219
      %1221 = vmatmul.bf16.gmra.mxu0 %v742
      %v1222 = vpop.f32.mrf.mxu0
      %v1223 = vadd.f32 0.0, %v1222
      %v1224 = vpop.f32.mrf.mxu0
      %v1225 = vadd.f32 0.0, %v1224
      %1226 = vmatmul.bf16.gmra.mxu0 %v743
      %v1227 = vpop.f32.mrf.mxu0
      %v1228 = vadd.f32 0.0, %v1227
      %v1229 = vpop.f32.mrf.mxu0
      %v1230 = vadd.f32 0.0, %v1229
      %1231 = vmatmul.bf16.gmra.mxu0 %v744
      %v1232 = vpop.f32.mrf.mxu0
      %v1233 = vadd.f32 0.0, %v1232
      %v1234 = vpop.f32.mrf.mxu0
      %v1235 = vadd.f32 0.0, %v1234
      %1236 = vmatmul.bf16.gmra.mxu0 %v745
      %v1237 = vpop.f32.mrf.mxu0
      %v1238 = vadd.f32 0.0, %v1237
      %v1239 = vpop.f32.mrf.mxu0
      %v1240 = vadd.f32 0.0, %v1239
      %1241 = vmatmul.bf16.gmra.mxu0 %v746
      %v1242 = vpop.f32.mrf.mxu0
      %v1243 = vadd.f32 0.0, %v1242
      %v1244 = vpop.f32.mrf.mxu0
      %v1245 = vadd.f32 0.0, %v1244
      %1246 = vmatmul.bf16.gmra.mxu0 %v747
      %v1247 = vpop.f32.mrf.mxu0
      %v1248 = vadd.f32 0.0, %v1247
      %v1249 = vpop.f32.mrf.mxu0
      %v1250 = vadd.f32 0.0, %v1249
      %1251 = vmatmul.bf16.gmra.mxu0 %v748
      %v1252 = vpop.f32.mrf.mxu0
      %v1253 = vadd.f32 0.0, %v1252
      %v1254 = vpop.f32.mrf.mxu0
      %v1255 = vadd.f32 0.0, %v1254
      %1256 = vmatmul.bf16.gmra.mxu0 %v749
      %v1257 = vpop.f32.mrf.mxu0
      %v1258 = vadd.f32 0.0, %v1257
      %v1259 = vpop.f32.mrf.mxu0
      %v1260 = vadd.f32 0.0, %v1259
      %1261 = vmatmul.bf16.gmra.mxu0 %v750
      %v1262 = vpop.f32.mrf.mxu0
      %v1263 = vadd.f32 0.0, %v1262
      %v1264 = vpop.f32.mrf.mxu0
      %v1265 = vadd.f32 0.0, %v1264
      %1266 = vmatmul.bf16.gmra.mxu0 %v751
      %v1267 = vpop.f32.mrf.mxu0
      %v1268 = vadd.f32 0.0, %v1267
      %v1269 = vpop.f32.mrf.mxu0
      %v1270 = vadd.f32 0.0, %v1269
      %1271 = vmatmul.bf16.gmra.mxu0 %v752
      %v1272 = vpop.f32.mrf.mxu0
      %v1273 = vadd.f32 0.0, %v1272
      %v1274 = vpop.f32.mrf.mxu0
      %v1275 = vadd.f32 0.0, %v1274
      %1276 = vmatmul.bf16.gmra.mxu0 %v753
      %v1277 = vpop.f32.mrf.mxu0
      %v1278 = vadd.f32 0.0, %v1277
      %v1279 = vpop.f32.mrf.mxu0
      %v1280 = vadd.f32 0.0, %v1279
      %1281 = vmatmul.bf16.gmra.mxu0 %v754
      %v1282 = vpop.f32.mrf.mxu0
      %v1283 = vadd.f32 0.0, %v1282
      %v1284 = vpop.f32.mrf.mxu0
      %v1285 = vadd.f32 0.0, %v1284
      %1286 = vmatmul.bf16.gmra.mxu0 %v755
      %v1287 = vpop.f32.mrf.mxu0
      %v1288 = vadd.f32 0.0, %v1287
      %v1289 = vpop.f32.mrf.mxu0
      %v1290 = vadd.f32 0.0, %v1289
      %1291 = vdwg.mxu0
      %v1308 = vunpack.c.l.b16 %v1106
      %v1309 = vunpack.c.l.b16 %v1107
      %v1310 = vunpack.c.l.b16 %v1108
      %v1311 = vunpack.c.l.b16 %v1109
      %v1312 = vunpack.c.l.b16 %v1110
      %v1313 = vunpack.c.l.b16 %v1111
      %v1314 = vunpack.c.l.b16 %v1112
      %v1315 = vunpack.c.l.b16 %v1113
      %v1316 = vunpack.c.l.b16 %v1114
      %v1317 = vunpack.c.l.b16 %v1115
      %v1318 = vunpack.c.l.b16 %v1116
      %v1319 = vunpack.c.l.b16 %v1117
      %v1320 = vunpack.c.l.b16 %v1118
      %v1321 = vunpack.c.l.b16 %v1119
      %v1322 = vunpack.c.l.b16 %v1120
      %v1323 = vunpack.c.l.b16 %v1121
      %v1324 = vpack.c.b16 %v1309, %v1308
      %v1325 = vpack.c.b16 %v1311, %v1310
      %v1326 = vpack.c.b16 %v1313, %v1312
      %v1327 = vpack.c.b16 %v1315, %v1314
      %v1328 = vpack.c.b16 %v1317, %v1316
      %v1329 = vpack.c.b16 %v1319, %v1318
      %v1330 = vpack.c.b16 %v1321, %v1320
      %v1331 = vpack.c.b16 %v1323, %v1322
      %1340 = vmatpush.bf16.msra.mxu0 %v1331
      %1341 = vmatpush.bf16.msra.mxu0 %v1330
      %1342 = vmatpush.bf16.msra.mxu0 %v1329
      %1343 = vmatpush.bf16.msra.mxu0 %v1328
      %1344 = vmatpush.bf16.msra.mxu0 %v1327
      %1345 = vmatpush.bf16.msra.mxu0 %v1326
      %1346 = vmatpush.bf16.msra.mxu0 %v1325
      %1347 = vmatpush.bf16.msra.mxu0 %v1324
      %1348 = vmatmul.bf16.gmra.mxu0 %v905
      %v1349 = vpop.f32.mrf.mxu0
      %v1350 = vadd.f32 %v1213, %v1349
      %v1351 = vpop.f32.mrf.mxu0
      %v1352 = vadd.f32 %v1215, %v1351
      %1353 = vmatmul.bf16.gmra.mxu0 %v906
      %v1354 = vpop.f32.mrf.mxu0
      %v1355 = vadd.f32 %v1218, %v1354
      %v1356 = vpop.f32.mrf.mxu0
      %v1357 = vadd.f32 %v1220, %v1356
      %1358 = vmatmul.bf16.gmra.mxu0 %v907
      %v1359 = vpop.f32.mrf.mxu0
      %v1360 = vadd.f32 %v1223, %v1359
      %v1361 = vpop.f32.mrf.mxu0
      %v1362 = vadd.f32 %v1225, %v1361
      %1363 = vmatmul.bf16.gmra.mxu0 %v908
      %v1364 = vpop.f32.mrf.mxu0
      %v1365 = vadd.f32 %v1228, %v1364
      %v1366 = vpop.f32.mrf.mxu0
      %v1367 = vadd.f32 %v1230, %v1366
      %1368 = vmatmul.bf16.gmra.mxu0 %v909
      %v1369 = vpop.f32.mrf.mxu0
      %v1370 = vadd.f32 %v1233, %v1369
      %v1371 = vpop.f32.mrf.mxu0
      %v1372 = vadd.f32 %v1235, %v1371
      %1373 = vmatmul.bf16.gmra.mxu0 %v910
      %v1374 = vpop.f32.mrf.mxu0
      %v1375 = vadd.f32 %v1238, %v1374
      %v1376 = vpop.f32.mrf.mxu0
      %v1377 = vadd.f32 %v1240, %v1376
      %1378 = vmatmul.bf16.gmra.mxu0 %v911
      %v1379 = vpop.f32.mrf.mxu0
      %v1380 = vadd.f32 %v1243, %v1379
      %v1381 = vpop.f32.mrf.mxu0
      %v1382 = vadd.f32 %v1245, %v1381
      %1383 = vmatmul.bf16.gmra.mxu0 %v912
      %v1384 = vpop.f32.mrf.mxu0
      %v1385 = vadd.f32 %v1248, %v1384
      %v1386 = vpop.f32.mrf.mxu0
      %v1387 = vadd.f32 %v1250, %v1386
      %1388 = vmatmul.bf16.gmra.mxu0 %v913
      %v1389 = vpop.f32.mrf.mxu0
      %v1390 = vadd.f32 %v1253, %v1389
      %v1391 = vpop.f32.mrf.mxu0
      %v1392 = vadd.f32 %v1255, %v1391
      %1393 = vmatmul.bf16.gmra.mxu0 %v914
      %v1394 = vpop.f32.mrf.mxu0
      %v1395 = vadd.f32 %v1258, %v1394
      %v1396 = vpop.f32.mrf.mxu0
      %v1397 = vadd.f32 %v1260, %v1396
      %1398 = vmatmul.bf16.gmra.mxu0 %v915
      %v1399 = vpop.f32.mrf.mxu0
      %v1400 = vadd.f32 %v1263, %v1399
      %v1401 = vpop.f32.mrf.mxu0
      %v1402 = vadd.f32 %v1265, %v1401
      %1403 = vmatmul.bf16.gmra.mxu0 %v916
      %v1404 = vpop.f32.mrf.mxu0
      %v1405 = vadd.f32 %v1268, %v1404
      %v1406 = vpop.f32.mrf.mxu0
      %v1407 = vadd.f32 %v1270, %v1406
      %1408 = vmatmul.bf16.gmra.mxu0 %v917
      %v1409 = vpop.f32.mrf.mxu0
      %v1410 = vadd.f32 %v1273, %v1409
      %v1411 = vpop.f32.mrf.mxu0
      %v1412 = vadd.f32 %v1275, %v1411
      %1413 = vmatmul.bf16.gmra.mxu0 %v918
      %v1414 = vpop.f32.mrf.mxu0
      %v1415 = vadd.f32 %v1278, %v1414
      %v1416 = vpop.f32.mrf.mxu0
      %v1417 = vadd.f32 %v1280, %v1416
      %1418 = vmatmul.bf16.gmra.mxu0 %v919
      %v1419 = vpop.f32.mrf.mxu0
      %v1420 = vadd.f32 %v1283, %v1419
      %v1421 = vpop.f32.mrf.mxu0
      %v1422 = vadd.f32 %v1285, %v1421
      %1423 = vmatmul.bf16.gmra.mxu0 %v920
      %v1424 = vpop.f32.mrf.mxu0
      %v1425 = vadd.f32 %v1288, %v1424
      %v1426 = vpop.f32.mrf.mxu0
      %v1427 = vadd.f32 %v1290, %v1426
      %1428 = vdwg.mxu0
      %s1429 = scalar_lea.vmem %s1, 128
      %v1430 = vld [vmem:[%s1429] sm:$0xf]
      %v1431 = vld [vmem:[%s1429 + $0x4] sm:$0xf]
      %v1432 = vld [vmem:[%s1429 + $0x8] sm:$0xf]
      %v1433 = vld [vmem:[%s1429 + $0xc] sm:$0xf]
      %v1434 = vld [vmem:[%s1429 + $0x10] sm:$0xf]
      %v1435 = vld [vmem:[%s1429 + $0x14] sm:$0xf]
      %v1436 = vld [vmem:[%s1429 + $0x18] sm:$0xf]
      %v1437 = vld [vmem:[%s1429 + $0x1c] sm:$0xf]
      %v1438 = vld [vmem:[%s1429 + $0x20] sm:$0xf]
      %v1439 = vld [vmem:[%s1429 + $0x24] sm:$0xf]
      %v1440 = vld [vmem:[%s1429 + $0x28] sm:$0xf]
      %v1441 = vld [vmem:[%s1429 + $0x2c] sm:$0xf]
      %v1442 = vld [vmem:[%s1429 + $0x30] sm:$0xf]
      %v1443 = vld [vmem:[%s1429 + $0x34] sm:$0xf]
      %v1444 = vld [vmem:[%s1429 + $0x38] sm:$0xf]
      %v1445 = vld [vmem:[%s1429 + $0x3c] sm:$0xf]
      %v1462 = vunpack.c.l.b16 %v1430
      %v1463 = vunpack.c.l.b16 %v1431
      %v1464 = vunpack.c.l.b16 %v1432
      %v1465 = vunpack.c.l.b16 %v1433
      %v1466 = vunpack.c.l.b16 %v1434
      %v1467 = vunpack.c.l.b16 %v1435
      %v1468 = vunpack.c.l.b16 %v1436
      %v1469 = vunpack.c.l.b16 %v1437
      %v1470 = vunpack.c.l.b16 %v1438
      %v1471 = vunpack.c.l.b16 %v1439
      %v1472 = vunpack.c.l.b16 %v1440
      %v1473 = vunpack.c.l.b16 %v1441
      %v1474 = vunpack.c.l.b16 %v1442
      %v1475 = vunpack.c.l.b16 %v1443
      %v1476 = vunpack.c.l.b16 %v1444
      %v1477 = vunpack.c.l.b16 %v1445
      %v1478 = vpack.c.b16 %v1463, %v1462
      %v1479 = vpack.c.b16 %v1465, %v1464
      %v1480 = vpack.c.b16 %v1467, %v1466
      %v1481 = vpack.c.b16 %v1469, %v1468
      %v1482 = vpack.c.b16 %v1471, %v1470
      %v1483 = vpack.c.b16 %v1473, %v1472
      %v1484 = vpack.c.b16 %v1475, %v1474
      %v1485 = vpack.c.b16 %v1477, %v1476
      %1494 = vmatpush.bf16.msra.mxu0 %v1485
      %1495 = vmatpush.bf16.msra.mxu0 %v1484
      %1496 = vmatpush.bf16.msra.mxu0 %v1483
      %1497 = vmatpush.bf16.msra.mxu0 %v1482
      %1498 = vmatpush.bf16.msra.mxu0 %v1481
      %1499 = vmatpush.bf16.msra.mxu0 %v1480
      %1500 = vmatpush.bf16.msra.mxu0 %v1479
      %1501 = vmatpush.bf16.msra.mxu0 %v1478
      %1502 = vmatmul.bf16.gmra.mxu0 %v1088
      %v1503 = vpop.f32.mrf.mxu0
      %v1504 = vadd.f32 0.0, %v1503
      %v1505 = vpop.f32.mrf.mxu0
      %v1506 = vadd.f32 0.0, %v1505
      %1507 = vmatmul.bf16.gmra.mxu0 %v1089
      %v1508 = vpop.f32.mrf.mxu0
      %v1509 = vadd.f32 0.0, %v1508
      %v1510 = vpop.f32.mrf.mxu0
      %v1511 = vadd.f32 0.0, %v1510
      %1512 = vmatmul.bf16.gmra.mxu0 %v1090
      %v1513 = vpop.f32.mrf.mxu0
      %v1514 = vadd.f32 0.0, %v1513
      %v1515 = vpop.f32.mrf.mxu0
      %v1516 = vadd.f32 0.0, %v1515
      %1517 = vmatmul.bf16.gmra.mxu0 %v1091
      %v1518 = vpop.f32.mrf.mxu0
      %v1519 = vadd.f32 0.0, %v1518
      %v1520 = vpop.f32.mrf.mxu0
      %v1521 = vadd.f32 0.0, %v1520
      %1522 = vmatmul.bf16.gmra.mxu0 %v1092
      %v1523 = vpop.f32.mrf.mxu0
      %v1524 = vadd.f32 0.0, %v1523
      %v1525 = vpop.f32.mrf.mxu0
      %v1526 = vadd.f32 0.0, %v1525
      %1527 = vmatmul.bf16.gmra.mxu0 %v1093
      %v1528 = vpop.f32.mrf.mxu0
      %v1529 = vadd.f32 0.0, %v1528
      %v1530 = vpop.f32.mrf.mxu0
      %v1531 = vadd.f32 0.0, %v1530
      %1532 = vmatmul.bf16.gmra.mxu0 %v1094
      %v1533 = vpop.f32.mrf.mxu0
      %v1534 = vadd.f32 0.0, %v1533
      %v1535 = vpop.f32.mrf.mxu0
      %v1536 = vadd.f32 0.0, %v1535
      %1537 = vmatmul.bf16.gmra.mxu0 %v1095
      %v1538 = vpop.f32.mrf.mxu0
      %v1539 = vadd.f32 0.0, %v1538
      %v1540 = vpop.f32.mrf.mxu0
      %v1541 = vadd.f32 0.0, %v1540
      %1542 = vmatmul.bf16.gmra.mxu0 %v1096
      %v1543 = vpop.f32.mrf.mxu0
      %v1544 = vadd.f32 0.0, %v1543
      %v1545 = vpop.f32.mrf.mxu0
      %v1546 = vadd.f32 0.0, %v1545
      %1547 = vmatmul.bf16.gmra.mxu0 %v1097
      %v1548 = vpop.f32.mrf.mxu0
      %v1549 = vadd.f32 0.0, %v1548
      %v1550 = vpop.f32.mrf.mxu0
      %v1551 = vadd.f32 0.0, %v1550
      %1552 = vmatmul.bf16.gmra.mxu0 %v1098
      %v1553 = vpop.f32.mrf.mxu0
      %v1554 = vadd.f32 0.0, %v1553
      %v1555 = vpop.f32.mrf.mxu0
      %v1556 = vadd.f32 0.0, %v1555
      %1557 = vmatmul.bf16.gmra.mxu0 %v1099
      %v1558 = vpop.f32.mrf.mxu0
      %v1559 = vadd.f32 0.0, %v1558
      %v1560 = vpop.f32.mrf.mxu0
      %v1561 = vadd.f32 0.0, %v1560
      %1562 = vmatmul.bf16.gmra.mxu0 %v1100
      %v1563 = vpop.f32.mrf.mxu0
      %v1564 = vadd.f32 0.0, %v1563
      %v1565 = vpop.f32.mrf.mxu0
      %v1566 = vadd.f32 0.0, %v1565
      %1567 = vmatmul.bf16.gmra.mxu0 %v1101
      %v1568 = vpop.f32.mrf.mxu0
      %v1569 = vadd.f32 0.0, %v1568
      %v1570 = vpop.f32.mrf.mxu0
      %v1571 = vadd.f32 0.0, %v1570
      %1572 = vmatmul.bf16.gmra.mxu0 %v1102
      %v1573 = vpop.f32.mrf.mxu0
      %v1574 = vadd.f32 0.0, %v1573
      %v1575 = vpop.f32.mrf.mxu0
      %v1576 = vadd.f32 0.0, %v1575
      %1577 = vmatmul.bf16.gmra.mxu0 %v1103
      %v1578 = vpop.f32.mrf.mxu0
      %v1579 = vadd.f32 0.0, %v1578
      %v1580 = vpop.f32.mrf.mxu0
      %v1581 = vadd.f32 0.0, %v1580
      %1582 = vdwg.mxu0
      %v1583 = vadd.f32 %v1350, %v1504
      %v1584 = vadd.f32 %v1352, %v1506
      %v1585 = vadd.f32 %v1355, %v1509
      %v1586 = vadd.f32 %v1357, %v1511
      %v1587 = vadd.f32 %v1360, %v1514
      %v1588 = vadd.f32 %v1362, %v1516
      %v1589 = vadd.f32 %v1365, %v1519
      %v1590 = vadd.f32 %v1367, %v1521
      %v1591 = vadd.f32 %v1370, %v1524
      %v1592 = vadd.f32 %v1372, %v1526
      %v1593 = vadd.f32 %v1375, %v1529
      %v1594 = vadd.f32 %v1377, %v1531
      %v1595 = vadd.f32 %v1380, %v1534
      %v1596 = vadd.f32 %v1382, %v1536
      %v1597 = vadd.f32 %v1385, %v1539
      %v1598 = vadd.f32 %v1387, %v1541
      %v1599 = vadd.f32 %v1390, %v1544
      %v1600 = vadd.f32 %v1392, %v1546
      %v1601 = vadd.f32 %v1395, %v1549
      %v1602 = vadd.f32 %v1397, %v1551
      %v1603 = vadd.f32 %v1400, %v1554
      %v1604 = vadd.f32 %v1402, %v1556
      %v1605 = vadd.f32 %v1405, %v1559
      %v1606 = vadd.f32 %v1407, %v1561
      %v1607 = vadd.f32 %v1410, %v1564
      %v1608 = vadd.f32 %v1412, %v1566
      %v1609 = vadd.f32 %v1415, %v1569
      %v1610 = vadd.f32 %v1417, %v1571
      %v1611 = vadd.f32 %v1420, %v1574
      %v1612 = vadd.f32 %v1422, %v1576
      %v1613 = vadd.f32 %v1425, %v1579
      %v1614 = vadd.f32 %v1427, %v1581
      %s1615 = scalar_lea.vmem %s1, 192
      %v1616 = vld [vmem:[%s1615] sm:$0xf]
      %v1617 = vld [vmem:[%s1615 + $0x4] sm:$0xf]
      %v1618 = vld [vmem:[%s1615 + $0x8] sm:$0xf]
      %v1619 = vld [vmem:[%s1615 + $0xc] sm:$0xf]
      %v1620 = vld [vmem:[%s1615 + $0x10] sm:$0xf]
      %v1621 = vld [vmem:[%s1615 + $0x14] sm:$0xf]
      %v1622 = vld [vmem:[%s1615 + $0x18] sm:$0xf]
      %v1623 = vld [vmem:[%s1615 + $0x1c] sm:$0xf]
      %v1624 = vld [vmem:[%s1615 + $0x20] sm:$0xf]
      %v1625 = vld [vmem:[%s1615 + $0x24] sm:$0xf]
      %v1626 = vld [vmem:[%s1615 + $0x28] sm:$0xf]
      %v1627 = vld [vmem:[%s1615 + $0x2c] sm:$0xf]
      %v1628 = vld [vmem:[%s1615 + $0x30] sm:$0xf]
      %v1629 = vld [vmem:[%s1615 + $0x34] sm:$0xf]
      %v1630 = vld [vmem:[%s1615 + $0x38] sm:$0xf]
      %v1631 = vld [vmem:[%s1615 + $0x3c] sm:$0xf]
      %v1648 = vunpack.c.l.b16 %v1616
      %v1649 = vunpack.c.l.b16 %v1617
      %v1650 = vunpack.c.l.b16 %v1618
      %v1651 = vunpack.c.l.b16 %v1619
      %v1652 = vunpack.c.l.b16 %v1620
      %v1653 = vunpack.c.l.b16 %v1621
      %v1654 = vunpack.c.l.b16 %v1622
      %v1655 = vunpack.c.l.b16 %v1623
      %v1656 = vunpack.c.l.b16 %v1624
      %v1657 = vunpack.c.l.b16 %v1625
      %v1658 = vunpack.c.l.b16 %v1626
      %v1659 = vunpack.c.l.b16 %v1627
      %v1660 = vunpack.c.l.b16 %v1628
      %v1661 = vunpack.c.l.b16 %v1629
      %v1662 = vunpack.c.l.b16 %v1630
      %v1663 = vunpack.c.l.b16 %v1631
      %v1664 = vpack.c.b16 %v1649, %v1648
      %v1665 = vpack.c.b16 %v1651, %v1650
      %v1666 = vpack.c.b16 %v1653, %v1652
      %v1667 = vpack.c.b16 %v1655, %v1654
      %v1668 = vpack.c.b16 %v1657, %v1656
      %v1669 = vpack.c.b16 %v1659, %v1658
      %v1670 = vpack.c.b16 %v1661, %v1660
      %v1671 = vpack.c.b16 %v1663, %v1662
      %1680 = vmatpush.bf16.msra.mxu0 %v1671
      %1681 = vmatpush.bf16.msra.mxu0 %v1670
      %1682 = vmatpush.bf16.msra.mxu0 %v1669
      %1683 = vmatpush.bf16.msra.mxu0 %v1668
      %1684 = vmatpush.bf16.msra.mxu0 %v1667
      %1685 = vmatpush.bf16.msra.mxu0 %v1666
      %1686 = vmatpush.bf16.msra.mxu0 %v1665
      %1687 = vmatpush.bf16.msra.mxu0 %v1664
      %1688 = vmatmul.bf16.gmra.mxu0 %v906
      %v1689 = vpop.f32.mrf.mxu0
      %v1690 = vadd.f32 0.0, %v1689
      %v1691 = vpop.f32.mrf.mxu0
      %v1692 = vadd.f32 0.0, %v1691
      %1693 = vmatmul.bf16.gmra.mxu0 %v907
      %v1694 = vpop.f32.mrf.mxu0
      %v1695 = vadd.f32 0.0, %v1694
      %v1696 = vpop.f32.mrf.mxu0
      %v1697 = vadd.f32 0.0, %v1696
      %1698 = vmatmul.bf16.gmra.mxu0 %v908
      %v1699 = vpop.f32.mrf.mxu0
      %v1700 = vadd.f32 0.0, %v1699
      %v1701 = vpop.f32.mrf.mxu0
      %v1702 = vadd.f32 0.0, %v1701
      %1703 = vmatmul.bf16.gmra.mxu0 %v909
      %v1704 = vpop.f32.mrf.mxu0
      %v1705 = vadd.f32 0.0, %v1704
      %v1706 = vpop.f32.mrf.mxu0
      %v1707 = vadd.f32 0.0, %v1706
      %1708 = vmatmul.bf16.gmra.mxu0 %v910
      %v1709 = vpop.f32.mrf.mxu0
      %v1710 = vadd.f32 0.0, %v1709
      %v1711 = vpop.f32.mrf.mxu0
      %v1712 = vadd.f32 0.0, %v1711
      %1713 = vmatmul.bf16.gmra.mxu0 %v911
      %v1714 = vpop.f32.mrf.mxu0
      %v1715 = vadd.f32 0.0, %v1714
      %v1716 = vpop.f32.mrf.mxu0
      %v1717 = vadd.f32 0.0, %v1716
      %1718 = vmatmul.bf16.gmra.mxu0 %v912
      %v1719 = vpop.f32.mrf.mxu0
      %v1720 = vadd.f32 0.0, %v1719
      %v1721 = vpop.f32.mrf.mxu0
      %v1722 = vadd.f32 0.0, %v1721
      %1723 = vmatmul.bf16.gmra.mxu0 %v913
      %v1724 = vpop.f32.mrf.mxu0
      %v1725 = vadd.f32 0.0, %v1724
      %v1726 = vpop.f32.mrf.mxu0
      %v1727 = vadd.f32 0.0, %v1726
      %1728 = vmatmul.bf16.gmra.mxu0 %v914
      %v1729 = vpop.f32.mrf.mxu0
      %v1730 = vadd.f32 0.0, %v1729
      %v1731 = vpop.f32.mrf.mxu0
      %v1732 = vadd.f32 0.0, %v1731
      %1733 = vmatmul.bf16.gmra.mxu0 %v915
      %v1734 = vpop.f32.mrf.mxu0
      %v1735 = vadd.f32 0.0, %v1734
      %v1736 = vpop.f32.mrf.mxu0
      %v1737 = vadd.f32 0.0, %v1736
      %1738 = vmatmul.bf16.gmra.mxu0 %v916
      %v1739 = vpop.f32.mrf.mxu0
      %v1740 = vadd.f32 0.0, %v1739
      %v1741 = vpop.f32.mrf.mxu0
      %v1742 = vadd.f32 0.0, %v1741
      %1743 = vmatmul.bf16.gmra.mxu0 %v917
      %v1744 = vpop.f32.mrf.mxu0
      %v1745 = vadd.f32 0.0, %v1744
      %v1746 = vpop.f32.mrf.mxu0
      %v1747 = vadd.f32 0.0, %v1746
      %1748 = vmatmul.bf16.gmra.mxu0 %v918
      %v1749 = vpop.f32.mrf.mxu0
      %v1750 = vadd.f32 0.0, %v1749
      %v1751 = vpop.f32.mrf.mxu0
      %v1752 = vadd.f32 0.0, %v1751
      %1753 = vmatmul.bf16.gmra.mxu0 %v919
      %v1754 = vpop.f32.mrf.mxu0
      %v1755 = vadd.f32 0.0, %v1754
      %v1756 = vpop.f32.mrf.mxu0
      %v1757 = vadd.f32 0.0, %v1756
      %1758 = vmatmul.bf16.gmra.mxu0 %v920
      %v1759 = vpop.f32.mrf.mxu0
      %v1760 = vadd.f32 0.0, %v1759
      %v1761 = vpop.f32.mrf.mxu0
      %v1762 = vadd.f32 0.0, %v1761
      %1763 = vmatmul.bf16.gmra.mxu0 %v921
      %v1764 = vpop.f32.mrf.mxu0
      %v1765 = vadd.f32 0.0, %v1764
      %v1766 = vpop.f32.mrf.mxu0
      %v1767 = vadd.f32 0.0, %v1766
      %1768 = vdwg.mxu0
      %v1769 = vadd.f32 %v1583, %v1690
      %v1770 = vadd.f32 %v1584, %v1692
      %v1771 = vadd.f32 %v1585, %v1695
      %v1772 = vadd.f32 %v1586, %v1697
      %v1773 = vadd.f32 %v1587, %v1700
      %v1774 = vadd.f32 %v1588, %v1702
      %v1775 = vadd.f32 %v1589, %v1705
      %v1776 = vadd.f32 %v1590, %v1707
      %v1777 = vadd.f32 %v1591, %v1710
      %v1778 = vadd.f32 %v1592, %v1712
      %v1779 = vadd.f32 %v1593, %v1715
      %v1780 = vadd.f32 %v1594, %v1717
      %v1781 = vadd.f32 %v1595, %v1720
      %v1782 = vadd.f32 %v1596, %v1722
      %v1783 = vadd.f32 %v1597, %v1725
      %v1784 = vadd.f32 %v1598, %v1727
      %v1785 = vadd.f32 %v1599, %v1730
      %v1786 = vadd.f32 %v1600, %v1732
      %v1787 = vadd.f32 %v1601, %v1735
      %v1788 = vadd.f32 %v1602, %v1737
      %v1789 = vadd.f32 %v1603, %v1740
      %v1790 = vadd.f32 %v1604, %v1742
      %v1791 = vadd.f32 %v1605, %v1745
      %v1792 = vadd.f32 %v1606, %v1747
      %v1793 = vadd.f32 %v1607, %v1750
      %v1794 = vadd.f32 %v1608, %v1752
      %v1795 = vadd.f32 %v1609, %v1755
      %v1796 = vadd.f32 %v1610, %v1757
      %v1797 = vadd.f32 %v1611, %v1760
      %v1798 = vadd.f32 %v1612, %v1762
      %v1799 = vadd.f32 %v1613, %v1765
      %v1800 = vadd.f32 %v1614, %v1767
      %s1801 = scalar_lea.vmem %s1, 256
      %v1802 = vld [vmem:[%s1801] sm:$0xf]
      %v1803 = vld [vmem:[%s1801 + $0x4] sm:$0xf]
      %v1804 = vld [vmem:[%s1801 + $0x8] sm:$0xf]
      %v1805 = vld [vmem:[%s1801 + $0xc] sm:$0xf]
      %v1806 = vld [vmem:[%s1801 + $0x10] sm:$0xf]
      %v1807 = vld [vmem:[%s1801 + $0x14] sm:$0xf]
      %v1808 = vld [vmem:[%s1801 + $0x18] sm:$0xf]
      %v1809 = vld [vmem:[%s1801 + $0x1c] sm:$0xf]
      %v1810 = vld [vmem:[%s1801 + $0x20] sm:$0xf]
      %v1811 = vld [vmem:[%s1801 + $0x24] sm:$0xf]
      %v1812 = vld [vmem:[%s1801 + $0x28] sm:$0xf]
      %v1813 = vld [vmem:[%s1801 + $0x2c] sm:$0xf]
      %v1814 = vld [vmem:[%s1801 + $0x30] sm:$0xf]
      %v1815 = vld [vmem:[%s1801 + $0x34] sm:$0xf]
      %v1816 = vld [vmem:[%s1801 + $0x38] sm:$0xf]
      %v1817 = vld [vmem:[%s1801 + $0x3c] sm:$0xf]
      %v1835 = vunpack.c.l.b16 %v1802
      %v1836 = vunpack.c.l.b16 %v1803
      %v1837 = vunpack.c.l.b16 %v1804
      %v1838 = vunpack.c.l.b16 %v1805
      %v1839 = vunpack.c.l.b16 %v1806
      %v1840 = vunpack.c.l.b16 %v1807
      %v1841 = vunpack.c.l.b16 %v1808
      %v1842 = vunpack.c.l.b16 %v1809
      %v1843 = vunpack.c.l.b16 %v1810
      %v1844 = vunpack.c.l.b16 %v1811
      %v1845 = vunpack.c.l.b16 %v1812
      %v1846 = vunpack.c.l.b16 %v1813
      %v1847 = vunpack.c.l.b16 %v1814
      %v1848 = vunpack.c.l.b16 %v1815
      %v1849 = vunpack.c.l.b16 %v1816
      %v1850 = vunpack.c.l.b16 %v1817
      %v1851 = vpack.c.b16 %v1836, %v1835
      %v1852 = vpack.c.b16 %v1838, %v1837
      %v1853 = vpack.c.b16 %v1840, %v1839
      %v1854 = vpack.c.b16 %v1842, %v1841
      %v1855 = vpack.c.b16 %v1844, %v1843
      %v1856 = vpack.c.b16 %v1846, %v1845
      %v1857 = vpack.c.b16 %v1848, %v1847
      %v1858 = vpack.c.b16 %v1850, %v1849
      %1867 = vmatpush.bf16.msra.mxu0 %v1858
      %1868 = vmatpush.bf16.msra.mxu0 %v1857
      %1869 = vmatpush.bf16.msra.mxu0 %v1856
      %1870 = vmatpush.bf16.msra.mxu0 %v1855
      %1871 = vmatpush.bf16.msra.mxu0 %v1854
      %1872 = vmatpush.bf16.msra.mxu0 %v1853
      %1873 = vmatpush.bf16.msra.mxu0 %v1852
      %1874 = vmatpush.bf16.msra.mxu0 %v1851
      %1875 = vmatmul.bf16.gmra.mxu0 %v741
      %v1876 = vpop.f32.mrf.mxu0
      %v1877 = vadd.f32 0.0, %v1876
      %v1878 = vpop.f32.mrf.mxu0
      %v1879 = vadd.f32 0.0, %v1878
      %1880 = vmatmul.bf16.gmra.mxu0 %v742
      %v1881 = vpop.f32.mrf.mxu0
      %v1882 = vadd.f32 0.0, %v1881
      %v1883 = vpop.f32.mrf.mxu0
      %v1884 = vadd.f32 0.0, %v1883
      %1885 = vmatmul.bf16.gmra.mxu0 %v743
      %v1886 = vpop.f32.mrf.mxu0
      %v1887 = vadd.f32 0.0, %v1886
      %v1888 = vpop.f32.mrf.mxu0
      %v1889 = vadd.f32 0.0, %v1888
      %1890 = vmatmul.bf16.gmra.mxu0 %v744
      %v1891 = vpop.f32.mrf.mxu0
      %v1892 = vadd.f32 0.0, %v1891
      %v1893 = vpop.f32.mrf.mxu0
      %v1894 = vadd.f32 0.0, %v1893
      %1895 = vmatmul.bf16.gmra.mxu0 %v745
      %v1896 = vpop.f32.mrf.mxu0
      %v1897 = vadd.f32 0.0, %v1896
      %v1898 = vpop.f32.mrf.mxu0
      %v1899 = vadd.f32 0.0, %v1898
      %1900 = vmatmul.bf16.gmra.mxu0 %v746
      %v1901 = vpop.f32.mrf.mxu0
      %v1902 = vadd.f32 0.0, %v1901
      %v1903 = vpop.f32.mrf.mxu0
      %v1904 = vadd.f32 0.0, %v1903
      %1905 = vmatmul.bf16.gmra.mxu0 %v747
      %v1906 = vpop.f32.mrf.mxu0
      %v1907 = vadd.f32 0.0, %v1906
      %v1908 = vpop.f32.mrf.mxu0
      %v1909 = vadd.f32 0.0, %v1908
      %1910 = vmatmul.bf16.gmra.mxu0 %v748
      %v1911 = vpop.f32.mrf.mxu0
      %v1912 = vadd.f32 0.0, %v1911
      %v1913 = vpop.f32.mrf.mxu0
      %v1914 = vadd.f32 0.0, %v1913
      %1915 = vmatmul.bf16.gmra.mxu0 %v749
      %v1916 = vpop.f32.mrf.mxu0
      %v1917 = vadd.f32 0.0, %v1916
      %v1918 = vpop.f32.mrf.mxu0
      %v1919 = vadd.f32 0.0, %v1918
      %1920 = vmatmul.bf16.gmra.mxu0 %v750
      %v1921 = vpop.f32.mrf.mxu0
      %v1922 = vadd.f32 0.0, %v1921
      %v1923 = vpop.f32.mrf.mxu0
      %v1924 = vadd.f32 0.0, %v1923
      %1925 = vmatmul.bf16.gmra.mxu0 %v751
      %v1926 = vpop.f32.mrf.mxu0
      %v1927 = vadd.f32 0.0, %v1926
      %v1928 = vpop.f32.mrf.mxu0
      %v1929 = vadd.f32 0.0, %v1928
      %1930 = vmatmul.bf16.gmra.mxu0 %v752
      %v1931 = vpop.f32.mrf.mxu0
      %v1932 = vadd.f32 0.0, %v1931
      %v1933 = vpop.f32.mrf.mxu0
      %v1934 = vadd.f32 0.0, %v1933
      %1935 = vmatmul.bf16.gmra.mxu0 %v753
      %v1936 = vpop.f32.mrf.mxu0
      %v1937 = vadd.f32 0.0, %v1936
      %v1938 = vpop.f32.mrf.mxu0
      %v1939 = vadd.f32 0.0, %v1938
      %1940 = vmatmul.bf16.gmra.mxu0 %v754
      %v1941 = vpop.f32.mrf.mxu0
      %v1942 = vadd.f32 0.0, %v1941
      %v1943 = vpop.f32.mrf.mxu0
      %v1944 = vadd.f32 0.0, %v1943
      %1945 = vmatmul.bf16.gmra.mxu0 %v755
      %v1946 = vpop.f32.mrf.mxu0
      %v1947 = vadd.f32 0.0, %v1946
      %v1948 = vpop.f32.mrf.mxu0
      %v1949 = vadd.f32 0.0, %v1948
      %1950 = vmatmul.bf16.gmra.mxu0 %v756
      %v1951 = vpop.f32.mrf.mxu0
      %v1952 = vadd.f32 0.0, %v1951
      %v1953 = vpop.f32.mrf.mxu0
      %v1954 = vadd.f32 0.0, %v1953
      %1955 = vdwg.mxu0
      %v1956 = vadd.f32 %v1769, %v1877
      %v1957 = vadd.f32 %v1770, %v1879
      %v1958 = vadd.f32 %v1771, %v1882
      %v1959 = vadd.f32 %v1772, %v1884
      %v1960 = vadd.f32 %v1773, %v1887
      %v1961 = vadd.f32 %v1774, %v1889
      %v1962 = vadd.f32 %v1775, %v1892
      %v1963 = vadd.f32 %v1776, %v1894
      %v1964 = vadd.f32 %v1777, %v1897
      %v1965 = vadd.f32 %v1778, %v1899
      %v1966 = vadd.f32 %v1779, %v1902
      %v1967 = vadd.f32 %v1780, %v1904
      %v1968 = vadd.f32 %v1781, %v1907
      %v1969 = vadd.f32 %v1782, %v1909
      %v1970 = vadd.f32 %v1783, %v1912
      %v1971 = vadd.f32 %v1784, %v1914
      %v1972 = vadd.f32 %v1785, %v1917
      %v1973 = vadd.f32 %v1786, %v1919
      %v1974 = vadd.f32 %v1787, %v1922
      %v1975 = vadd.f32 %v1788, %v1924
      %v1976 = vadd.f32 %v1789, %v1927
      %v1977 = vadd.f32 %v1790, %v1929
      %v1978 = vadd.f32 %v1791, %v1932
      %v1979 = vadd.f32 %v1792, %v1934
      %v1980 = vadd.f32 %v1793, %v1937
      %v1981 = vadd.f32 %v1794, %v1939
      %v1982 = vadd.f32 %v1795, %v1942
      %v1983 = vadd.f32 %v1796, %v1944
      %v1984 = vadd.f32 %v1797, %v1947
      %v1985 = vadd.f32 %v1798, %v1949
      %v1986 = vadd.f32 %v1799, %v1952
      %v1987 = vadd.f32 %v1800, %v1954
      %s1988 = scalar_lea.vmem %s1, 320
      %v1989 = vld [vmem:[%s1988] sm:$0xf]
      %v1990 = vld [vmem:[%s1988 + $0x4] sm:$0xf]
      %v1991 = vld [vmem:[%s1988 + $0x8] sm:$0xf]
      %v1992 = vld [vmem:[%s1988 + $0xc] sm:$0xf]
      %v1993 = vld [vmem:[%s1988 + $0x10] sm:$0xf]
      %v1994 = vld [vmem:[%s1988 + $0x14] sm:$0xf]
      %v1995 = vld [vmem:[%s1988 + $0x18] sm:$0xf]
      %v1996 = vld [vmem:[%s1988 + $0x1c] sm:$0xf]
      %v1997 = vld [vmem:[%s1988 + $0x20] sm:$0xf]
      %v1998 = vld [vmem:[%s1988 + $0x24] sm:$0xf]
      %v1999 = vld [vmem:[%s1988 + $0x28] sm:$0xf]
      %v2000 = vld [vmem:[%s1988 + $0x2c] sm:$0xf]
      %v2001 = vld [vmem:[%s1988 + $0x30] sm:$0xf]
      %v2002 = vld [vmem:[%s1988 + $0x34] sm:$0xf]
      %v2003 = vld [vmem:[%s1988 + $0x38] sm:$0xf]
      %v2004 = vld [vmem:[%s1988 + $0x3c] sm:$0xf]
      %v2021 = vunpack.c.l.b16 %v1989
      %v2022 = vunpack.c.l.b16 %v1990
      %v2023 = vunpack.c.l.b16 %v1991
      %v2024 = vunpack.c.l.b16 %v1992
      %v2025 = vunpack.c.l.b16 %v1993
      %v2026 = vunpack.c.l.b16 %v1994
      %v2027 = vunpack.c.l.b16 %v1995
      %v2028 = vunpack.c.l.b16 %v1996
      %v2029 = vunpack.c.l.b16 %v1997
      %v2030 = vunpack.c.l.b16 %v1998
      %v2031 = vunpack.c.l.b16 %v1999
      %v2032 = vunpack.c.l.b16 %v2000
      %v2033 = vunpack.c.l.b16 %v2001
      %v2034 = vunpack.c.l.b16 %v2002
      %v2035 = vunpack.c.l.b16 %v2003
      %v2036 = vunpack.c.l.b16 %v2004
      %v2037 = vpack.c.b16 %v2022, %v2021
      %v2038 = vpack.c.b16 %v2024, %v2023
      %v2039 = vpack.c.b16 %v2026, %v2025
      %v2040 = vpack.c.b16 %v2028, %v2027
      %v2041 = vpack.c.b16 %v2030, %v2029
      %v2042 = vpack.c.b16 %v2032, %v2031
      %v2043 = vpack.c.b16 %v2034, %v2033
      %v2044 = vpack.c.b16 %v2036, %v2035
      %2053 = vmatpush.bf16.msra.mxu0 %v2044
      %2054 = vmatpush.bf16.msra.mxu0 %v2043
      %2055 = vmatpush.bf16.msra.mxu0 %v2042
      %2056 = vmatpush.bf16.msra.mxu0 %v2041
      %2057 = vmatpush.bf16.msra.mxu0 %v2040
      %2058 = vmatpush.bf16.msra.mxu0 %v2039
      %2059 = vmatpush.bf16.msra.mxu0 %v2038
      %2060 = vmatpush.bf16.msra.mxu0 %v2037
      %2061 = vmatmul.bf16.gmra.mxu0 %v1089
      %v2062 = vpop.f32.mrf.mxu0
      %v2063 = vadd.f32 0.0, %v2062
      %v2064 = vpop.f32.mrf.mxu0
      %v2065 = vadd.f32 0.0, %v2064
      %2066 = vmatmul.bf16.gmra.mxu0 %v1090
      %v2067 = vpop.f32.mrf.mxu0
      %v2068 = vadd.f32 0.0, %v2067
      %v2069 = vpop.f32.mrf.mxu0
      %v2070 = vadd.f32 0.0, %v2069
      %2071 = vmatmul.bf16.gmra.mxu0 %v1091
      %v2072 = vpop.f32.mrf.mxu0
      %v2073 = vadd.f32 0.0, %v2072
      %v2074 = vpop.f32.mrf.mxu0
      %v2075 = vadd.f32 0.0, %v2074
      %2076 = vmatmul.bf16.gmra.mxu0 %v1092
      %v2077 = vpop.f32.mrf.mxu0
      %v2078 = vadd.f32 0.0, %v2077
      %v2079 = vpop.f32.mrf.mxu0
      %v2080 = vadd.f32 0.0, %v2079
      %2081 = vmatmul.bf16.gmra.mxu0 %v1093
      %v2082 = vpop.f32.mrf.mxu0
      %v2083 = vadd.f32 0.0, %v2082
      %v2084 = vpop.f32.mrf.mxu0
      %v2085 = vadd.f32 0.0, %v2084
      %2086 = vmatmul.bf16.gmra.mxu0 %v1094
      %v2087 = vpop.f32.mrf.mxu0
      %v2088 = vadd.f32 0.0, %v2087
      %v2089 = vpop.f32.mrf.mxu0
      %v2090 = vadd.f32 0.0, %v2089
      %2091 = vmatmul.bf16.gmra.mxu0 %v1095
      %v2092 = vpop.f32.mrf.mxu0
      %v2093 = vadd.f32 0.0, %v2092
      %v2094 = vpop.f32.mrf.mxu0
      %v2095 = vadd.f32 0.0, %v2094
      %2096 = vmatmul.bf16.gmra.mxu0 %v1096
      %v2097 = vpop.f32.mrf.mxu0
      %v2098 = vadd.f32 0.0, %v2097
      %v2099 = vpop.f32.mrf.mxu0
      %v2100 = vadd.f32 0.0, %v2099
      %2101 = vmatmul.bf16.gmra.mxu0 %v1097
      %v2102 = vpop.f32.mrf.mxu0
      %v2103 = vadd.f32 0.0, %v2102
      %v2104 = vpop.f32.mrf.mxu0
      %v2105 = vadd.f32 0.0, %v2104
      %2106 = vmatmul.bf16.gmra.mxu0 %v1098
      %v2107 = vpop.f32.mrf.mxu0
      %v2108 = vadd.f32 0.0, %v2107
      %v2109 = vpop.f32.mrf.mxu0
      %v2110 = vadd.f32 0.0, %v2109
      %2111 = vmatmul.bf16.gmra.mxu0 %v1099
      %v2112 = vpop.f32.mrf.mxu0
      %v2113 = vadd.f32 0.0, %v2112
      %v2114 = vpop.f32.mrf.mxu0
      %v2115 = vadd.f32 0.0, %v2114
      %2116 = vmatmul.bf16.gmra.mxu0 %v1100
      %v2117 = vpop.f32.mrf.mxu0
      %v2118 = vadd.f32 0.0, %v2117
      %v2119 = vpop.f32.mrf.mxu0
      %v2120 = vadd.f32 0.0, %v2119
      %2121 = vmatmul.bf16.gmra.mxu0 %v1101
      %v2122 = vpop.f32.mrf.mxu0
      %v2123 = vadd.f32 0.0, %v2122
      %v2124 = vpop.f32.mrf.mxu0
      %v2125 = vadd.f32 0.0, %v2124
      %2126 = vmatmul.bf16.gmra.mxu0 %v1102
      %v2127 = vpop.f32.mrf.mxu0
      %v2128 = vadd.f32 0.0, %v2127
      %v2129 = vpop.f32.mrf.mxu0
      %v2130 = vadd.f32 0.0, %v2129
      %2131 = vmatmul.bf16.gmra.mxu0 %v1103
      %v2132 = vpop.f32.mrf.mxu0
      %v2133 = vadd.f32 0.0, %v2132
      %v2134 = vpop.f32.mrf.mxu0
      %v2135 = vadd.f32 0.0, %v2134
      %2136 = vmatmul.bf16.gmra.mxu0 %v1104
      %v2137 = vpop.f32.mrf.mxu0
      %v2138 = vadd.f32 0.0, %v2137
      %v2139 = vpop.f32.mrf.mxu0
      %v2140 = vadd.f32 0.0, %v2139
      %2141 = vdwg.mxu0
      %v2142 = vadd.f32 %v1956, %v2063
      %v2143 = vadd.f32 %v1957, %v2065
      %v2144 = vadd.f32 %v1958, %v2068
      %v2145 = vadd.f32 %v1959, %v2070
      %v2146 = vadd.f32 %v1960, %v2073
      %v2147 = vadd.f32 %v1961, %v2075
      %v2148 = vadd.f32 %v1962, %v2078
      %v2149 = vadd.f32 %v1963, %v2080
      %v2150 = vadd.f32 %v1964, %v2083
      %v2151 = vadd.f32 %v1965, %v2085
      %v2152 = vadd.f32 %v1966, %v2088
      %v2153 = vadd.f32 %v1967, %v2090
      %v2154 = vadd.f32 %v1968, %v2093
      %v2155 = vadd.f32 %v1969, %v2095
      %v2156 = vadd.f32 %v1970, %v2098
      %v2157 = vadd.f32 %v1971, %v2100
      %v2158 = vadd.f32 %v1972, %v2103
      %v2159 = vadd.f32 %v1973, %v2105
      %v2160 = vadd.f32 %v1974, %v2108
      %v2161 = vadd.f32 %v1975, %v2110
      %v2162 = vadd.f32 %v1976, %v2113
      %v2163 = vadd.f32 %v1977, %v2115
      %v2164 = vadd.f32 %v1978, %v2118
      %v2165 = vadd.f32 %v1979, %v2120
      %v2166 = vadd.f32 %v1980, %v2123
      %v2167 = vadd.f32 %v1981, %v2125
      %v2168 = vadd.f32 %v1982, %v2128
      %v2169 = vadd.f32 %v1983, %v2130
      %v2170 = vadd.f32 %v1984, %v2133
      %v2171 = vadd.f32 %v1985, %v2135
      %v2172 = vadd.f32 %v1986, %v2138
      %v2173 = vadd.f32 %v1987, %v2140
      %s2174 = scalar_lea.vmem %s1, 384
      %v2175 = vld [vmem:[%s2174] sm:$0xf]
      %v2176 = vld [vmem:[%s2174 + $0x4] sm:$0xf]
      %v2177 = vld [vmem:[%s2174 + $0x8] sm:$0xf]
      %v2178 = vld [vmem:[%s2174 + $0xc] sm:$0xf]
      %v2179 = vld [vmem:[%s2174 + $0x10] sm:$0xf]
      %v2180 = vld [vmem:[%s2174 + $0x14] sm:$0xf]
      %v2181 = vld [vmem:[%s2174 + $0x18] sm:$0xf]
      %v2182 = vld [vmem:[%s2174 + $0x1c] sm:$0xf]
      %v2183 = vld [vmem:[%s2174 + $0x20] sm:$0xf]
      %v2184 = vld [vmem:[%s2174 + $0x24] sm:$0xf]
      %v2185 = vld [vmem:[%s2174 + $0x28] sm:$0xf]
      %v2186 = vld [vmem:[%s2174 + $0x2c] sm:$0xf]
      %v2187 = vld [vmem:[%s2174 + $0x30] sm:$0xf]
      %v2188 = vld [vmem:[%s2174 + $0x34] sm:$0xf]
      %v2189 = vld [vmem:[%s2174 + $0x38] sm:$0xf]
      %v2190 = vld [vmem:[%s2174 + $0x3c] sm:$0xf]
      %v2207 = vunpack.c.l.b16 %v2175
      %v2208 = vunpack.c.l.b16 %v2176
      %v2209 = vunpack.c.l.b16 %v2177
      %v2210 = vunpack.c.l.b16 %v2178
      %v2211 = vunpack.c.l.b16 %v2179
      %v2212 = vunpack.c.l.b16 %v2180
      %v2213 = vunpack.c.l.b16 %v2181
      %v2214 = vunpack.c.l.b16 %v2182
      %v2215 = vunpack.c.l.b16 %v2183
      %v2216 = vunpack.c.l.b16 %v2184
      %v2217 = vunpack.c.l.b16 %v2185
      %v2218 = vunpack.c.l.b16 %v2186
      %v2219 = vunpack.c.l.b16 %v2187
      %v2220 = vunpack.c.l.b16 %v2188
      %v2221 = vunpack.c.l.b16 %v2189
      %v2222 = vunpack.c.l.b16 %v2190
      %v2223 = vpack.c.b16 %v2208, %v2207
      %v2224 = vpack.c.b16 %v2210, %v2209
      %v2225 = vpack.c.b16 %v2212, %v2211
      %v2226 = vpack.c.b16 %v2214, %v2213
      %v2227 = vpack.c.b16 %v2216, %v2215
      %v2228 = vpack.c.b16 %v2218, %v2217
      %v2229 = vpack.c.b16 %v2220, %v2219
      %v2230 = vpack.c.b16 %v2222, %v2221
      %2239 = vmatpush.bf16.msra.mxu0 %v2230
      %2240 = vmatpush.bf16.msra.mxu0 %v2229
      %2241 = vmatpush.bf16.msra.mxu0 %v2228
      %2242 = vmatpush.bf16.msra.mxu0 %v2227
      %2243 = vmatpush.bf16.msra.mxu0 %v2226
      %2244 = vmatpush.bf16.msra.mxu0 %v2225
      %2245 = vmatpush.bf16.msra.mxu0 %v2224
      %2246 = vmatpush.bf16.msra.mxu0 %v2223
      %2247 = vmatmul.bf16.gmra.mxu0 %v907
      %v2248 = vpop.f32.mrf.mxu0
      %v2249 = vadd.f32 0.0, %v2248
      %v2250 = vpop.f32.mrf.mxu0
      %v2251 = vadd.f32 0.0, %v2250
      %2252 = vmatmul.bf16.gmra.mxu0 %v908
      %v2253 = vpop.f32.mrf.mxu0
      %v2254 = vadd.f32 0.0, %v2253
      %v2255 = vpop.f32.mrf.mxu0
      %v2256 = vadd.f32 0.0, %v2255
      %2257 = vmatmul.bf16.gmra.mxu0 %v909
      %v2258 = vpop.f32.mrf.mxu0
      %v2259 = vadd.f32 0.0, %v2258
      %v2260 = vpop.f32.mrf.mxu0
      %v2261 = vadd.f32 0.0, %v2260
      %2262 = vmatmul.bf16.gmra.mxu0 %v910
      %v2263 = vpop.f32.mrf.mxu0
      %v2264 = vadd.f32 0.0, %v2263
      %v2265 = vpop.f32.mrf.mxu0
      %v2266 = vadd.f32 0.0, %v2265
      %2267 = vmatmul.bf16.gmra.mxu0 %v911
      %v2268 = vpop.f32.mrf.mxu0
      %v2269 = vadd.f32 0.0, %v2268
      %v2270 = vpop.f32.mrf.mxu0
      %v2271 = vadd.f32 0.0, %v2270
      %2272 = vmatmul.bf16.gmra.mxu0 %v912
      %v2273 = vpop.f32.mrf.mxu0
      %v2274 = vadd.f32 0.0, %v2273
      %v2275 = vpop.f32.mrf.mxu0
      %v2276 = vadd.f32 0.0, %v2275
      %2277 = vmatmul.bf16.gmra.mxu0 %v913
      %v2278 = vpop.f32.mrf.mxu0
      %v2279 = vadd.f32 0.0, %v2278
      %v2280 = vpop.f32.mrf.mxu0
      %v2281 = vadd.f32 0.0, %v2280
      %2282 = vmatmul.bf16.gmra.mxu0 %v914
      %v2283 = vpop.f32.mrf.mxu0
      %v2284 = vadd.f32 0.0, %v2283
      %v2285 = vpop.f32.mrf.mxu0
      %v2286 = vadd.f32 0.0, %v2285
      %2287 = vmatmul.bf16.gmra.mxu0 %v915
      %v2288 = vpop.f32.mrf.mxu0
      %v2289 = vadd.f32 0.0, %v2288
      %v2290 = vpop.f32.mrf.mxu0
      %v2291 = vadd.f32 0.0, %v2290
      %2292 = vmatmul.bf16.gmra.mxu0 %v916
      %v2293 = vpop.f32.mrf.mxu0
      %v2294 = vadd.f32 0.0, %v2293
      %v2295 = vpop.f32.mrf.mxu0
      %v2296 = vadd.f32 0.0, %v2295
      %2297 = vmatmul.bf16.gmra.mxu0 %v917
      %v2298 = vpop.f32.mrf.mxu0
      %v2299 = vadd.f32 0.0, %v2298
      %v2300 = vpop.f32.mrf.mxu0
      %v2301 = vadd.f32 0.0, %v2300
      %2302 = vmatmul.bf16.gmra.mxu0 %v918
      %v2303 = vpop.f32.mrf.mxu0
      %v2304 = vadd.f32 0.0, %v2303
      %v2305 = vpop.f32.mrf.mxu0
      %v2306 = vadd.f32 0.0, %v2305
      %2307 = vmatmul.bf16.gmra.mxu0 %v919
      %v2308 = vpop.f32.mrf.mxu0
      %v2309 = vadd.f32 0.0, %v2308
      %v2310 = vpop.f32.mrf.mxu0
      %v2311 = vadd.f32 0.0, %v2310
      %2312 = vmatmul.bf16.gmra.mxu0 %v920
      %v2313 = vpop.f32.mrf.mxu0
      %v2314 = vadd.f32 0.0, %v2313
      %v2315 = vpop.f32.mrf.mxu0
      %v2316 = vadd.f32 0.0, %v2315
      %2317 = vmatmul.bf16.gmra.mxu0 %v921
      %v2318 = vpop.f32.mrf.mxu0
      %v2319 = vadd.f32 0.0, %v2318
      %v2320 = vpop.f32.mrf.mxu0
      %v2321 = vadd.f32 0.0, %v2320
      %2322 = vmatmul.bf16.gmra.mxu0 %v922
      %v2323 = vpop.f32.mrf.mxu0
      %v2324 = vadd.f32 0.0, %v2323
      %v2325 = vpop.f32.mrf.mxu0
      %v2326 = vadd.f32 0.0, %v2325
      %2327 = vdwg.mxu0
      %v2328 = vadd.f32 %v2142, %v2249
      %v2329 = vadd.f32 %v2143, %v2251
      %v2330 = vadd.f32 %v2144, %v2254
      %v2331 = vadd.f32 %v2145, %v2256
      %v2332 = vadd.f32 %v2146, %v2259
      %v2333 = vadd.f32 %v2147, %v2261
      %v2334 = vadd.f32 %v2148, %v2264
      %v2335 = vadd.f32 %v2149, %v2266
      %v2336 = vadd.f32 %v2150, %v2269
      %v2337 = vadd.f32 %v2151, %v2271
      %v2338 = vadd.f32 %v2152, %v2274
      %v2339 = vadd.f32 %v2153, %v2276
      %v2340 = vadd.f32 %v2154, %v2279
      %v2341 = vadd.f32 %v2155, %v2281
      %v2342 = vadd.f32 %v2156, %v2284
      %v2343 = vadd.f32 %v2157, %v2286
      %v2344 = vadd.f32 %v2158, %v2289
      %v2345 = vadd.f32 %v2159, %v2291
      %v2346 = vadd.f32 %v2160, %v2294
      %v2347 = vadd.f32 %v2161, %v2296
      %v2348 = vadd.f32 %v2162, %v2299
      %v2349 = vadd.f32 %v2163, %v2301
      %v2350 = vadd.f32 %v2164, %v2304
      %v2351 = vadd.f32 %v2165, %v2306
      %v2352 = vadd.f32 %v2166, %v2309
      %v2353 = vadd.f32 %v2167, %v2311
      %v2354 = vadd.f32 %v2168, %v2314
      %v2355 = vadd.f32 %v2169, %v2316
      %v2356 = vadd.f32 %v2170, %v2319
      %v2357 = vadd.f32 %v2171, %v2321
      %v2358 = vadd.f32 %v2172, %v2324
      %v2359 = vadd.f32 %v2173, %v2326
      %s2360 = scalar_lea.vmem %s1, 448
      %v2361 = vld [vmem:[%s2360] sm:$0xf]
      %v2362 = vld [vmem:[%s2360 + $0x4] sm:$0xf]
      %v2363 = vld [vmem:[%s2360 + $0x8] sm:$0xf]
      %v2364 = vld [vmem:[%s2360 + $0xc] sm:$0xf]
      %v2365 = vld [vmem:[%s2360 + $0x10] sm:$0xf]
      %v2366 = vld [vmem:[%s2360 + $0x14] sm:$0xf]
      %v2367 = vld [vmem:[%s2360 + $0x18] sm:$0xf]
      %v2368 = vld [vmem:[%s2360 + $0x1c] sm:$0xf]
      %v2369 = vld [vmem:[%s2360 + $0x20] sm:$0xf]
      %v2370 = vld [vmem:[%s2360 + $0x24] sm:$0xf]
      %v2371 = vld [vmem:[%s2360 + $0x28] sm:$0xf]
      %v2372 = vld [vmem:[%s2360 + $0x2c] sm:$0xf]
      %v2373 = vld [vmem:[%s2360 + $0x30] sm:$0xf]
      %v2374 = vld [vmem:[%s2360 + $0x34] sm:$0xf]
      %v2375 = vld [vmem:[%s2360 + $0x38] sm:$0xf]
      %v2376 = vld [vmem:[%s2360 + $0x3c] sm:$0xf]
      %v2394 = vunpack.c.l.b16 %v2361
      %v2395 = vunpack.c.l.b16 %v2362
      %v2396 = vunpack.c.l.b16 %v2363
      %v2397 = vunpack.c.l.b16 %v2364
      %v2398 = vunpack.c.l.b16 %v2365
      %v2399 = vunpack.c.l.b16 %v2366
      %v2400 = vunpack.c.l.b16 %v2367
      %v2401 = vunpack.c.l.b16 %v2368
      %v2402 = vunpack.c.l.b16 %v2369
      %v2403 = vunpack.c.l.b16 %v2370
      %v2404 = vunpack.c.l.b16 %v2371
      %v2405 = vunpack.c.l.b16 %v2372
      %v2406 = vunpack.c.l.b16 %v2373
      %v2407 = vunpack.c.l.b16 %v2374
      %v2408 = vunpack.c.l.b16 %v2375
      %v2409 = vunpack.c.l.b16 %v2376
      %v2410 = vpack.c.b16 %v2395, %v2394
      %v2411 = vpack.c.b16 %v2397, %v2396
      %v2412 = vpack.c.b16 %v2399, %v2398
      %v2413 = vpack.c.b16 %v2401, %v2400
      %v2414 = vpack.c.b16 %v2403, %v2402
      %v2415 = vpack.c.b16 %v2405, %v2404
      %v2416 = vpack.c.b16 %v2407, %v2406
      %v2417 = vpack.c.b16 %v2409, %v2408
      %2426 = vmatpush.bf16.msra.mxu0 %v2417
      %2427 = vmatpush.bf16.msra.mxu0 %v2416
      %2428 = vmatpush.bf16.msra.mxu0 %v2415
      %2429 = vmatpush.bf16.msra.mxu0 %v2414
      %2430 = vmatpush.bf16.msra.mxu0 %v2413
      %2431 = vmatpush.bf16.msra.mxu0 %v2412
      %2432 = vmatpush.bf16.msra.mxu0 %v2411
      %2433 = vmatpush.bf16.msra.mxu0 %v2410
      %2434 = vmatmul.bf16.gmra.mxu0 %v742
      %v2435 = vpop.f32.mrf.mxu0
      %v2436 = vadd.f32 0.0, %v2435
      %v2437 = vpop.f32.mrf.mxu0
      %v2438 = vadd.f32 0.0, %v2437
      %2439 = vmatmul.bf16.gmra.mxu0 %v743
      %v2440 = vpop.f32.mrf.mxu0
      %v2441 = vadd.f32 0.0, %v2440
      %v2442 = vpop.f32.mrf.mxu0
      %v2443 = vadd.f32 0.0, %v2442
      %2444 = vmatmul.bf16.gmra.mxu0 %v744
      %v2445 = vpop.f32.mrf.mxu0
      %v2446 = vadd.f32 0.0, %v2445
      %v2447 = vpop.f32.mrf.mxu0
      %v2448 = vadd.f32 0.0, %v2447
      %2449 = vmatmul.bf16.gmra.mxu0 %v745
      %v2450 = vpop.f32.mrf.mxu0
      %v2451 = vadd.f32 0.0, %v2450
      %v2452 = vpop.f32.mrf.mxu0
      %v2453 = vadd.f32 0.0, %v2452
      %2454 = vmatmul.bf16.gmra.mxu0 %v746
      %v2455 = vpop.f32.mrf.mxu0
      %v2456 = vadd.f32 0.0, %v2455
      %v2457 = vpop.f32.mrf.mxu0
      %v2458 = vadd.f32 0.0, %v2457
      %2459 = vmatmul.bf16.gmra.mxu0 %v747
      %v2460 = vpop.f32.mrf.mxu0
      %v2461 = vadd.f32 0.0, %v2460
      %v2462 = vpop.f32.mrf.mxu0
      %v2463 = vadd.f32 0.0, %v2462
      %2464 = vmatmul.bf16.gmra.mxu0 %v748
      %v2465 = vpop.f32.mrf.mxu0
      %v2466 = vadd.f32 0.0, %v2465
      %v2467 = vpop.f32.mrf.mxu0
      %v2468 = vadd.f32 0.0, %v2467
      %2469 = vmatmul.bf16.gmra.mxu0 %v749
      %v2470 = vpop.f32.mrf.mxu0
      %v2471 = vadd.f32 0.0, %v2470
      %v2472 = vpop.f32.mrf.mxu0
      %v2473 = vadd.f32 0.0, %v2472
      %2474 = vmatmul.bf16.gmra.mxu0 %v750
      %v2475 = vpop.f32.mrf.mxu0
      %v2476 = vadd.f32 0.0, %v2475
      %v2477 = vpop.f32.mrf.mxu0
      %v2478 = vadd.f32 0.0, %v2477
      %2479 = vmatmul.bf16.gmra.mxu0 %v751
      %v2480 = vpop.f32.mrf.mxu0
      %v2481 = vadd.f32 0.0, %v2480
      %v2482 = vpop.f32.mrf.mxu0
      %v2483 = vadd.f32 0.0, %v2482
      %2484 = vmatmul.bf16.gmra.mxu0 %v752
      %v2485 = vpop.f32.mrf.mxu0
      %v2486 = vadd.f32 0.0, %v2485
      %v2487 = vpop.f32.mrf.mxu0
      %v2488 = vadd.f32 0.0, %v2487
      %2489 = vmatmul.bf16.gmra.mxu0 %v753
      %v2490 = vpop.f32.mrf.mxu0
      %v2491 = vadd.f32 0.0, %v2490
      %v2492 = vpop.f32.mrf.mxu0
      %v2493 = vadd.f32 0.0, %v2492
      %2494 = vmatmul.bf16.gmra.mxu0 %v754
      %v2495 = vpop.f32.mrf.mxu0
      %v2496 = vadd.f32 0.0, %v2495
      %v2497 = vpop.f32.mrf.mxu0
      %v2498 = vadd.f32 0.0, %v2497
      %2499 = vmatmul.bf16.gmra.mxu0 %v755
      %v2500 = vpop.f32.mrf.mxu0
      %v2501 = vadd.f32 0.0, %v2500
      %v2502 = vpop.f32.mrf.mxu0
      %v2503 = vadd.f32 0.0, %v2502
      %2504 = vmatmul.bf16.gmra.mxu0 %v756
      %v2505 = vpop.f32.mrf.mxu0
      %v2506 = vadd.f32 0.0, %v2505
      %v2507 = vpop.f32.mrf.mxu0
      %v2508 = vadd.f32 0.0, %v2507
      %2509 = vmatmul.bf16.gmra.mxu0 %v757
      %v2510 = vpop.f32.mrf.mxu0
      %v2511 = vadd.f32 0.0, %v2510
      %v2512 = vpop.f32.mrf.mxu0
      %v2513 = vadd.f32 0.0, %v2512
      %2514 = vdwg.mxu0
      %v2515 = vadd.f32 %v2328, %v2436
      %v2516 = vadd.f32 %v2329, %v2438
      %v2517 = vadd.f32 %v2330, %v2441
      %v2518 = vadd.f32 %v2331, %v2443
      %v2519 = vadd.f32 %v2332, %v2446
      %v2520 = vadd.f32 %v2333, %v2448
      %v2521 = vadd.f32 %v2334, %v2451
      %v2522 = vadd.f32 %v2335, %v2453
      %v2523 = vadd.f32 %v2336, %v2456
      %v2524 = vadd.f32 %v2337, %v2458
      %v2525 = vadd.f32 %v2338, %v2461
      %v2526 = vadd.f32 %v2339, %v2463
      %v2527 = vadd.f32 %v2340, %v2466
      %v2528 = vadd.f32 %v2341, %v2468
      %v2529 = vadd.f32 %v2342, %v2471
      %v2530 = vadd.f32 %v2343, %v2473
      %v2531 = vadd.f32 %v2344, %v2476
      %v2532 = vadd.f32 %v2345, %v2478
      %v2533 = vadd.f32 %v2346, %v2481
      %v2534 = vadd.f32 %v2347, %v2483
      %v2535 = vadd.f32 %v2348, %v2486
      %v2536 = vadd.f32 %v2349, %v2488
      %v2537 = vadd.f32 %v2350, %v2491
      %v2538 = vadd.f32 %v2351, %v2493
      %v2539 = vadd.f32 %v2352, %v2496
      %v2540 = vadd.f32 %v2353, %v2498
      %v2541 = vadd.f32 %v2354, %v2501
      %v2542 = vadd.f32 %v2355, %v2503
      %v2543 = vadd.f32 %v2356, %v2506
      %v2544 = vadd.f32 %v2357, %v2508
      %v2545 = vadd.f32 %v2358, %v2511
      %v2546 = vadd.f32 %v2359, %v2513
      %s2547 = scalar_lea.vmem %s1, 512
      %v2548 = vld [vmem:[%s2547] sm:$0xf]
      %v2549 = vld [vmem:[%s2547 + $0x4] sm:$0xf]
      %v2550 = vld [vmem:[%s2547 + $0x8] sm:$0xf]
      %v2551 = vld [vmem:[%s2547 + $0xc] sm:$0xf]
      %v2552 = vld [vmem:[%s2547 + $0x10] sm:$0xf]
      %v2553 = vld [vmem:[%s2547 + $0x14] sm:$0xf]
      %v2554 = vld [vmem:[%s2547 + $0x18] sm:$0xf]
      %v2555 = vld [vmem:[%s2547 + $0x1c] sm:$0xf]
      %v2556 = vld [vmem:[%s2547 + $0x20] sm:$0xf]
      %v2557 = vld [vmem:[%s2547 + $0x24] sm:$0xf]
      %v2558 = vld [vmem:[%s2547 + $0x28] sm:$0xf]
      %v2559 = vld [vmem:[%s2547 + $0x2c] sm:$0xf]
      %v2560 = vld [vmem:[%s2547 + $0x30] sm:$0xf]
      %v2561 = vld [vmem:[%s2547 + $0x34] sm:$0xf]
      %v2562 = vld [vmem:[%s2547 + $0x38] sm:$0xf]
      %v2563 = vld [vmem:[%s2547 + $0x3c] sm:$0xf]
      %v2580 = vunpack.c.l.b16 %v2548
      %v2581 = vunpack.c.l.b16 %v2549
      %v2582 = vunpack.c.l.b16 %v2550
      %v2583 = vunpack.c.l.b16 %v2551
      %v2584 = vunpack.c.l.b16 %v2552
      %v2585 = vunpack.c.l.b16 %v2553
      %v2586 = vunpack.c.l.b16 %v2554
      %v2587 = vunpack.c.l.b16 %v2555
      %v2588 = vunpack.c.l.b16 %v2556
      %v2589 = vunpack.c.l.b16 %v2557
      %v2590 = vunpack.c.l.b16 %v2558
      %v2591 = vunpack.c.l.b16 %v2559
      %v2592 = vunpack.c.l.b16 %v2560
      %v2593 = vunpack.c.l.b16 %v2561
      %v2594 = vunpack.c.l.b16 %v2562
      %v2595 = vunpack.c.l.b16 %v2563
      %v2596 = vpack.c.b16 %v2581, %v2580
      %v2597 = vpack.c.b16 %v2583, %v2582
      %v2598 = vpack.c.b16 %v2585, %v2584
      %v2599 = vpack.c.b16 %v2587, %v2586
      %v2600 = vpack.c.b16 %v2589, %v2588
      %v2601 = vpack.c.b16 %v2591, %v2590
      %v2602 = vpack.c.b16 %v2593, %v2592
      %v2603 = vpack.c.b16 %v2595, %v2594
      %2612 = vmatpush.bf16.msra.mxu0 %v2603
      %2613 = vmatpush.bf16.msra.mxu0 %v2602
      %2614 = vmatpush.bf16.msra.mxu0 %v2601
      %2615 = vmatpush.bf16.msra.mxu0 %v2600
      %2616 = vmatpush.bf16.msra.mxu0 %v2599
      %2617 = vmatpush.bf16.msra.mxu0 %v2598
      %2618 = vmatpush.bf16.msra.mxu0 %v2597
      %2619 = vmatpush.bf16.msra.mxu0 %v2596
      %2620 = vmatmul.bf16.gmra.mxu0 %v1090
      %v2621 = vpop.f32.mrf.mxu0
      %v2622 = vadd.f32 0.0, %v2621
      %v2623 = vpop.f32.mrf.mxu0
      %v2624 = vadd.f32 0.0, %v2623
      %2625 = vmatmul.bf16.gmra.mxu0 %v1091
      %v2626 = vpop.f32.mrf.mxu0
      %v2627 = vadd.f32 0.0, %v2626
      %v2628 = vpop.f32.mrf.mxu0
      %v2629 = vadd.f32 0.0, %v2628
      %2630 = vmatmul.bf16.gmra.mxu0 %v1092
      %v2631 = vpop.f32.mrf.mxu0
      %v2632 = vadd.f32 0.0, %v2631
      %v2633 = vpop.f32.mrf.mxu0
      %v2634 = vadd.f32 0.0, %v2633
      %2635 = vmatmul.bf16.gmra.mxu0 %v1093
      %v2636 = vpop.f32.mrf.mxu0
      %v2637 = vadd.f32 0.0, %v2636
      %v2638 = vpop.f32.mrf.mxu0
      %v2639 = vadd.f32 0.0, %v2638
      %2640 = vmatmul.bf16.gmra.mxu0 %v1094
      %v2641 = vpop.f32.mrf.mxu0
      %v2642 = vadd.f32 0.0, %v2641
      %v2643 = vpop.f32.mrf.mxu0
      %v2644 = vadd.f32 0.0, %v2643
      %2645 = vmatmul.bf16.gmra.mxu0 %v1095
      %v2646 = vpop.f32.mrf.mxu0
      %v2647 = vadd.f32 0.0, %v2646
      %v2648 = vpop.f32.mrf.mxu0
      %v2649 = vadd.f32 0.0, %v2648
      %2650 = vmatmul.bf16.gmra.mxu0 %v1096
      %v2651 = vpop.f32.mrf.mxu0
      %v2652 = vadd.f32 0.0, %v2651
      %v2653 = vpop.f32.mrf.mxu0
      %v2654 = vadd.f32 0.0, %v2653
      %2655 = vmatmul.bf16.gmra.mxu0 %v1097
      %v2656 = vpop.f32.mrf.mxu0
      %v2657 = vadd.f32 0.0, %v2656
      %v2658 = vpop.f32.mrf.mxu0
      %v2659 = vadd.f32 0.0, %v2658
      %2660 = vmatmul.bf16.gmra.mxu0 %v1098
      %v2661 = vpop.f32.mrf.mxu0
      %v2662 = vadd.f32 0.0, %v2661
      %v2663 = vpop.f32.mrf.mxu0
      %v2664 = vadd.f32 0.0, %v2663
      %2665 = vmatmul.bf16.gmra.mxu0 %v1099
      %v2666 = vpop.f32.mrf.mxu0
      %v2667 = vadd.f32 0.0, %v2666
      %v2668 = vpop.f32.mrf.mxu0
      %v2669 = vadd.f32 0.0, %v2668
      %2670 = vmatmul.bf16.gmra.mxu0 %v1100
      %v2671 = vpop.f32.mrf.mxu0
      %v2672 = vadd.f32 0.0, %v2671
      %v2673 = vpop.f32.mrf.mxu0
      %v2674 = vadd.f32 0.0, %v2673
      %2675 = vmatmul.bf16.gmra.mxu0 %v1101
      %v2676 = vpop.f32.mrf.mxu0
      %v2677 = vadd.f32 0.0, %v2676
      %v2678 = vpop.f32.mrf.mxu0
      %v2679 = vadd.f32 0.0, %v2678
      %2680 = vmatmul.bf16.gmra.mxu0 %v1102
      %v2681 = vpop.f32.mrf.mxu0
      %v2682 = vadd.f32 0.0, %v2681
      %v2683 = vpop.f32.mrf.mxu0
      %v2684 = vadd.f32 0.0, %v2683
      %2685 = vmatmul.bf16.gmra.mxu0 %v1103
      %v2686 = vpop.f32.mrf.mxu0
      %v2687 = vadd.f32 0.0, %v2686
      %v2688 = vpop.f32.mrf.mxu0
      %v2689 = vadd.f32 0.0, %v2688
      %2690 = vmatmul.bf16.gmra.mxu0 %v1104
      %v2691 = vpop.f32.mrf.mxu0
      %v2692 = vadd.f32 0.0, %v2691
      %v2693 = vpop.f32.mrf.mxu0
      %v2694 = vadd.f32 0.0, %v2693
      %2695 = vmatmul.bf16.gmra.mxu0 %v1105
      %v2696 = vpop.f32.mrf.mxu0
      %v2697 = vadd.f32 0.0, %v2696
      %v2698 = vpop.f32.mrf.mxu0
      %v2699 = vadd.f32 0.0, %v2698
      %2700 = vdwg.mxu0
      %v2701 = vadd.f32 %v2515, %v2622
      %v2702 = vadd.f32 %v2516, %v2624
      %v2703 = vadd.f32 %v2517, %v2627
      %v2704 = vadd.f32 %v2518, %v2629
      %v2705 = vadd.f32 %v2519, %v2632
      %v2706 = vadd.f32 %v2520, %v2634
      %v2707 = vadd.f32 %v2521, %v2637
      %v2708 = vadd.f32 %v2522, %v2639
      %v2709 = vadd.f32 %v2523, %v2642
      %v2710 = vadd.f32 %v2524, %v2644
      %v2711 = vadd.f32 %v2525, %v2647
      %v2712 = vadd.f32 %v2526, %v2649
      %v2713 = vadd.f32 %v2527, %v2652
      %v2714 = vadd.f32 %v2528, %v2654
      %v2715 = vadd.f32 %v2529, %v2657
      %v2716 = vadd.f32 %v2530, %v2659
      %v2717 = vadd.f32 %v2531, %v2662
      %v2718 = vadd.f32 %v2532, %v2664
      %v2719 = vadd.f32 %v2533, %v2667
      %v2720 = vadd.f32 %v2534, %v2669
      %v2721 = vadd.f32 %v2535, %v2672
      %v2722 = vadd.f32 %v2536, %v2674
      %v2723 = vadd.f32 %v2537, %v2677
      %v2724 = vadd.f32 %v2538, %v2679
      %v2725 = vadd.f32 %v2539, %v2682
      %v2726 = vadd.f32 %v2540, %v2684
      %v2727 = vadd.f32 %v2541, %v2687
      %v2728 = vadd.f32 %v2542, %v2689
      %v2729 = vadd.f32 %v2543, %v2692
      %v2730 = vadd.f32 %v2544, %v2694
      %v2731 = vadd.f32 %v2545, %v2697
      %v2732 = vadd.f32 %v2546, %v2699
      %v2733 = vld [vmem:[%s2] sm:$0x1]
      %v2735 = vperm.slane %v2733, 0
      %v2737 = vadd.f32 %v2701, %v2735
      %v2738 = vadd.f32 %v2702, %v2735
      %v2739 = vadd.f32 %v2703, %v2735
      %v2740 = vadd.f32 %v2704, %v2735
      %v2741 = vadd.f32 %v2705, %v2735
      %v2742 = vadd.f32 %v2706, %v2735
      %v2743 = vadd.f32 %v2707, %v2735
      %v2744 = vadd.f32 %v2708, %v2735
      %v2745 = vadd.f32 %v2709, %v2735
      %v2746 = vadd.f32 %v2710, %v2735
      %v2747 = vadd.f32 %v2711, %v2735
      %v2748 = vadd.f32 %v2712, %v2735
      %v2749 = vadd.f32 %v2713, %v2735
      %v2750 = vadd.f32 %v2714, %v2735
      %v2751 = vadd.f32 %v2715, %v2735
      %v2752 = vadd.f32 %v2716, %v2735
      %v2753 = vadd.f32 %v2717, %v2735
      %v2754 = vadd.f32 %v2718, %v2735
      %v2755 = vadd.f32 %v2719, %v2735
      %v2756 = vadd.f32 %v2720, %v2735
      %v2757 = vadd.f32 %v2721, %v2735
      %v2758 = vadd.f32 %v2722, %v2735
      %v2759 = vadd.f32 %v2723, %v2735
      %v2760 = vadd.f32 %v2724, %v2735
      %v2761 = vadd.f32 %v2725, %v2735
      %v2762 = vadd.f32 %v2726, %v2735
      %v2763 = vadd.f32 %v2727, %v2735
      %v2764 = vadd.f32 %v2728, %v2735
      %v2765 = vadd.f32 %v2729, %v2735
      %v2766 = vadd.f32 %v2730, %v2735
      %v2767 = vadd.f32 %v2731, %v2735
      %v2768 = vadd.f32 %v2732, %v2735
      %vm2769 = vcmp.gt.f32.partialorder %v2737, 0.0
      %vm2770 = vcmp.gt.f32.partialorder %v2738, 0.0
      %vm2771 = vcmp.gt.f32.partialorder %v2739, 0.0
      %vm2772 = vcmp.gt.f32.partialorder %v2740, 0.0
      %vm2773 = vcmp.gt.f32.partialorder %v2741, 0.0
      %vm2774 = vcmp.gt.f32.partialorder %v2742, 0.0
      %vm2775 = vcmp.gt.f32.partialorder %v2743, 0.0
      %vm2776 = vcmp.gt.f32.partialorder %v2744, 0.0
      %vm2777 = vcmp.gt.f32.partialorder %v2745, 0.0
      %vm2778 = vcmp.gt.f32.partialorder %v2746, 0.0
      %vm2779 = vcmp.gt.f32.partialorder %v2747, 0.0
      %vm2780 = vcmp.gt.f32.partialorder %v2748, 0.0
      %vm2781 = vcmp.gt.f32.partialorder %v2749, 0.0
      %vm2782 = vcmp.gt.f32.partialorder %v2750, 0.0
      %vm2783 = vcmp.gt.f32.partialorder %v2751, 0.0
      %vm2784 = vcmp.gt.f32.partialorder %v2752, 0.0
      %vm2785 = vcmp.gt.f32.partialorder %v2753, 0.0
      %vm2786 = vcmp.gt.f32.partialorder %v2754, 0.0
      %vm2787 = vcmp.gt.f32.partialorder %v2755, 0.0
      %vm2788 = vcmp.gt.f32.partialorder %v2756, 0.0
      %vm2789 = vcmp.gt.f32.partialorder %v2757, 0.0
      %vm2790 = vcmp.gt.f32.partialorder %v2758, 0.0
      %vm2791 = vcmp.gt.f32.partialorder %v2759, 0.0
      %vm2792 = vcmp.gt.f32.partialorder %v2760, 0.0
      %vm2793 = vcmp.gt.f32.partialorder %v2761, 0.0
      %vm2794 = vcmp.gt.f32.partialorder %v2762, 0.0
      %vm2795 = vcmp.gt.f32.partialorder %v2763, 0.0
      %vm2796 = vcmp.gt.f32.partialorder %v2764, 0.0
      %vm2797 = vcmp.gt.f32.partialorder %v2765, 0.0
      %vm2798 = vcmp.gt.f32.partialorder %v2766, 0.0
      %vm2799 = vcmp.gt.f32.partialorder %v2767, 0.0
      %vm2800 = vcmp.gt.f32.partialorder %v2768, 0.0
      %v2801 = vmul.f32 %v2737, 0.01
      %v2802 = vmul.f32 %v2738, 0.01
      %v2803 = vmul.f32 %v2739, 0.01
      %v2804 = vmul.f32 %v2740, 0.01
      %v2805 = vmul.f32 %v2741, 0.01
      %v2806 = vmul.f32 %v2742, 0.01
      %v2807 = vmul.f32 %v2743, 0.01
      %v2808 = vmul.f32 %v2744, 0.01
      %v2809 = vmul.f32 %v2745, 0.01
      %v2810 = vmul.f32 %v2746, 0.01
      %v2811 = vmul.f32 %v2747, 0.01
      %v2812 = vmul.f32 %v2748, 0.01
      %v2813 = vmul.f32 %v2749, 0.01
      %v2814 = vmul.f32 %v2750, 0.01
      %v2815 = vmul.f32 %v2751, 0.01
      %v2816 = vmul.f32 %v2752, 0.01
      %v2817 = vmul.f32 %v2753, 0.01
      %v2818 = vmul.f32 %v2754, 0.01
      %v2819 = vmul.f32 %v2755, 0.01
      %v2820 = vmul.f32 %v2756, 0.01
      %v2821 = vmul.f32 %v2757, 0.01
      %v2822 = vmul.f32 %v2758, 0.01
      %v2823 = vmul.f32 %v2759, 0.01
      %v2824 = vmul.f32 %v2760, 0.01
      %v2825 = vmul.f32 %v2761, 0.01
      %v2826 = vmul.f32 %v2762, 0.01
      %v2827 = vmul.f32 %v2763, 0.01
      %v2828 = vmul.f32 %v2764, 0.01
      %v2829 = vmul.f32 %v2765, 0.01
      %v2830 = vmul.f32 %v2766, 0.01
      %v2831 = vmul.f32 %v2767, 0.01
      %v2832 = vmul.f32 %v2768, 0.01
      %v2833 = vsel %vm2769, %v2737, %v2801
      %v2834 = vsel %vm2770, %v2738, %v2802
      %v2835 = vsel %vm2771, %v2739, %v2803
      %v2836 = vsel %vm2772, %v2740, %v2804
      %v2837 = vsel %vm2773, %v2741, %v2805
      %v2838 = vsel %vm2774, %v2742, %v2806
      %v2839 = vsel %vm2775, %v2743, %v2807
      %v2840 = vsel %vm2776, %v2744, %v2808
      %v2841 = vsel %vm2777, %v2745, %v2809
      %v2842 = vsel %vm2778, %v2746, %v2810
      %v2843 = vsel %vm2779, %v2747, %v2811
      %v2844 = vsel %vm2780, %v2748, %v2812
      %v2845 = vsel %vm2781, %v2749, %v2813
      %v2846 = vsel %vm2782, %v2750, %v2814
      %v2847 = vsel %vm2783, %v2751, %v2815
      %v2848 = vsel %vm2784, %v2752, %v2816
      %v2849 = vsel %vm2785, %v2753, %v2817
      %v2850 = vsel %vm2786, %v2754, %v2818
      %v2851 = vsel %vm2787, %v2755, %v2819
      %v2852 = vsel %vm2788, %v2756, %v2820
      %v2853 = vsel %vm2789, %v2757, %v2821
      %v2854 = vsel %vm2790, %v2758, %v2822
      %v2855 = vsel %vm2791, %v2759, %v2823
      %v2856 = vsel %vm2792, %v2760, %v2824
      %v2857 = vsel %vm2793, %v2761, %v2825
      %v2858 = vsel %vm2794, %v2762, %v2826
      %v2859 = vsel %vm2795, %v2763, %v2827
      %v2860 = vsel %vm2796, %v2764, %v2828
      %v2861 = vsel %vm2797, %v2765, %v2829
      %v2862 = vsel %vm2798, %v2766, %v2830
      %v2863 = vsel %vm2799, %v2767, %v2831
      %v2864 = vsel %vm2800, %v2768, %v2832
      %v2865 = vadd.f32 %v2833, %v2834
      %v2866 = vadd.f32 %v2865, %v2835
      %v2867 = vadd.f32 %v2866, %v2836
      %v2868 = vadd.f32 %v2867, %v2837
      %v2869 = vadd.f32 %v2868, %v2838
      %v2870 = vadd.f32 %v2869, %v2839
      %v2871 = vadd.f32 %v2870, %v2840
      %v2872 = vadd.f32 %v2871, %v2841
      %v2873 = vadd.f32 %v2872, %v2842
      %v2874 = vadd.f32 %v2873, %v2843
      %v2875 = vadd.f32 %v2874, %v2844
      %v2876 = vadd.f32 %v2875, %v2845
      %v2877 = vadd.f32 %v2876, %v2846
      %v2878 = vadd.f32 %v2877, %v2847
      %v2879 = vadd.f32 %v2878, %v2848
      %v2880 = vadd.f32 %v2879, %v2849
      %v2881 = vadd.f32 %v2880, %v2850
      %v2882 = vadd.f32 %v2881, %v2851
      %v2883 = vadd.f32 %v2882, %v2852
      %v2884 = vadd.f32 %v2883, %v2853
      %v2885 = vadd.f32 %v2884, %v2854
      %v2886 = vadd.f32 %v2885, %v2855
      %v2887 = vadd.f32 %v2886, %v2856
      %v2888 = vadd.f32 %v2887, %v2857
      %v2889 = vadd.f32 %v2888, %v2858
      %v2890 = vadd.f32 %v2889, %v2859
      %v2891 = vadd.f32 %v2890, %v2860
      %v2892 = vadd.f32 %v2891, %v2861
      %v2893 = vadd.f32 %v2892, %v2862
      %v2894 = vadd.f32 %v2893, %v2863
      %v2895 = vadd.f32 %v2894, %v2864
      %v2896 = vrot.slane %v2895, 4
      %v2897 = vadd.f32 %v2895, %v2896
      %v2898 = vrot.slane %v2897, 2
      %v2899 = vadd.f32 %v2897, %v2898
      %v2900 = vrot.slane %v2899, 1
      %v2901 = vadd.f32 %v2899, %v2900
      %v2902 = vmul.f32 %v2833, %v2833
      %v2903 = vmul.f32 %v2834, %v2834
      %v2904 = vmul.f32 %v2835, %v2835
      %v2905 = vmul.f32 %v2836, %v2836
      %v2906 = vmul.f32 %v2837, %v2837
      %v2907 = vmul.f32 %v2838, %v2838
      %v2908 = vmul.f32 %v2839, %v2839
      %v2909 = vmul.f32 %v2840, %v2840
      %v2910 = vmul.f32 %v2841, %v2841
      %v2911 = vmul.f32 %v2842, %v2842
      %v2912 = vmul.f32 %v2843, %v2843
      %v2913 = vmul.f32 %v2844, %v2844
      %v2914 = vmul.f32 %v2845, %v2845
      %v2915 = vmul.f32 %v2846, %v2846
      %v2916 = vmul.f32 %v2847, %v2847
      %v2917 = vmul.f32 %v2848, %v2848
      %v2918 = vmul.f32 %v2849, %v2849
      %v2919 = vmul.f32 %v2850, %v2850
      %v2920 = vmul.f32 %v2851, %v2851
      %v2921 = vmul.f32 %v2852, %v2852
      %v2922 = vmul.f32 %v2853, %v2853
      %v2923 = vmul.f32 %v2854, %v2854
      %v2924 = vmul.f32 %v2855, %v2855
      %v2925 = vmul.f32 %v2856, %v2856
      %v2926 = vmul.f32 %v2857, %v2857
      %v2927 = vmul.f32 %v2858, %v2858
      %v2928 = vmul.f32 %v2859, %v2859
      %v2929 = vmul.f32 %v2860, %v2860
      %v2930 = vmul.f32 %v2861, %v2861
      %v2931 = vmul.f32 %v2862, %v2862
      %v2932 = vmul.f32 %v2863, %v2863
      %v2933 = vmul.f32 %v2864, %v2864
      %v2934 = vadd.f32 %v2902, %v2903
      %v2935 = vadd.f32 %v2934, %v2904
      %v2936 = vadd.f32 %v2935, %v2905
      %v2937 = vadd.f32 %v2936, %v2906
      %v2938 = vadd.f32 %v2937, %v2907
      %v2939 = vadd.f32 %v2938, %v2908
      %v2940 = vadd.f32 %v2939, %v2909
      %v2941 = vadd.f32 %v2940, %v2910
      %v2942 = vadd.f32 %v2941, %v2911
      %v2943 = vadd.f32 %v2942, %v2912
      %v2944 = vadd.f32 %v2943, %v2913
      %v2945 = vadd.f32 %v2944, %v2914
      %v2946 = vadd.f32 %v2945, %v2915
      %v2947 = vadd.f32 %v2946, %v2916
      %v2948 = vadd.f32 %v2947, %v2917
      %v2949 = vadd.f32 %v2948, %v2918
      %v2950 = vadd.f32 %v2949, %v2919
      %v2951 = vadd.f32 %v2950, %v2920
      %v2952 = vadd.f32 %v2951, %v2921
      %v2953 = vadd.f32 %v2952, %v2922
      %v2954 = vadd.f32 %v2953, %v2923
      %v2955 = vadd.f32 %v2954, %v2924
      %v2956 = vadd.f32 %v2955, %v2925
      %v2957 = vadd.f32 %v2956, %v2926
      %v2958 = vadd.f32 %v2957, %v2927
      %v2959 = vadd.f32 %v2958, %v2928
      %v2960 = vadd.f32 %v2959, %v2929
      %v2961 = vadd.f32 %v2960, %v2930
      %v2962 = vadd.f32 %v2961, %v2931
      %v2963 = vadd.f32 %v2962, %v2932
      %v2964 = vadd.f32 %v2963, %v2933
      %v2965 = vrot.slane %v2964, 4
      %v2966 = vadd.f32 %v2964, %v2965
      %v2967 = vrot.slane %v2966, 2
      %v2968 = vadd.f32 %v2966, %v2967
      %v2969 = vrot.slane %v2968, 1
      %v2970 = vadd.f32 %v2968, %v2969
      %vm2971 = vcmask 1040384
      %v2972 = vsel %vm2971, %v2901, %v2970
      %2973 = vst [vmem:[%s295] sm:$0x3] %v2972
      %v2974 = vpack.c.bf16 %v2833, %v2833
      %v2975 = vpack.c.bf16 %v2834, %v2834
      %v2976 = vpack.c.bf16 %v2835, %v2835
      %v2977 = vpack.c.bf16 %v2836, %v2836
      %v2978 = vpack.c.bf16 %v2837, %v2837
      %v2979 = vpack.c.bf16 %v2838, %v2838
      %v2980 = vpack.c.bf16 %v2839, %v2839
      %v2981 = vpack.c.bf16 %v2840, %v2840
      %v2982 = vpack.c.bf16 %v2841, %v2841
      %v2983 = vpack.c.bf16 %v2842, %v2842
      %v2984 = vpack.c.bf16 %v2843, %v2843
      %v2985 = vpack.c.bf16 %v2844, %v2844
      %v2986 = vpack.c.bf16 %v2845, %v2845
      %v2987 = vpack.c.bf16 %v2846, %v2846
      %v2988 = vpack.c.bf16 %v2847, %v2847
      %v2989 = vpack.c.bf16 %v2848, %v2848
      %v2990 = vpack.c.bf16 %v2849, %v2849
      %v2991 = vpack.c.bf16 %v2850, %v2850
      %v2992 = vpack.c.bf16 %v2851, %v2851
      %v2993 = vpack.c.bf16 %v2852, %v2852
      %v2994 = vpack.c.bf16 %v2853, %v2853
      %v2995 = vpack.c.bf16 %v2854, %v2854
      %v2996 = vpack.c.bf16 %v2855, %v2855
      %v2997 = vpack.c.bf16 %v2856, %v2856
      %v2998 = vpack.c.bf16 %v2857, %v2857
      %v2999 = vpack.c.bf16 %v2858, %v2858
      %v3000 = vpack.c.bf16 %v2859, %v2859
      %v3001 = vpack.c.bf16 %v2860, %v2860
      %v3002 = vpack.c.bf16 %v2861, %v2861
      %v3003 = vpack.c.bf16 %v2862, %v2862
      %v3004 = vpack.c.bf16 %v2863, %v2863
      %v3005 = vpack.c.bf16 %v2864, %v2864
      %3006 = vst [vmem:[%s287] sm:$0xf] %v2974
      %3007 = vst [vmem:[%s287 + $0x4] sm:$0xf] %v2975
      %3008 = vst [vmem:[%s287 + $0x8] sm:$0xf] %v2976
      %3009 = vst [vmem:[%s287 + $0xc] sm:$0xf] %v2977
      %3010 = vst [vmem:[%s287 + $0x10] sm:$0xf] %v2978
      %3011 = vst [vmem:[%s287 + $0x14] sm:$0xf] %v2979
      %3012 = vst [vmem:[%s287 + $0x18] sm:$0xf] %v2980
      %3013 = vst [vmem:[%s287 + $0x1c] sm:$0xf] %v2981
      %3014 = vst [vmem:[%s287 + $0x20] sm:$0xf] %v2982
      %3015 = vst [vmem:[%s287 + $0x24] sm:$0xf] %v2983
      %3016 = vst [vmem:[%s287 + $0x28] sm:$0xf] %v2984
      %3017 = vst [vmem:[%s287 + $0x2c] sm:$0xf] %v2985
      %3018 = vst [vmem:[%s287 + $0x30] sm:$0xf] %v2986
      %3019 = vst [vmem:[%s287 + $0x34] sm:$0xf] %v2987
      %3020 = vst [vmem:[%s287 + $0x38] sm:$0xf] %v2988
      %3021 = vst [vmem:[%s287 + $0x3c] sm:$0xf] %v2989
      %3022 = vst [vmem:[%s287 + $0x40] sm:$0xf] %v2990
      %3023 = vst [vmem:[%s287 + $0x44] sm:$0xf] %v2991
      %3024 = vst [vmem:[%s287 + $0x48] sm:$0xf] %v2992
      %3025 = vst [vmem:[%s287 + $0x4c] sm:$0xf] %v2993
      %3026 = vst [vmem:[%s287 + $0x50] sm:$0xf] %v2994
      %3027 = vst [vmem:[%s287 + $0x54] sm:$0xf] %v2995
      %3028 = vst [vmem:[%s287 + $0x58] sm:$0xf] %v2996
      %3029 = vst [vmem:[%s287 + $0x5c] sm:$0xf] %v2997
      %3030 = vst [vmem:[%s287 + $0x60] sm:$0xf] %v2998
      %3031 = vst [vmem:[%s287 + $0x64] sm:$0xf] %v2999
      %3032 = vst [vmem:[%s287 + $0x68] sm:$0xf] %v3000
      %3033 = vst [vmem:[%s287 + $0x6c] sm:$0xf] %v3001
      %3034 = vst [vmem:[%s287 + $0x70] sm:$0xf] %v3002
      %3035 = vst [vmem:[%s287 + $0x74] sm:$0xf] %v3003
      %3036 = vst [vmem:[%s287 + $0x78] sm:$0xf] %v3004
      %3037 = vst [vmem:[%s287 + $0x7c] sm:$0xf] %v3005
      %s3038 = smul.u32 16, %s23
      %p3039 = scmp.lt.s32.totalorder %s22, 1
      %s3040 = scalar_select %p3039, %s22, 1
      %p3041 = scmp.lt.s32.totalorder %s3038, 15
      %s3042 = scalar_select %p3041, %s3038, 15
      %s3043 = smul.addr %s3042, 2
      %s3044 = smul.addr %s3040, 32
      %s3045 = sadd.s32 %s3043, %s3044
      %s3046 = smul.addr %s3045, 4
      %s3047 = scalar_lea.vmem %s5, %s3046
      %p3048 = scmp.lt.s32.totalorder %s22, 1
      %s3049 = scalar_select %p3048, %s22, 1
      %p3050 = scmp.lt.s32.totalorder %s23, 0
      %s3051 = scalar_select %p3050, %s23, 0
      %s3052 = sadd.s32 %s3051, %s3049
      %s3053 = smul.addr %s3052, 2
      %s3054 = scalar_lea.vmem %s6, %s3053
      // Predicated region
      $region41: #{block_forward.4} parent=39 // pred_check
        %p3055 = pneg %p160
      $region42: #{block_forward.4} parent=39 // pred_check_branch
        %3057 = sbr.rel (%p3055) target = $region44
      $region43: #{block_forward.4} parent=39 // pred_region
        %s3058 = smul.u32 16, %s23
      $region44: #{block_forward.4} parent=39 // pred_fallthru
        _
      // Predicated region
      $region45: #{block_forward.4} parent=39 // pred_check
        %p3059 = pneg %p188
      $region46: #{block_forward.4} parent=39 // pred_check_branch
        %3061 = sbr.rel (%p3059) target = $region48
      $region47: #{block_forward.4} parent=39 // pred_region
        _
      $region48: #{block_forward.4} parent=39 // pred_fallthru
        _
    $region40: #{block_forward.4} parent=5 // pred_fallthru
      _
    %p3062 = scmp.le.s32.totalorder 2, %s13
    // Predicated region
    $region49: #{block_forward.4} parent=5 // pred_check
      %p3063 = pneg %p3062
    $region50: #{block_forward.4} parent=5 // pred_check_branch
      %3065 = sbr.rel (%p3063) target = $region52
    $region51: #{block_forward.4} parent=5 // pred_region
      %s3066 = ssub.s32 %s13, 2
      // Predicated region
      $region53: #{block_forward.4} parent=51 // pred_check
        %p3067 = pneg %p166
      $region54: #{block_forward.4} parent=51 // pred_check_branch
        %3069 = sbr.rel (%p3067) target = $region56
      $region55: #{block_forward.4} parent=51 // pred_region
        %s3070 = smul.u32 16, %s25
        %p3071 = scmp.lt.s32.totalorder %s24, 1
        %s3072 = scalar_select %p3071, %s24, 1
        %p3073 = scmp.lt.s32.totalorder %s3070, 15
        %s3074 = scalar_select %p3073, %s3070, 15
        %s3075 = smul.addr %s3074, 2
        %s3076 = smul.addr %s3072, 32
        %s3077 = sadd.s32 %s3075, %s3076
        %s3078 = smul.addr %s3077, 4
        %s3079 = scalar_lea.vmem %s5, %s3078
      $region56: #{block_forward.4} parent=51 // pred_fallthru
        _
      // Predicated region
      $region57: #{block_forward.4} parent=51 // pred_check
        %p3080 = pneg %p194
      $region58: #{block_forward.4} parent=51 // pred_check_branch
        %3082 = sbr.rel (%p3080) target = $region60
      $region59: #{block_forward.4} parent=51 // pred_region
        %p3083 = scmp.lt.s32.totalorder %s24, 1
        %s3084 = scalar_select %p3083, %s24, 1
        %p3085 = scmp.lt.s32.totalorder %s25, 0
        %s3086 = scalar_select %p3085, %s25, 0
        %s3087 = sadd.s32 %s3086, %s3084
        %s3088 = smul.addr %s3087, 2
        %s3089 = scalar_lea.vmem %s6, %s3088
      $region60: #{block_forward.4} parent=51 // pred_fallthru
        _
    $region52: #{block_forward.4} parent=5 // pred_fallthru
      _
  $region6: #{block_forward.4} parent=0 // loop_footer
    %s17 = sadd.s32 1, %s13
  $region7: #{block_forward.4} parent=0 // loop_footer_branch
    %12 = sbr.rel target = $region3
  $region8: #{block_forward.4} parent=0 // loop_exit
    _

</llo_original>
